<compile_context>
chip_gen: v5e
topology: v5e:2x2
jax: 0.10.0
libtpu: 0.0.40
codegen_flags: <defaults>
</compile_context>

<pallas_src>
import functools

import numpy as np
import jax
import jax.numpy as jnp
from jax import lax
from jax.experimental import pallas as pl
from jax.experimental.pallas import tpu as pltpu


def _block_kernel(x_ref, w1_ref, b1_ref, w2_ref, b2_ref, o_ref,
                  pad_ref, patch_ref, *, W):
    """One grid step: NB images, each laid out as (C, H*W) with H*W in lanes."""
    NB, C, HW = x_ref.shape
    pad_off = W + 1  # zero margin of one row + one element on each side
    cdtype = pad_ref.dtype

    # Zero ONLY the two margin slices; the interior is overwritten by h every
    # image.  Re-done every step (cheap: 2*(W+1) lanes) since with megacore
    # sharding we cannot rely on a particular step running first on a core.
    zeros_margin = jnp.zeros((C, pad_off), cdtype)
    pad_ref[:, pl.ds(0, pad_off)] = zeros_margin
    pad_ref[:, pl.ds(pad_off + HW, pad_off)] = zeros_margin

    # Hoisted, loop-invariant edge masks for the dx = +/-1 taps.
    col = lax.broadcasted_iota(jnp.int32, (C, HW), 1) % W
    mask_l = col > 0          # tap valid when dx == -1 (no wrap from prev row)
    mask_r = col < W - 1      # tap valid when dx == +1 (no wrap from next row)

    def body(n, carry):
        xb = x_ref[n]                                   # (C, HW) compute dtype

        # ---- conv1 (1x1, BN scale folded into w1) + bias + ReLU: one matmul
        h = jnp.dot(w1_ref[...], xb, preferred_element_type=jnp.float32)
        h = jnp.maximum(h + b1_ref[...], 0.0)           # (C, HW) f32

        # ---- write h (already in compute dtype) into the zero-margin scratch
        pad_ref[:, pl.ds(pad_off, HW)] = h.astype(cdtype)

        # ---- build im2col patch matrix (9*C, HW) for the 3x3 conv
        k = 0
        for dy in (-1, 0, 1):
            for dx in (-1, 0, 1):
                v = pad_ref[:, pl.ds(pad_off + dy * W + dx, HW)]
                if dx == 1:        # values that wrapped from the next row
                    v = jnp.where(mask_r, v, 0)
                elif dx == -1:     # values that wrapped from the previous row
                    v = jnp.where(mask_l, v, 0)
                patch_ref[pl.ds(k * C, C), :] = v
                k += 1

        # ---- conv2 (3x3, BN folded into w2) as ONE fused matmul, K = 9*C
        acc = jnp.dot(w2_ref[...], patch_ref[...],
                      preferred_element_type=jnp.float32)   # (C, HW) f32

        # ---- bias + residual + ReLU; re-read x (cheap vld) for the residual
        res = x_ref[n].astype(jnp.float32)
        o_ref[n] = jnp.maximum(acc + b2_ref[...] + res, 0.0).astype(o_ref.dtype)
        return carry

    if NB <= 4:
        # Short fixed trip count: static unroll keeps full LLO visibility.
        for n in range(NB):
            body(n, 0)
    else:
        # Larger blocks: fori_loop bounds live ranges across images.
        lax.fori_loop(0, NB, body, 0)


def block_forward(x_nchw, w1, s1, b1, w2, s2, b2, *,
                  images_per_step=None, out_dtype=jnp.float32):
    """x_nchw: (N, C, H, W) f32.  w1: (C, C), w2: (C, C, 3, 3) (PyTorch OIHW).
    s*/b*: folded BatchNorm scale/bias, shape (C,).  Returns (N, C, H, W)."""
    N, C, H, W = x_nchw.shape
    HW = H * W
    if HW % 128 != 0:
        raise ValueError("H*W must be a multiple of 128 for the lane-dense layout")
    if C % 8 != 0:
        raise ValueError("channels must be a multiple of 8")
    if w1.shape != (C, C) or w2.shape != (C, C, 3, 3):
        raise ValueError("only the default _Block config (inplanes==planes, "
                         "stride=1, no downsample) is supported")
    for p in (s1, b1, s2, b2):
        if p.shape != (C,):
            raise ValueError("BN scale/bias must have shape (C,)")

    # bf16 packs two rows per sublane ((16,128) min tile); only use it when C
    # fills the packed tiles, otherwise keep f32 activations/weights.
    cdtype = jnp.bfloat16 if C % 16 == 0 else jnp.float32
    dsize = 2 if cdtype == jnp.bfloat16 else 4

    # Pick images per grid step: block big enough (~>=0.5 MiB of input) to
    # amortize the ~0.35 us per-step overhead, but keep >= 2 grid steps so the
    # ("parallel",) axis can split across TensorCores (v7x megacore).
    if images_per_step is None:
        nb = max(1, (512 * 1024) // max(C * HW * dsize, 1))
        if N >= 2:
            nb = min(nb, N // 2)
        nb = min(nb, N)
    else:
        nb = max(1, min(images_per_step, N))
    while N % nb:
        nb -= 1

    # NCHW -> (N, C, H*W): pure reshape, no transpose / extra HBM pass.
    x = x_nchw.reshape(N, C, HW).astype(cdtype)

    # Fold BN scales into the conv weights (kernel only adds per-channel bias).
    w1f = (w1 * s1[:, None]).astype(cdtype)                       # (Cout, Cin)
    w2f = ((w2 * s2[:, None, None, None])                         # (Cout,Cin,3,3)
           .transpose(0, 2, 3, 1)                                 # (Cout,3,3,Cin)
           .reshape(C, 9 * C).astype(cdtype))                     # k-major, ci-minor
    b1c = b1.reshape(C, 1).astype(jnp.float32)
    b2c = b2.reshape(C, 1).astype(jnp.float32)

    kernel = functools.partial(_block_kernel, W=W)
    out = pl.pallas_call(
        kernel,
        out_shape=jax.ShapeDtypeStruct((N, C, HW), out_dtype),
        grid_spec=pltpu.PrefetchScalarGridSpec(
            num_scalar_prefetch=0,
            grid=(N // nb,),
            in_specs=[
                pl.BlockSpec((nb, C, HW), lambda i: (i, 0, 0)),    # x
                pl.BlockSpec((C, C), lambda i: (0, 0)),            # folded w1
                pl.BlockSpec((C, 1), lambda i: (0, 0)),            # bn1 bias
                pl.BlockSpec((C, 9 * C), lambda i: (0, 0)),        # folded w2 (im2col)
                pl.BlockSpec((C, 1), lambda i: (0, 0)),            # bn2 bias
            ],
            out_specs=pl.BlockSpec((nb, C, HW), lambda i: (i, 0, 0)),
            scratch_shapes=[
                pltpu.VMEM((C, HW + 2 * W + 2), cdtype),           # zero-margin h
                pltpu.VMEM((9 * C, HW), cdtype),                   # im2col patches
            ],
        ),
        compiler_params=pltpu.CompilerParams(
            dimension_semantics=("parallel",),
            vmem_limit_bytes=48 * 1024 * 1024,
        ),
    )(x, w1f, b1c, w2f, b2c)

    return out.reshape(N, C, H, W)


def reference_forward(x_nchw, w1, s1, b1, w2, s2, b2, *, cdtype=jnp.bfloat16):
    """Pure-JAX (XLA conv) reference with matching compute-dtype precision."""
    xb = x_nchw.astype(cdtype)
    w1f = (w1 * s1[:, None]).astype(cdtype)[:, :, None, None]     # OIHW 1x1
    w2f = (w2 * s2[:, None, None, None]).astype(cdtype)            # OIHW 3x3
    dn = ('NCHW', 'OIHW', 'NCHW')
    h = lax.conv_general_dilated(xb, w1f, (1, 1), 'VALID',
                                 dimension_numbers=dn,
                                 preferred_element_type=jnp.float32)
    h = jnp.maximum(h + b1[None, :, None, None], 0.0)
    h2 = lax.conv_general_dilated(h.astype(cdtype), w2f, (1, 1),
                                  ((1, 1), (1, 1)), dimension_numbers=dn,
                                  preferred_element_type=jnp.float32)
    out = jnp.maximum(h2 + b2[None, :, None, None] + xb.astype(jnp.float32), 0.0)
    return out


def _fold_bn(gamma, beta, mean, var, eps=1e-5):
    scale = gamma / jnp.sqrt(var + eps)
    bias = beta - mean * scale
    return scale, bias


if __name__ == "__main__":
    # inplanes == planes == 16 (C % 16 == 0 -> bf16 path); H*W = 256 lane-dense.
    N, C, H, W = 8, 16, 16, 16
    key = jax.random.PRNGKey(0)
    ks = jax.random.split(key, 11)

    x = jax.random.normal(ks[0], (N, C, H, W), jnp.float32)

    # conv weights in PyTorch layout: conv1 (Cout, Cin), conv2 (Cout, Cin, 3, 3)
    w1 = jax.random.normal(ks[1], (C, C), jnp.float32) * np.sqrt(2.0 / C)
    w2 = jax.random.normal(ks[2], (C, C, 3, 3), jnp.float32) * np.sqrt(2.0 / (9 * C))

    # BatchNorm params (eval mode: fold running stats into scale/bias)
    g1 = jax.random.uniform(ks[3], (C,), jnp.float32, 0.5, 1.5)
    be1 = jax.random.normal(ks[4], (C,), jnp.float32) * 0.1
    m1 = jax.random.normal(ks[5], (C,), jnp.float32) * 0.1
    v1 = jax.random.uniform(ks[6], (C,), jnp.float32, 0.5, 1.5)
    s1, b1 = _fold_bn(g1, be1, m1, v1)

    g2 = jax.random.uniform(ks[7], (C,), jnp.float32, 0.5, 1.5)
    be2 = jax.random.normal(ks[8], (C,), jnp.float32) * 0.1
    m2 = jax.random.normal(ks[9], (C,), jnp.float32) * 0.1
    v2 = jax.random.uniform(ks[10], (C,), jnp.float32, 0.5, 1.5)
    s2, b2 = _fold_bn(g2, be2, m2, v2)

    out = jax.block_until_ready(block_forward(x, w1, s1, b1, w2, s2, b2))
    ref = jax.block_until_ready(
        reference_forward(x, w1, s1, b1, w2, s2, b2, cdtype=jnp.bfloat16))
    np.testing.assert_allclose(np.asarray(out), np.asarray(ref),
                               rtol=1e-2, atol=1e-2)

    print("KERNEL_OK")
</pallas_src>

<mosaic_0001>
module attributes {stable_mosaic.version = 11 : i64} {
  func.func @_block_kernel(%arg0: i32, %arg1: memref<4x16x256xbf16, #tpu.memory_space<vmem>>, %arg2: memref<16x16xbf16, #tpu.memory_space<vmem>>, %arg3: memref<16x1xf32, #tpu.memory_space<vmem>>, %arg4: memref<16x144xbf16, #tpu.memory_space<vmem>>, %arg5: memref<16x1xf32, #tpu.memory_space<vmem>>, %arg6: memref<4x16x256xf32, #tpu.memory_space<vmem>>, %arg7: memref<16x290xbf16, #tpu.memory_space<vmem>>, %arg8: memref<144x256xbf16, #tpu.memory_space<vmem>>) attributes {dimension_semantics = [#tpu.dimension_semantics<parallel>], iteration_bounds = array<i64: 2>, scalar_prefetch = 0 : i64, scratch_operands = 2 : i64, tpu.core_type = #tpu.core_type<tc>, window_params = [{transform_indices = @transform_0, window_bounds = array<i64: 4, 16, 256>}, {pipeline_mode = #tpu.pipeline_mode<synchronous>, transform_indices = @transform_1, window_bounds = array<i64: 16, 16>}, {pipeline_mode = #tpu.pipeline_mode<synchronous>, transform_indices = @transform_2, window_bounds = array<i64: 16, 1>}, {pipeline_mode = #tpu.pipeline_mode<synchronous>, transform_indices = @transform_3, window_bounds = array<i64: 16, 144>}, {pipeline_mode = #tpu.pipeline_mode<synchronous>, transform_indices = @transform_4, window_bounds = array<i64: 16, 1>}, {transform_indices = @transform_5, window_bounds = array<i64: 4, 16, 256>}]} {
    %cst = arith.constant 0.000000e+00 : bf16
    %0 = vector.broadcast %cst : bf16 to vector<16x17xbf16>
    %c0 = arith.constant 0 : index
    %c0_0 = arith.constant 0 : index
    %1 = vector.load %arg7[%c0, %c0_0] : memref<16x290xbf16, #tpu.memory_space<vmem>>, vector<16x17xbf16>
    tpu.vector_store %arg7[%c0, %c0_0], %0 {strides = array<i32>} : memref<16x290xbf16, #tpu.memory_space<vmem>>, vector<16x17xbf16>,
    %c0_1 = arith.constant 0 : index
    %c273 = arith.constant 273 : index
    %2 = vector.load %arg7[%c0_1, %c273] : memref<16x290xbf16, #tpu.memory_space<vmem>>, vector<16x17xbf16>
    tpu.vector_store %arg7[%c0_1, %c273], %0 {strides = array<i32>} : memref<16x290xbf16, #tpu.memory_space<vmem>>, vector<16x17xbf16>,
    %3 = tpu.iota {dimensions = array<i32: 1>} : vector<16x256xi32>
    %c16_i32 = arith.constant 16 : i32
    %c0_i32 = arith.constant 0 : i32
    %4 = arith.cmpi eq, %c16_i32, %c0_i32 : i32
    %c1_i32 = arith.constant 1 : i32
    %5 = arith.select %4, %c1_i32, %c16_i32 : i32
    %6 = vector.broadcast %5 : i32 to vector<16x256xi32>
    %7 = arith.remsi %3, %6 : vector<16x256xi32>
    %c0_i32_2 = arith.constant 0 : i32
    %8 = vector.broadcast %c0_i32_2 : i32 to vector<16x256xi32>
    %9 = arith.cmpi ne, %7, %8 : vector<16x256xi32>
    %c0_i32_3 = arith.constant 0 : i32
    %10 = vector.broadcast %c0_i32_3 : i32 to vector<16x256xi32>
    %11 = arith.cmpi slt, %7, %10 : vector<16x256xi32>
    %c0_i32_4 = arith.constant 0 : i32
    %12 = arith.cmpi slt, %5, %c0_i32_4 : i32
    %13 = vector.broadcast %12 : i1 to vector<16x256xi1>
    %14 = vector.broadcast %13 : vector<16x256xi1> to vector<16x256xi1>
    %15 = arith.xori %11, %14 : vector<16x256xi1>
    %16 = arith.andi %15, %9 : vector<16x256xi1>
    %17 = vector.broadcast %5 : i32 to vector<16x256xi32>
    %18 = arith.addi %7, %17 : vector<16x256xi32>
    %19 = arith.select %16, %18, %7 : vector<16x256xi1>, vector<16x256xi32>
    %c0_i32_5 = arith.constant 0 : i32
    %20 = vector.broadcast %c0_i32_5 : i32 to vector<16x256xi32>
    %21 = arith.cmpi sgt, %19, %20 : vector<16x256xi32>
    %c15_i32 = arith.constant 15 : i32
    %22 = vector.broadcast %c15_i32 : i32 to vector<16x256xi32>
    %23 = arith.cmpi slt, %19, %22 : vector<16x256xi32>
    %c0_6 = arith.constant 0 : index
    %c0_7 = arith.constant 0 : index
    %c0_8 = arith.constant 0 : index
    %24 = vector.load %arg1[%c0_6, %c0_7, %c0_8] : memref<4x16x256xbf16, #tpu.memory_space<vmem>>, vector<1x16x256xbf16>
    %25 = vector.shape_cast %24 : vector<1x16x256xbf16> to vector<16x256xbf16>
    %c0_9 = arith.constant 0 : index
    %c0_10 = arith.constant 0 : index
    %26 = vector.load %arg2[%c0_9, %c0_10] : memref<16x16xbf16, #tpu.memory_space<vmem>>, vector<16x16xbf16>
    %cst_11 = arith.constant dense<0.000000e+00> : vector<16x256xf32>
    %27 = tpu.matmul %26, %25, %cst_11 {dimension_numbers = #tpu.dot_dimension_numbers<[1], [0], [0], [1], [0, 0, 1, 1], [], []>} : vector<16x16xbf16>, vector<16x256xbf16>, vector<16x256xf32> -> vector<16x256xf32>
    %c0_12 = arith.constant 0 : index
    %c0_13 = arith.constant 0 : index
    %28 = vector.load %arg3[%c0_12, %c0_13] : memref<16x1xf32, #tpu.memory_space<vmem>>, vector<16x1xf32>
    %29 = vector.broadcast %28 : vector<16x1xf32> to vector<16x256xf32>
    %30 = arith.addf %27, %29 : vector<16x256xf32>
    %cst_14 = arith.constant 0.000000e+00 : f32
    %31 = vector.broadcast %cst_14 : f32 to vector<16x256xf32>
    %32 = arith.maximumf %30, %31 : vector<16x256xf32>
    %33 = arith.truncf %32 : vector<16x256xf32> to vector<16x256xbf16>
    %c0_15 = arith.constant 0 : index
    %c17 = arith.constant 17 : index
    %34 = vector.load %arg7[%c0_15, %c17] : memref<16x290xbf16, #tpu.memory_space<vmem>>, vector<16x256xbf16>
    tpu.vector_store %arg7[%c0_15, %c17], %33 {strides = array<i32>} : memref<16x290xbf16, #tpu.memory_space<vmem>>, vector<16x256xbf16>,
    %c0_16 = arith.constant 0 : index
    %c0_17 = arith.constant 0 : index
    %35 = vector.load %arg7[%c0_16, %c0_17] : memref<16x290xbf16, #tpu.memory_space<vmem>>, vector<16x256xbf16>
    %c0_i32_18 = arith.constant 0 : i32
    %36 = arith.sitofp %c0_i32_18 : i32 to bf16
    %37 = vector.broadcast %36 : bf16 to vector<16x256xbf16>
    %38 = arith.select %21, %35, %37 : vector<16x256xi1>, vector<16x256xbf16>
    %c0_19 = arith.constant 0 : index
    %c0_20 = arith.constant 0 : index
    %39 = vector.load %arg8[%c0_19, %c0_20] : memref<144x256xbf16, #tpu.memory_space<vmem>>, vector<16x256xbf16>
    tpu.vector_store %arg8[%c0_19, %c0_20], %38 {strides = array<i32>} : memref<144x256xbf16, #tpu.memory_space<vmem>>, vector<16x256xbf16>,
    %c0_21 = arith.constant 0 : index
    %c1 = arith.constant 1 : index
    %40 = vector.load %arg7[%c0_21, %c1] : memref<16x290xbf16, #tpu.memory_space<vmem>>, vector<16x256xbf16>
    %c16 = arith.constant 16 : index
    %c0_22 = arith.constant 0 : index
    %41 = vector.load %arg8[%c16, %c0_22] : memref<144x256xbf16, #tpu.memory_space<vmem>>, vector<16x256xbf16>
    tpu.vector_store %arg8[%c16, %c0_22], %40 {strides = array<i32>} : memref<144x256xbf16, #tpu.memory_space<vmem>>, vector<16x256xbf16>,
    %c0_23 = arith.constant 0 : index
    %c2 = arith.constant 2 : index
    %42 = vector.load %arg7[%c0_23, %c2] : memref<16x290xbf16, #tpu.memory_space<vmem>>, vector<16x256xbf16>
    %c0_i32_24 = arith.constant 0 : i32
    %43 = arith.sitofp %c0_i32_24 : i32 to bf16
    %44 = vector.broadcast %43 : bf16 to vector<16x256xbf16>
    %45 = arith.select %23, %42, %44 : vector<16x256xi1>, vector<16x256xbf16>
    %c32 = arith.constant 32 : index
    %c0_25 = arith.constant 0 : index
    %46 = vector.load %arg8[%c32, %c0_25] : memref<144x256xbf16, #tpu.memory_space<vmem>>, vector<16x256xbf16>
    tpu.vector_store %arg8[%c32, %c0_25], %45 {strides = array<i32>} : memref<144x256xbf16, #tpu.memory_space<vmem>>, vector<16x256xbf16>,
    %c0_26 = arith.constant 0 : index
    %c16_27 = arith.constant 16 : index
    %47 = vector.load %arg7[%c0_26, %c16_27] : memref<16x290xbf16, #tpu.memory_space<vmem>>, vector<16x256xbf16>
    %c0_i32_28 = arith.constant 0 : i32
    %48 = arith.sitofp %c0_i32_28 : i32 to bf16
    %49 = vector.broadcast %48 : bf16 to vector<16x256xbf16>
    %50 = arith.select %21, %47, %49 : vector<16x256xi1>, vector<16x256xbf16>
    %c48 = arith.constant 48 : index
    %c0_29 = arith.constant 0 : index
    %51 = vector.load %arg8[%c48, %c0_29] : memref<144x256xbf16, #tpu.memory_space<vmem>>, vector<16x256xbf16>
    tpu.vector_store %arg8[%c48, %c0_29], %50 {strides = array<i32>} : memref<144x256xbf16, #tpu.memory_space<vmem>>, vector<16x256xbf16>,
    %c0_30 = arith.constant 0 : index
    %c17_31 = arith.constant 17 : index
    %52 = vector.load %arg7[%c0_30, %c17_31] : memref<16x290xbf16, #tpu.memory_space<vmem>>, vector<16x256xbf16>
    %c64 = arith.constant 64 : index
    %c0_32 = arith.constant 0 : index
    %53 = vector.load %arg8[%c64, %c0_32] : memref<144x256xbf16, #tpu.memory_space<vmem>>, vector<16x256xbf16>
    tpu.vector_store %arg8[%c64, %c0_32], %52 {strides = array<i32>} : memref<144x256xbf16, #tpu.memory_space<vmem>>, vector<16x256xbf16>,
    %c0_33 = arith.constant 0 : index
    %c18 = arith.constant 18 : index
    %54 = vector.load %arg7[%c0_33, %c18] : memref<16x290xbf16, #tpu.memory_space<vmem>>, vector<16x256xbf16>
    %c0_i32_34 = arith.constant 0 : i32
    %55 = arith.sitofp %c0_i32_34 : i32 to bf16
    %56 = vector.broadcast %55 : bf16 to vector<16x256xbf16>
    %57 = arith.select %23, %54, %56 : vector<16x256xi1>, vector<16x256xbf16>
    %c80 = arith.constant 80 : index
    %c0_35 = arith.constant 0 : index
    %58 = vector.load %arg8[%c80, %c0_35] : memref<144x256xbf16, #tpu.memory_space<vmem>>, vector<16x256xbf16>
    tpu.vector_store %arg8[%c80, %c0_35], %57 {strides = array<i32>} : memref<144x256xbf16, #tpu.memory_space<vmem>>, vector<16x256xbf16>,
    %c0_36 = arith.constant 0 : index
    %c32_37 = arith.constant 32 : index
    %59 = vector.load %arg7[%c0_36, %c32_37] : memref<16x290xbf16, #tpu.memory_space<vmem>>, vector<16x256xbf16>
    %c0_i32_38 = arith.constant 0 : i32
    %60 = arith.sitofp %c0_i32_38 : i32 to bf16
    %61 = vector.broadcast %60 : bf16 to vector<16x256xbf16>
    %62 = arith.select %21, %59, %61 : vector<16x256xi1>, vector<16x256xbf16>
    %c96 = arith.constant 96 : index
    %c0_39 = arith.constant 0 : index
    %63 = vector.load %arg8[%c96, %c0_39] : memref<144x256xbf16, #tpu.memory_space<vmem>>, vector<16x256xbf16>
    tpu.vector_store %arg8[%c96, %c0_39], %62 {strides = array<i32>} : memref<144x256xbf16, #tpu.memory_space<vmem>>, vector<16x256xbf16>,
    %c0_40 = arith.constant 0 : index
    %c33 = arith.constant 33 : index
    %64 = vector.load %arg7[%c0_40, %c33] : memref<16x290xbf16, #tpu.memory_space<vmem>>, vector<16x256xbf16>
    %c112 = arith.constant 112 : index
    %c0_41 = arith.constant 0 : index
    %65 = vector.load %arg8[%c112, %c0_41] : memref<144x256xbf16, #tpu.memory_space<vmem>>, vector<16x256xbf16>
    tpu.vector_store %arg8[%c112, %c0_41], %64 {strides = array<i32>} : memref<144x256xbf16, #tpu.memory_space<vmem>>, vector<16x256xbf16>,
    %c0_42 = arith.constant 0 : index
    %c34 = arith.constant 34 : index
    %66 = vector.load %arg7[%c0_42, %c34] : memref<16x290xbf16, #tpu.memory_space<vmem>>, vector<16x256xbf16>
    %c0_i32_43 = arith.constant 0 : i32
    %67 = arith.sitofp %c0_i32_43 : i32 to bf16
    %68 = vector.broadcast %67 : bf16 to vector<16x256xbf16>
    %69 = arith.select %23, %66, %68 : vector<16x256xi1>, vector<16x256xbf16>
    %c128 = arith.constant 128 : index
    %c0_44 = arith.constant 0 : index
    %70 = vector.load %arg8[%c128, %c0_44] : memref<144x256xbf16, #tpu.memory_space<vmem>>, vector<16x256xbf16>
    tpu.vector_store %arg8[%c128, %c0_44], %69 {strides = array<i32>} : memref<144x256xbf16, #tpu.memory_space<vmem>>, vector<16x256xbf16>,
    %c0_45 = arith.constant 0 : index
    %c0_46 = arith.constant 0 : index
    %71 = vector.load %arg4[%c0_45, %c0_46] : memref<16x144xbf16, #tpu.memory_space<vmem>>, vector<16x144xbf16>
    %c0_47 = arith.constant 0 : index
    %c0_48 = arith.constant 0 : index
    %72 = vector.load %arg8[%c0_47, %c0_48] : memref<144x256xbf16, #tpu.memory_space<vmem>>, vector<144x256xbf16>
    %cst_49 = arith.constant dense<0.000000e+00> : vector<16x256xf32>
    %73 = tpu.matmul %71, %72, %cst_49 {dimension_numbers = #tpu.dot_dimension_numbers<[1], [0], [0], [1], [0, 0, 1, 1], [], []>} : vector<16x144xbf16>, vector<144x256xbf16>, vector<16x256xf32> -> vector<16x256xf32>
    %c0_50 = arith.constant 0 : index
    %c0_51 = arith.constant 0 : index
    %c0_52 = arith.constant 0 : index
    %74 = vector.load %arg1[%c0_50, %c0_51, %c0_52] : memref<4x16x256xbf16, #tpu.memory_space<vmem>>, vector<1x16x256xbf16>
    %75 = vector.shape_cast %74 : vector<1x16x256xbf16> to vector<16x256xbf16>
    %76 = arith.extf %75 : vector<16x256xbf16> to vector<16x256xf32>
    %c0_53 = arith.constant 0 : index
    %c0_54 = arith.constant 0 : index
    %77 = vector.load %arg5[%c0_53, %c0_54] : memref<16x1xf32, #tpu.memory_space<vmem>>, vector<16x1xf32>
    %78 = vector.broadcast %77 : vector<16x1xf32> to vector<16x256xf32>
    %79 = arith.addf %73, %78 : vector<16x256xf32>
    %80 = arith.addf %79, %76 : vector<16x256xf32>
    %cst_55 = arith.constant 0.000000e+00 : f32
    %81 = vector.broadcast %cst_55 : f32 to vector<16x256xf32>
    %82 = arith.maximumf %80, %81 : vector<16x256xf32>
    %c0_56 = arith.constant 0 : index
    %c0_57 = arith.constant 0 : index
    %c0_58 = arith.constant 0 : index
    %83 = vector.load %arg6[%c0_56, %c0_57, %c0_58] : memref<4x16x256xf32, #tpu.memory_space<vmem>>, vector<1x16x256xf32>
    %84 = vector.shape_cast %83 : vector<1x16x256xf32> to vector<16x256xf32>
    %85 = vector.shape_cast %82 : vector<16x256xf32> to vector<1x16x256xf32>
    tpu.vector_store %arg6[%c0_56, %c0_57, %c0_58], %85 {strides = array<i32>} : memref<4x16x256xf32, #tpu.memory_space<vmem>>, vector<1x16x256xf32>,
    %c1_59 = arith.constant 1 : index
    %c0_60 = arith.constant 0 : index
    %c0_61 = arith.constant 0 : index
    %86 = vector.load %arg1[%c1_59, %c0_60, %c0_61] : memref<4x16x256xbf16, #tpu.memory_space<vmem>>, vector<1x16x256xbf16>
    %87 = vector.shape_cast %86 : vector<1x16x256xbf16> to vector<16x256xbf16>
    %c0_62 = arith.constant 0 : index
    %c0_63 = arith.constant 0 : index
    %88 = vector.load %arg2[%c0_62, %c0_63] : memref<16x16xbf16, #tpu.memory_space<vmem>>, vector<16x16xbf16>
    %cst_64 = arith.constant dense<0.000000e+00> : vector<16x256xf32>
    %89 = tpu.matmul %88, %87, %cst_64 {dimension_numbers = #tpu.dot_dimension_numbers<[1], [0], [0], [1], [0, 0, 1, 1], [], []>} : vector<16x16xbf16>, vector<16x256xbf16>, vector<16x256xf32> -> vector<16x256xf32>
    %c0_65 = arith.constant 0 : index
    %c0_66 = arith.constant 0 : index
    %90 = vector.load %arg3[%c0_65, %c0_66] : memref<16x1xf32, #tpu.memory_space<vmem>>, vector<16x1xf32>
    %91 = vector.broadcast %90 : vector<16x1xf32> to vector<16x256xf32>
    %92 = arith.addf %89, %91 : vector<16x256xf32>
    %cst_67 = arith.constant 0.000000e+00 : f32
    %93 = vector.broadcast %cst_67 : f32 to vector<16x256xf32>
    %94 = arith.maximumf %92, %93 : vector<16x256xf32>
    %95 = arith.truncf %94 : vector<16x256xf32> to vector<16x256xbf16>
    %c0_68 = arith.constant 0 : index
    %c17_69 = arith.constant 17 : index
    %96 = vector.load %arg7[%c0_68, %c17_69] : memref<16x290xbf16, #tpu.memory_space<vmem>>, vector<16x256xbf16>
    tpu.vector_store %arg7[%c0_68, %c17_69], %95 {strides = array<i32>} : memref<16x290xbf16, #tpu.memory_space<vmem>>, vector<16x256xbf16>,
    %c0_70 = arith.constant 0 : index
    %c0_71 = arith.constant 0 : index
    %97 = vector.load %arg7[%c0_70, %c0_71] : memref<16x290xbf16, #tpu.memory_space<vmem>>, vector<16x256xbf16>
    %c0_i32_72 = arith.constant 0 : i32
    %98 = arith.sitofp %c0_i32_72 : i32 to bf16
    %99 = vector.broadcast %98 : bf16 to vector<16x256xbf16>
    %100 = arith.select %21, %97, %99 : vector<16x256xi1>, vector<16x256xbf16>
    %c0_73 = arith.constant 0 : index
    %c0_74 = arith.constant 0 : index
    %101 = vector.load %arg8[%c0_73, %c0_74] : memref<144x256xbf16, #tpu.memory_space<vmem>>, vector<16x256xbf16>
    tpu.vector_store %arg8[%c0_73, %c0_74], %100 {strides = array<i32>} : memref<144x256xbf16, #tpu.memory_space<vmem>>, vector<16x256xbf16>,
    %c0_75 = arith.constant 0 : index
    %c1_76 = arith.constant 1 : index
    %102 = vector.load %arg7[%c0_75, %c1_76] : memref<16x290xbf16, #tpu.memory_space<vmem>>, vector<16x256xbf16>
    %c16_77 = arith.constant 16 : index
    %c0_78 = arith.constant 0 : index
    %103 = vector.load %arg8[%c16_77, %c0_78] : memref<144x256xbf16, #tpu.memory_space<vmem>>, vector<16x256xbf16>
    tpu.vector_store %arg8[%c16_77, %c0_78], %102 {strides = array<i32>} : memref<144x256xbf16, #tpu.memory_space<vmem>>, vector<16x256xbf16>,
    %c0_79 = arith.constant 0 : index
    %c2_80 = arith.constant 2 : index
    %104 = vector.load %arg7[%c0_79, %c2_80] : memref<16x290xbf16, #tpu.memory_space<vmem>>, vector<16x256xbf16>
    %c0_i32_81 = arith.constant 0 : i32
    %105 = arith.sitofp %c0_i32_81 : i32 to bf16
    %106 = vector.broadcast %105 : bf16 to vector<16x256xbf16>
    %107 = arith.select %23, %104, %106 : vector<16x256xi1>, vector<16x256xbf16>
    %c32_82 = arith.constant 32 : index
    %c0_83 = arith.constant 0 : index
    %108 = vector.load %arg8[%c32_82, %c0_83] : memref<144x256xbf16, #tpu.memory_space<vmem>>, vector<16x256xbf16>
    tpu.vector_store %arg8[%c32_82, %c0_83], %107 {strides = array<i32>} : memref<144x256xbf16, #tpu.memory_space<vmem>>, vector<16x256xbf16>,
    %c0_84 = arith.constant 0 : index
    %c16_85 = arith.constant 16 : index
    %109 = vector.load %arg7[%c0_84, %c16_85] : memref<16x290xbf16, #tpu.memory_space<vmem>>, vector<16x256xbf16>
    %c0_i32_86 = arith.constant 0 : i32
    %110 = arith.sitofp %c0_i32_86 : i32 to bf16
    %111 = vector.broadcast %110 : bf16 to vector<16x256xbf16>
    %112 = arith.select %21, %109, %111 : vector<16x256xi1>, vector<16x256xbf16>
    %c48_87 = arith.constant 48 : index
    %c0_88 = arith.constant 0 : index
    %113 = vector.load %arg8[%c48_87, %c0_88] : memref<144x256xbf16, #tpu.memory_space<vmem>>, vector<16x256xbf16>
    tpu.vector_store %arg8[%c48_87, %c0_88], %112 {strides = array<i32>} : memref<144x256xbf16, #tpu.memory_space<vmem>>, vector<16x256xbf16>,
    %c0_89 = arith.constant 0 : index
    %c17_90 = arith.constant 17 : index
    %114 = vector.load %arg7[%c0_89, %c17_90] : memref<16x290xbf16, #tpu.memory_space<vmem>>, vector<16x256xbf16>
    %c64_91 = arith.constant 64 : index
    %c0_92 = arith.constant 0 : index
    %115 = vector.load %arg8[%c64_91, %c0_92] : memref<144x256xbf16, #tpu.memory_space<vmem>>, vector<16x256xbf16>
    tpu.vector_store %arg8[%c64_91, %c0_92], %114 {strides = array<i32>} : memref<144x256xbf16, #tpu.memory_space<vmem>>, vector<16x256xbf16>,
    %c0_93 = arith.constant 0 : index
    %c18_94 = arith.constant 18 : index
    %116 = vector.load %arg7[%c0_93, %c18_94] : memref<16x290xbf16, #tpu.memory_space<vmem>>, vector<16x256xbf16>
    %c0_i32_95 = arith.constant 0 : i32
    %117 = arith.sitofp %c0_i32_95 : i32 to bf16
    %118 = vector.broadcast %117 : bf16 to vector<16x256xbf16>
    %119 = arith.select %23, %116, %118 : vector<16x256xi1>, vector<16x256xbf16>
    %c80_96 = arith.constant 80 : index
    %c0_97 = arith.constant 0 : index
    %120 = vector.load %arg8[%c80_96, %c0_97] : memref<144x256xbf16, #tpu.memory_space<vmem>>, vector<16x256xbf16>
    tpu.vector_store %arg8[%c80_96, %c0_97], %119 {strides = array<i32>} : memref<144x256xbf16, #tpu.memory_space<vmem>>, vector<16x256xbf16>,
    %c0_98 = arith.constant 0 : index
    %c32_99 = arith.constant 32 : index
    %121 = vector.load %arg7[%c0_98, %c32_99] : memref<16x290xbf16, #tpu.memory_space<vmem>>, vector<16x256xbf16>
    %c0_i32_100 = arith.constant 0 : i32
    %122 = arith.sitofp %c0_i32_100 : i32 to bf16
    %123 = vector.broadcast %122 : bf16 to vector<16x256xbf16>
    %124 = arith.select %21, %121, %123 : vector<16x256xi1>, vector<16x256xbf16>
    %c96_101 = arith.constant 96 : index
    %c0_102 = arith.constant 0 : index
    %125 = vector.load %arg8[%c96_101, %c0_102] : memref<144x256xbf16, #tpu.memory_space<vmem>>, vector<16x256xbf16>
    tpu.vector_store %arg8[%c96_101, %c0_102], %124 {strides = array<i32>} : memref<144x256xbf16, #tpu.memory_space<vmem>>, vector<16x256xbf16>,
    %c0_103 = arith.constant 0 : index
    %c33_104 = arith.constant 33 : index
    %126 = vector.load %arg7[%c0_103, %c33_104] : memref<16x290xbf16, #tpu.memory_space<vmem>>, vector<16x256xbf16>
    %c112_105 = arith.constant 112 : index
    %c0_106 = arith.constant 0 : index
    %127 = vector.load %arg8[%c112_105, %c0_106] : memref<144x256xbf16, #tpu.memory_space<vmem>>, vector<16x256xbf16>
    tpu.vector_store %arg8[%c112_105, %c0_106], %126 {strides = array<i32>} : memref<144x256xbf16, #tpu.memory_space<vmem>>, vector<16x256xbf16>,
    %c0_107 = arith.constant 0 : index
    %c34_108 = arith.constant 34 : index
    %128 = vector.load %arg7[%c0_107, %c34_108] : memref<16x290xbf16, #tpu.memory_space<vmem>>, vector<16x256xbf16>
    %c0_i32_109 = arith.constant 0 : i32
    %129 = arith.sitofp %c0_i32_109 : i32 to bf16
    %130 = vector.broadcast %129 : bf16 to vector<16x256xbf16>
    %131 = arith.select %23, %128, %130 : vector<16x256xi1>, vector<16x256xbf16>
    %c128_110 = arith.constant 128 : index
    %c0_111 = arith.constant 0 : index
    %132 = vector.load %arg8[%c128_110, %c0_111] : memref<144x256xbf16, #tpu.memory_space<vmem>>, vector<16x256xbf16>
    tpu.vector_store %arg8[%c128_110, %c0_111], %131 {strides = array<i32>} : memref<144x256xbf16, #tpu.memory_space<vmem>>, vector<16x256xbf16>,
    %c0_112 = arith.constant 0 : index
    %c0_113 = arith.constant 0 : index
    %133 = vector.load %arg4[%c0_112, %c0_113] : memref<16x144xbf16, #tpu.memory_space<vmem>>, vector<16x144xbf16>
    %c0_114 = arith.constant 0 : index
    %c0_115 = arith.constant 0 : index
    %134 = vector.load %arg8[%c0_114, %c0_115] : memref<144x256xbf16, #tpu.memory_space<vmem>>, vector<144x256xbf16>
    %cst_116 = arith.constant dense<0.000000e+00> : vector<16x256xf32>
    %135 = tpu.matmul %133, %134, %cst_116 {dimension_numbers = #tpu.dot_dimension_numbers<[1], [0], [0], [1], [0, 0, 1, 1], [], []>} : vector<16x144xbf16>, vector<144x256xbf16>, vector<16x256xf32> -> vector<16x256xf32>
    %c1_117 = arith.constant 1 : index
    %c0_118 = arith.constant 0 : index
    %c0_119 = arith.constant 0 : index
    %136 = vector.load %arg1[%c1_117, %c0_118, %c0_119] : memref<4x16x256xbf16, #tpu.memory_space<vmem>>, vector<1x16x256xbf16>
    %137 = vector.shape_cast %136 : vector<1x16x256xbf16> to vector<16x256xbf16>
    %138 = arith.extf %137 : vector<16x256xbf16> to vector<16x256xf32>
    %c0_120 = arith.constant 0 : index
    %c0_121 = arith.constant 0 : index
    %139 = vector.load %arg5[%c0_120, %c0_121] : memref<16x1xf32, #tpu.memory_space<vmem>>, vector<16x1xf32>
    %140 = vector.broadcast %139 : vector<16x1xf32> to vector<16x256xf32>
    %141 = arith.addf %135, %140 : vector<16x256xf32>
    %142 = arith.addf %141, %138 : vector<16x256xf32>
    %cst_122 = arith.constant 0.000000e+00 : f32
    %143 = vector.broadcast %cst_122 : f32 to vector<16x256xf32>
    %144 = arith.maximumf %142, %143 : vector<16x256xf32>
    %c1_123 = arith.constant 1 : index
    %c0_124 = arith.constant 0 : index
    %c0_125 = arith.constant 0 : index
    %145 = vector.load %arg6[%c1_123, %c0_124, %c0_125] : memref<4x16x256xf32, #tpu.memory_space<vmem>>, vector<1x16x256xf32>
    %146 = vector.shape_cast %145 : vector<1x16x256xf32> to vector<16x256xf32>
    %147 = vector.shape_cast %144 : vector<16x256xf32> to vector<1x16x256xf32>
    tpu.vector_store %arg6[%c1_123, %c0_124, %c0_125], %147 {strides = array<i32>} : memref<4x16x256xf32, #tpu.memory_space<vmem>>, vector<1x16x256xf32>,
    %c2_126 = arith.constant 2 : index
    %c0_127 = arith.constant 0 : index
    %c0_128 = arith.constant 0 : index
    %148 = vector.load %arg1[%c2_126, %c0_127, %c0_128] : memref<4x16x256xbf16, #tpu.memory_space<vmem>>, vector<1x16x256xbf16>
    %149 = vector.shape_cast %148 : vector<1x16x256xbf16> to vector<16x256xbf16>
    %c0_129 = arith.constant 0 : index
    %c0_130 = arith.constant 0 : index
    %150 = vector.load %arg2[%c0_129, %c0_130] : memref<16x16xbf16, #tpu.memory_space<vmem>>, vector<16x16xbf16>
    %cst_131 = arith.constant dense<0.000000e+00> : vector<16x256xf32>
    %151 = tpu.matmul %150, %149, %cst_131 {dimension_numbers = #tpu.dot_dimension_numbers<[1], [0], [0], [1], [0, 0, 1, 1], [], []>} : vector<16x16xbf16>, vector<16x256xbf16>, vector<16x256xf32> -> vector<16x256xf32>
    %c0_132 = arith.constant 0 : index
    %c0_133 = arith.constant 0 : index
    %152 = vector.load %arg3[%c0_132, %c0_133] : memref<16x1xf32, #tpu.memory_space<vmem>>, vector<16x1xf32>
    %153 = vector.broadcast %152 : vector<16x1xf32> to vector<16x256xf32>
    %154 = arith.addf %151, %153 : vector<16x256xf32>
    %cst_134 = arith.constant 0.000000e+00 : f32
    %155 = vector.broadcast %cst_134 : f32 to vector<16x256xf32>
    %156 = arith.maximumf %154, %155 : vector<16x256xf32>
    %157 = arith.truncf %156 : vector<16x256xf32> to vector<16x256xbf16>
    %c0_135 = arith.constant 0 : index
    %c17_136 = arith.constant 17 : index
    %158 = vector.load %arg7[%c0_135, %c17_136] : memref<16x290xbf16, #tpu.memory_space<vmem>>, vector<16x256xbf16>
    tpu.vector_store %arg7[%c0_135, %c17_136], %157 {strides = array<i32>} : memref<16x290xbf16, #tpu.memory_space<vmem>>, vector<16x256xbf16>,
    %c0_137 = arith.constant 0 : index
    %c0_138 = arith.constant 0 : index
    %159 = vector.load %arg7[%c0_137, %c0_138] : memref<16x290xbf16, #tpu.memory_space<vmem>>, vector<16x256xbf16>
    %c0_i32_139 = arith.constant 0 : i32
    %160 = arith.sitofp %c0_i32_139 : i32 to bf16
    %161 = vector.broadcast %160 : bf16 to vector<16x256xbf16>
    %162 = arith.select %21, %159, %161 : vector<16x256xi1>, vector<16x256xbf16>
    %c0_140 = arith.constant 0 : index
    %c0_141 = arith.constant 0 : index
    %163 = vector.load %arg8[%c0_140, %c0_141] : memref<144x256xbf16, #tpu.memory_space<vmem>>, vector<16x256xbf16>
    tpu.vector_store %arg8[%c0_140, %c0_141], %162 {strides = array<i32>} : memref<144x256xbf16, #tpu.memory_space<vmem>>, vector<16x256xbf16>,
    %c0_142 = arith.constant 0 : index
    %c1_143 = arith.constant 1 : index
    %164 = vector.load %arg7[%c0_142, %c1_143] : memref<16x290xbf16, #tpu.memory_space<vmem>>, vector<16x256xbf16>
    %c16_144 = arith.constant 16 : index
    %c0_145 = arith.constant 0 : index
    %165 = vector.load %arg8[%c16_144, %c0_145] : memref<144x256xbf16, #tpu.memory_space<vmem>>, vector<16x256xbf16>
    tpu.vector_store %arg8[%c16_144, %c0_145], %164 {strides = array<i32>} : memref<144x256xbf16, #tpu.memory_space<vmem>>, vector<16x256xbf16>,
    %c0_146 = arith.constant 0 : index
    %c2_147 = arith.constant 2 : index
    %166 = vector.load %arg7[%c0_146, %c2_147] : memref<16x290xbf16, #tpu.memory_space<vmem>>, vector<16x256xbf16>
    %c0_i32_148 = arith.constant 0 : i32
    %167 = arith.sitofp %c0_i32_148 : i32 to bf16
    %168 = vector.broadcast %167 : bf16 to vector<16x256xbf16>
    %169 = arith.select %23, %166, %168 : vector<16x256xi1>, vector<16x256xbf16>
    %c32_149 = arith.constant 32 : index
    %c0_150 = arith.constant 0 : index
    %170 = vector.load %arg8[%c32_149, %c0_150] : memref<144x256xbf16, #tpu.memory_space<vmem>>, vector<16x256xbf16>
    tpu.vector_store %arg8[%c32_149, %c0_150], %169 {strides = array<i32>} : memref<144x256xbf16, #tpu.memory_space<vmem>>, vector<16x256xbf16>,
    %c0_151 = arith.constant 0 : index
    %c16_152 = arith.constant 16 : index
    %171 = vector.load %arg7[%c0_151, %c16_152] : memref<16x290xbf16, #tpu.memory_space<vmem>>, vector<16x256xbf16>
    %c0_i32_153 = arith.constant 0 : i32
    %172 = arith.sitofp %c0_i32_153 : i32 to bf16
    %173 = vector.broadcast %172 : bf16 to vector<16x256xbf16>
    %174 = arith.select %21, %171, %173 : vector<16x256xi1>, vector<16x256xbf16>
    %c48_154 = arith.constant 48 : index
    %c0_155 = arith.constant 0 : index
    %175 = vector.load %arg8[%c48_154, %c0_155] : memref<144x256xbf16, #tpu.memory_space<vmem>>, vector<16x256xbf16>
    tpu.vector_store %arg8[%c48_154, %c0_155], %174 {strides = array<i32>} : memref<144x256xbf16, #tpu.memory_space<vmem>>, vector<16x256xbf16>,
    %c0_156 = arith.constant 0 : index
    %c17_157 = arith.constant 17 : index
    %176 = vector.load %arg7[%c0_156, %c17_157] : memref<16x290xbf16, #tpu.memory_space<vmem>>, vector<16x256xbf16>
    %c64_158 = arith.constant 64 : index
    %c0_159 = arith.constant 0 : index
    %177 = vector.load %arg8[%c64_158, %c0_159] : memref<144x256xbf16, #tpu.memory_space<vmem>>, vector<16x256xbf16>
    tpu.vector_store %arg8[%c64_158, %c0_159], %176 {strides = array<i32>} : memref<144x256xbf16, #tpu.memory_space<vmem>>, vector<16x256xbf16>,
    %c0_160 = arith.constant 0 : index
    %c18_161 = arith.constant 18 : index
    %178 = vector.load %arg7[%c0_160, %c18_161] : memref<16x290xbf16, #tpu.memory_space<vmem>>, vector<16x256xbf16>
    %c0_i32_162 = arith.constant 0 : i32
    %179 = arith.sitofp %c0_i32_162 : i32 to bf16
    %180 = vector.broadcast %179 : bf16 to vector<16x256xbf16>
    %181 = arith.select %23, %178, %180 : vector<16x256xi1>, vector<16x256xbf16>
    %c80_163 = arith.constant 80 : index
    %c0_164 = arith.constant 0 : index
    %182 = vector.load %arg8[%c80_163, %c0_164] : memref<144x256xbf16, #tpu.memory_space<vmem>>, vector<16x256xbf16>
    tpu.vector_store %arg8[%c80_163, %c0_164], %181 {strides = array<i32>} : memref<144x256xbf16, #tpu.memory_space<vmem>>, vector<16x256xbf16>,
    %c0_165 = arith.constant 0 : index
    %c32_166 = arith.constant 32 : index
    %183 = vector.load %arg7[%c0_165, %c32_166] : memref<16x290xbf16, #tpu.memory_space<vmem>>, vector<16x256xbf16>
    %c0_i32_167 = arith.constant 0 : i32
    %184 = arith.sitofp %c0_i32_167 : i32 to bf16
    %185 = vector.broadcast %184 : bf16 to vector<16x256xbf16>
    %186 = arith.select %21, %183, %185 : vector<16x256xi1>, vector<16x256xbf16>
    %c96_168 = arith.constant 96 : index
    %c0_169 = arith.constant 0 : index
    %187 = vector.load %arg8[%c96_168, %c0_169] : memref<144x256xbf16, #tpu.memory_space<vmem>>, vector<16x256xbf16>
    tpu.vector_store %arg8[%c96_168, %c0_169], %186 {strides = array<i32>} : memref<144x256xbf16, #tpu.memory_space<vmem>>, vector<16x256xbf16>,
    %c0_170 = arith.constant 0 : index
    %c33_171 = arith.constant 33 : index
    %188 = vector.load %arg7[%c0_170, %c33_171] : memref<16x290xbf16, #tpu.memory_space<vmem>>, vector<16x256xbf16>
    %c112_172 = arith.constant 112 : index
    %c0_173 = arith.constant 0 : index
    %189 = vector.load %arg8[%c112_172, %c0_173] : memref<144x256xbf16, #tpu.memory_space<vmem>>, vector<16x256xbf16>
    tpu.vector_store %arg8[%c112_172, %c0_173], %188 {strides = array<i32>} : memref<144x256xbf16, #tpu.memory_space<vmem>>, vector<16x256xbf16>,
    %c0_174 = arith.constant 0 : index
    %c34_175 = arith.constant 34 : index
    %190 = vector.load %arg7[%c0_174, %c34_175] : memref<16x290xbf16, #tpu.memory_space<vmem>>, vector<16x256xbf16>
    %c0_i32_176 = arith.constant 0 : i32
    %191 = arith.sitofp %c0_i32_176 : i32 to bf16
    %192 = vector.broadcast %191 : bf16 to vector<16x256xbf16>
    %193 = arith.select %23, %190, %192 : vector<16x256xi1>, vector<16x256xbf16>
    %c128_177 = arith.constant 128 : index
    %c0_178 = arith.constant 0 : index
    %194 = vector.load %arg8[%c128_177, %c0_178] : memref<144x256xbf16, #tpu.memory_space<vmem>>, vector<16x256xbf16>
    tpu.vector_store %arg8[%c128_177, %c0_178], %193 {strides = array<i32>} : memref<144x256xbf16, #tpu.memory_space<vmem>>, vector<16x256xbf16>,
    %c0_179 = arith.constant 0 : index
    %c0_180 = arith.constant 0 : index
    %195 = vector.load %arg4[%c0_179, %c0_180] : memref<16x144xbf16, #tpu.memory_space<vmem>>, vector<16x144xbf16>
    %c0_181 = arith.constant 0 : index
    %c0_182 = arith.constant 0 : index
    %196 = vector.load %arg8[%c0_181, %c0_182] : memref<144x256xbf16, #tpu.memory_space<vmem>>, vector<144x256xbf16>
    %cst_183 = arith.constant dense<0.000000e+00> : vector<16x256xf32>
    %197 = tpu.matmul %195, %196, %cst_183 {dimension_numbers = #tpu.dot_dimension_numbers<[1], [0], [0], [1], [0, 0, 1, 1], [], []>} : vector<16x144xbf16>, vector<144x256xbf16>, vector<16x256xf32> -> vector<16x256xf32>
    %c2_184 = arith.constant 2 : index
    %c0_185 = arith.constant 0 : index
    %c0_186 = arith.constant 0 : index
    %198 = vector.load %arg1[%c2_184, %c0_185, %c0_186] : memref<4x16x256xbf16, #tpu.memory_space<vmem>>, vector<1x16x256xbf16>
    %199 = vector.shape_cast %198 : vector<1x16x256xbf16> to vector<16x256xbf16>
    %200 = arith.extf %199 : vector<16x256xbf16> to vector<16x256xf32>
    %c0_187 = arith.constant 0 : index
    %c0_188 = arith.constant 0 : index
    %201 = vector.load %arg5[%c0_187, %c0_188] : memref<16x1xf32, #tpu.memory_space<vmem>>, vector<16x1xf32>
    %202 = vector.broadcast %201 : vector<16x1xf32> to vector<16x256xf32>
    %203 = arith.addf %197, %202 : vector<16x256xf32>
    %204 = arith.addf %203, %200 : vector<16x256xf32>
    %cst_189 = arith.constant 0.000000e+00 : f32
    %205 = vector.broadcast %cst_189 : f32 to vector<16x256xf32>
    %206 = arith.maximumf %204, %205 : vector<16x256xf32>
    %c2_190 = arith.constant 2 : index
    %c0_191 = arith.constant 0 : index
    %c0_192 = arith.constant 0 : index
    %207 = vector.load %arg6[%c2_190, %c0_191, %c0_192] : memref<4x16x256xf32, #tpu.memory_space<vmem>>, vector<1x16x256xf32>
    %208 = vector.shape_cast %207 : vector<1x16x256xf32> to vector<16x256xf32>
    %209 = vector.shape_cast %206 : vector<16x256xf32> to vector<1x16x256xf32>
    tpu.vector_store %arg6[%c2_190, %c0_191, %c0_192], %209 {strides = array<i32>} : memref<4x16x256xf32, #tpu.memory_space<vmem>>, vector<1x16x256xf32>,
    %c3 = arith.constant 3 : index
    %c0_193 = arith.constant 0 : index
    %c0_194 = arith.constant 0 : index
    %210 = vector.load %arg1[%c3, %c0_193, %c0_194] : memref<4x16x256xbf16, #tpu.memory_space<vmem>>, vector<1x16x256xbf16>
    %211 = vector.shape_cast %210 : vector<1x16x256xbf16> to vector<16x256xbf16>
    %c0_195 = arith.constant 0 : index
    %c0_196 = arith.constant 0 : index
    %212 = vector.load %arg2[%c0_195, %c0_196] : memref<16x16xbf16, #tpu.memory_space<vmem>>, vector<16x16xbf16>
    %cst_197 = arith.constant dense<0.000000e+00> : vector<16x256xf32>
    %213 = tpu.matmul %212, %211, %cst_197 {dimension_numbers = #tpu.dot_dimension_numbers<[1], [0], [0], [1], [0, 0, 1, 1], [], []>} : vector<16x16xbf16>, vector<16x256xbf16>, vector<16x256xf32> -> vector<16x256xf32>
    %c0_198 = arith.constant 0 : index
    %c0_199 = arith.constant 0 : index
    %214 = vector.load %arg3[%c0_198, %c0_199] : memref<16x1xf32, #tpu.memory_space<vmem>>, vector<16x1xf32>
    %215 = vector.broadcast %214 : vector<16x1xf32> to vector<16x256xf32>
    %216 = arith.addf %213, %215 : vector<16x256xf32>
    %cst_200 = arith.constant 0.000000e+00 : f32
    %217 = vector.broadcast %cst_200 : f32 to vector<16x256xf32>
    %218 = arith.maximumf %216, %217 : vector<16x256xf32>
    %219 = arith.truncf %218 : vector<16x256xf32> to vector<16x256xbf16>
    %c0_201 = arith.constant 0 : index
    %c17_202 = arith.constant 17 : index
    %220 = vector.load %arg7[%c0_201, %c17_202] : memref<16x290xbf16, #tpu.memory_space<vmem>>, vector<16x256xbf16>
    tpu.vector_store %arg7[%c0_201, %c17_202], %219 {strides = array<i32>} : memref<16x290xbf16, #tpu.memory_space<vmem>>, vector<16x256xbf16>,
    %c0_203 = arith.constant 0 : index
    %c0_204 = arith.constant 0 : index
    %221 = vector.load %arg7[%c0_203, %c0_204] : memref<16x290xbf16, #tpu.memory_space<vmem>>, vector<16x256xbf16>
    %c0_i32_205 = arith.constant 0 : i32
    %222 = arith.sitofp %c0_i32_205 : i32 to bf16
    %223 = vector.broadcast %222 : bf16 to vector<16x256xbf16>
    %224 = arith.select %21, %221, %223 : vector<16x256xi1>, vector<16x256xbf16>
    %c0_206 = arith.constant 0 : index
    %c0_207 = arith.constant 0 : index
    %225 = vector.load %arg8[%c0_206, %c0_207] : memref<144x256xbf16, #tpu.memory_space<vmem>>, vector<16x256xbf16>
    tpu.vector_store %arg8[%c0_206, %c0_207], %224 {strides = array<i32>} : memref<144x256xbf16, #tpu.memory_space<vmem>>, vector<16x256xbf16>,
    %c0_208 = arith.constant 0 : index
    %c1_209 = arith.constant 1 : index
    %226 = vector.load %arg7[%c0_208, %c1_209] : memref<16x290xbf16, #tpu.memory_space<vmem>>, vector<16x256xbf16>
    %c16_210 = arith.constant 16 : index
    %c0_211 = arith.constant 0 : index
    %227 = vector.load %arg8[%c16_210, %c0_211] : memref<144x256xbf16, #tpu.memory_space<vmem>>, vector<16x256xbf16>
    tpu.vector_store %arg8[%c16_210, %c0_211], %226 {strides = array<i32>} : memref<144x256xbf16, #tpu.memory_space<vmem>>, vector<16x256xbf16>,
    %c0_212 = arith.constant 0 : index
    %c2_213 = arith.constant 2 : index
    %228 = vector.load %arg7[%c0_212, %c2_213] : memref<16x290xbf16, #tpu.memory_space<vmem>>, vector<16x256xbf16>
    %c0_i32_214 = arith.constant 0 : i32
    %229 = arith.sitofp %c0_i32_214 : i32 to bf16
    %230 = vector.broadcast %229 : bf16 to vector<16x256xbf16>
    %231 = arith.select %23, %228, %230 : vector<16x256xi1>, vector<16x256xbf16>
    %c32_215 = arith.constant 32 : index
    %c0_216 = arith.constant 0 : index
    %232 = vector.load %arg8[%c32_215, %c0_216] : memref<144x256xbf16, #tpu.memory_space<vmem>>, vector<16x256xbf16>
    tpu.vector_store %arg8[%c32_215, %c0_216], %231 {strides = array<i32>} : memref<144x256xbf16, #tpu.memory_space<vmem>>, vector<16x256xbf16>,
    %c0_217 = arith.constant 0 : index
    %c16_218 = arith.constant 16 : index
    %233 = vector.load %arg7[%c0_217, %c16_218] : memref<16x290xbf16, #tpu.memory_space<vmem>>, vector<16x256xbf16>
    %c0_i32_219 = arith.constant 0 : i32
    %234 = arith.sitofp %c0_i32_219 : i32 to bf16
    %235 = vector.broadcast %234 : bf16 to vector<16x256xbf16>
    %236 = arith.select %21, %233, %235 : vector<16x256xi1>, vector<16x256xbf16>
    %c48_220 = arith.constant 48 : index
    %c0_221 = arith.constant 0 : index
    %237 = vector.load %arg8[%c48_220, %c0_221] : memref<144x256xbf16, #tpu.memory_space<vmem>>, vector<16x256xbf16>
    tpu.vector_store %arg8[%c48_220, %c0_221], %236 {strides = array<i32>} : memref<144x256xbf16, #tpu.memory_space<vmem>>, vector<16x256xbf16>,
    %c0_222 = arith.constant 0 : index
    %c17_223 = arith.constant 17 : index
    %238 = vector.load %arg7[%c0_222, %c17_223] : memref<16x290xbf16, #tpu.memory_space<vmem>>, vector<16x256xbf16>
    %c64_224 = arith.constant 64 : index
    %c0_225 = arith.constant 0 : index
    %239 = vector.load %arg8[%c64_224, %c0_225] : memref<144x256xbf16, #tpu.memory_space<vmem>>, vector<16x256xbf16>
    tpu.vector_store %arg8[%c64_224, %c0_225], %238 {strides = array<i32>} : memref<144x256xbf16, #tpu.memory_space<vmem>>, vector<16x256xbf16>,
    %c0_226 = arith.constant 0 : index
    %c18_227 = arith.constant 18 : index
    %240 = vector.load %arg7[%c0_226, %c18_227] : memref<16x290xbf16, #tpu.memory_space<vmem>>, vector<16x256xbf16>
    %c0_i32_228 = arith.constant 0 : i32
    %241 = arith.sitofp %c0_i32_228 : i32 to bf16
    %242 = vector.broadcast %241 : bf16 to vector<16x256xbf16>
    %243 = arith.select %23, %240, %242 : vector<16x256xi1>, vector<16x256xbf16>
    %c80_229 = arith.constant 80 : index
    %c0_230 = arith.constant 0 : index
    %244 = vector.load %arg8[%c80_229, %c0_230] : memref<144x256xbf16, #tpu.memory_space<vmem>>, vector<16x256xbf16>
    tpu.vector_store %arg8[%c80_229, %c0_230], %243 {strides = array<i32>} : memref<144x256xbf16, #tpu.memory_space<vmem>>, vector<16x256xbf16>,
    %c0_231 = arith.constant 0 : index
    %c32_232 = arith.constant 32 : index
    %245 = vector.load %arg7[%c0_231, %c32_232] : memref<16x290xbf16, #tpu.memory_space<vmem>>, vector<16x256xbf16>
    %c0_i32_233 = arith.constant 0 : i32
    %246 = arith.sitofp %c0_i32_233 : i32 to bf16
    %247 = vector.broadcast %246 : bf16 to vector<16x256xbf16>
    %248 = arith.select %21, %245, %247 : vector<16x256xi1>, vector<16x256xbf16>
    %c96_234 = arith.constant 96 : index
    %c0_235 = arith.constant 0 : index
    %249 = vector.load %arg8[%c96_234, %c0_235] : memref<144x256xbf16, #tpu.memory_space<vmem>>, vector<16x256xbf16>
    tpu.vector_store %arg8[%c96_234, %c0_235], %248 {strides = array<i32>} : memref<144x256xbf16, #tpu.memory_space<vmem>>, vector<16x256xbf16>,
    %c0_236 = arith.constant 0 : index
    %c33_237 = arith.constant 33 : index
    %250 = vector.load %arg7[%c0_236, %c33_237] : memref<16x290xbf16, #tpu.memory_space<vmem>>, vector<16x256xbf16>
    %c112_238 = arith.constant 112 : index
    %c0_239 = arith.constant 0 : index
    %251 = vector.load %arg8[%c112_238, %c0_239] : memref<144x256xbf16, #tpu.memory_space<vmem>>, vector<16x256xbf16>
    tpu.vector_store %arg8[%c112_238, %c0_239], %250 {strides = array<i32>} : memref<144x256xbf16, #tpu.memory_space<vmem>>, vector<16x256xbf16>,
    %c0_240 = arith.constant 0 : index
    %c34_241 = arith.constant 34 : index
    %252 = vector.load %arg7[%c0_240, %c34_241] : memref<16x290xbf16, #tpu.memory_space<vmem>>, vector<16x256xbf16>
    %c0_i32_242 = arith.constant 0 : i32
    %253 = arith.sitofp %c0_i32_242 : i32 to bf16
    %254 = vector.broadcast %253 : bf16 to vector<16x256xbf16>
    %255 = arith.select %23, %252, %254 : vector<16x256xi1>, vector<16x256xbf16>
    %c128_243 = arith.constant 128 : index
    %c0_244 = arith.constant 0 : index
    %256 = vector.load %arg8[%c128_243, %c0_244] : memref<144x256xbf16, #tpu.memory_space<vmem>>, vector<16x256xbf16>
    tpu.vector_store %arg8[%c128_243, %c0_244], %255 {strides = array<i32>} : memref<144x256xbf16, #tpu.memory_space<vmem>>, vector<16x256xbf16>,
    %c0_245 = arith.constant 0 : index
    %c0_246 = arith.constant 0 : index
    %257 = vector.load %arg4[%c0_245, %c0_246] : memref<16x144xbf16, #tpu.memory_space<vmem>>, vector<16x144xbf16>
    %c0_247 = arith.constant 0 : index
    %c0_248 = arith.constant 0 : index
    %258 = vector.load %arg8[%c0_247, %c0_248] : memref<144x256xbf16, #tpu.memory_space<vmem>>, vector<144x256xbf16>
    %cst_249 = arith.constant dense<0.000000e+00> : vector<16x256xf32>
    %259 = tpu.matmul %257, %258, %cst_249 {dimension_numbers = #tpu.dot_dimension_numbers<[1], [0], [0], [1], [0, 0, 1, 1], [], []>} : vector<16x144xbf16>, vector<144x256xbf16>, vector<16x256xf32> -> vector<16x256xf32>
    %c3_250 = arith.constant 3 : index
    %c0_251 = arith.constant 0 : index
    %c0_252 = arith.constant 0 : index
    %260 = vector.load %arg1[%c3_250, %c0_251, %c0_252] : memref<4x16x256xbf16, #tpu.memory_space<vmem>>, vector<1x16x256xbf16>
    %261 = vector.shape_cast %260 : vector<1x16x256xbf16> to vector<16x256xbf16>
    %262 = arith.extf %261 : vector<16x256xbf16> to vector<16x256xf32>
    %c0_253 = arith.constant 0 : index
    %c0_254 = arith.constant 0 : index
    %263 = vector.load %arg5[%c0_253, %c0_254] : memref<16x1xf32, #tpu.memory_space<vmem>>, vector<16x1xf32>
    %264 = vector.broadcast %263 : vector<16x1xf32> to vector<16x256xf32>
    %265 = arith.addf %259, %264 : vector<16x256xf32>
    %266 = arith.addf %265, %262 : vector<16x256xf32>
    %cst_255 = arith.constant 0.000000e+00 : f32
    %267 = vector.broadcast %cst_255 : f32 to vector<16x256xf32>
    %268 = arith.maximumf %266, %267 : vector<16x256xf32>
    %c3_256 = arith.constant 3 : index
    %c0_257 = arith.constant 0 : index
    %c0_258 = arith.constant 0 : index
    %269 = vector.load %arg6[%c3_256, %c0_257, %c0_258] : memref<4x16x256xf32, #tpu.memory_space<vmem>>, vector<1x16x256xf32>
    %270 = vector.shape_cast %269 : vector<1x16x256xf32> to vector<16x256xf32>
    %271 = vector.shape_cast %268 : vector<16x256xf32> to vector<1x16x256xf32>
    tpu.vector_store %arg6[%c3_256, %c0_257, %c0_258], %271 {strides = array<i32>} : memref<4x16x256xf32, #tpu.memory_space<vmem>>, vector<1x16x256xf32>,
    return
  }
  func.func @transform_0(%arg0: i32) -> (i32, i32, i32) {
    %c0_i32 = arith.constant 0 : i32
    %c0_i32_0 = arith.constant 0 : i32
    %c0_i32_1 = arith.constant 0 : i32
    return %arg0, %c0_i32, %c0_i32_0 : i32, i32, i32
  }
  func.func @transform_1(%arg0: i32) -> (i32, i32) {
    %c0_i32 = arith.constant 0 : i32
    %c0_i32_0 = arith.constant 0 : i32
    %c0_i32_1 = arith.constant 0 : i32
    return %c0_i32, %c0_i32_0 : i32, i32
  }
  func.func @transform_2(%arg0: i32) -> (i32, i32) {
    %c0_i32 = arith.constant 0 : i32
    %c0_i32_0 = arith.constant 0 : i32
    %c0_i32_1 = arith.constant 0 : i32
    return %c0_i32, %c0_i32_0 : i32, i32
  }
  func.func @transform_3(%arg0: i32) -> (i32, i32) {
    %c0_i32 = arith.constant 0 : i32
    %c0_i32_0 = arith.constant 0 : i32
    %c0_i32_1 = arith.constant 0 : i32
    return %c0_i32, %c0_i32_0 : i32, i32
  }
  func.func @transform_4(%arg0: i32) -> (i32, i32) {
    %c0_i32 = arith.constant 0 : i32
    %c0_i32_0 = arith.constant 0 : i32
    %c0_i32_1 = arith.constant 0 : i32
    return %c0_i32, %c0_i32_0 : i32, i32
  }
  func.func @transform_5(%arg0: i32) -> (i32, i32, i32) {
    %c0_i32 = arith.constant 0 : i32
    %c0_i32_0 = arith.constant 0 : i32
    %c0_i32_1 = arith.constant 0 : i32
    return %arg0, %c0_i32, %c0_i32_0 : i32, i32, i32
  }
}

</mosaic_0001>

<llo_original>
// kernel: tpu_custom_call.1
$region0: #{tpu_custom_call.1}
  #allocation0 [shape = 'u32[]', space=smem, size = 0x4, offset = 0x4, fixed_abs, tag = 'smem constant byte address 0x4 - core index']
  #allocation1 [shape = 'u32[72,128]{1,0:T(1,128)}', space=vmem, size = 0x9000, scoped, tag = 'internal scratch']
  #allocation2 [shape = 'bf16[16,290]{1,0:T(8,128)(2,1)}', space=vmem, size = 0x3000, scoped, tag = 'scratch operand']
  #allocation3 [shape = 'bf16[144,256]{1,0:T(8,128)(2,1)}', space=vmem, size = 0x12000, scoped, tag = 'scratch operand']
  %s0 = inlined_call_operand.hbm [shape: bf16[8,16,256], index: 0, kind: input, shape index: {}]
  %s1 = inlined_call_operand.vmem [shape: bf16[16,16], index: 1, kind: input, shape index: {}]
  %s2 = inlined_call_operand.vmem [shape: f32[16,1], index: 2, kind: input, shape index: {}]
  %s3 = inlined_call_operand.vmem [shape: bf16[16,144], index: 3, kind: input, shape index: {}]
  %s4 = inlined_call_operand.vmem [shape: f32[16,1], index: 4, kind: input, shape index: {}]
  %s5 = inlined_call_operand.hbm [shape: f32[8,16,256], index: 5, kind: output, shape index: {}]
  %s6 = sld [smem:[#allocation0]]
  $region57: #{tpu_custom_call.1} parent=0
    _
  %s8 = ssub.s32 1, %s6
  %s9 = scalar_select 0, %s8, %s6
  $region1: #{tpu_custom_call.1} parent=0
    #allocation4 [shape = 'u8[65536]{0}', space=vmem, size = 0x10000, scoped, tag = 'input window, operand 0']
    #allocation5 [shape = 's32[2]{0}', space=sflag, size = 0x8, scoped, tag = 'scoped memory for tpu_custom_call.1']
    #allocation6 [shape = 's32[2]{0}', space=sflag, size = 0x8, scoped, tag = 'scoped memory for tpu_custom_call.1']
    #allocation7 [shape = 'u8[131072]{0}', space=vmem, size = 0x20000, scoped, tag = 'output window, operand 0']
    %10 = vsyncpa [#allocation5], 0
    %s11 = scalar_lea.sflag [#allocation5], 1
    %12 = vsyncpa %s11, 0
    %13 = vsyncpa [#allocation6], 0
    %s14 = scalar_lea.sflag [#allocation6], 1
    %15 = vsyncpa %s14, 0
    loop: start=0, step=1, limit=4
    $region2: #{tpu_custom_call.1} parent=1 // loop_pre_header
      _
    $region3: #{tpu_custom_call.1} parent=1 // loop_header
      %s17 = sphi 0, %s21
      %p18 = scmp.ge.s32.totalorder %s17, 4
      %s27 = sphi 0, %s29
      %s30 = sphi 0, %s27
      %s31 = sphi 0, %s30
      %s47 = sphi 0, %s31
      %s51 = sphi 0, %s51
      %s53 = sphi 0, %s51
      %s54 = sphi 0, %s53
      %s68 = sphi 0, %s54
      %s72 = sphi 0, %s72
      %s74 = sphi 0, %s72
      %s75 = sphi 0, %s74
      %s89 = sphi 0, %s75
      %s93 = sphi 0, %s93
      %s95 = sphi 0, %s93
      %s96 = sphi 0, %s95
      %s110 = sphi 0, %s96
      %s114 = sphi 0, %s114
      %s116 = sphi 0, %s114
      %s117 = sphi 0, %s116
      %s131 = sphi 0, %s117
      %s137 = sphi 0, %s139
      %s140 = sphi 0, %s137
      %s141 = sphi 0, %s140
      %s157 = sphi 0, %s141
    $region4: #{tpu_custom_call.1} parent=1 // loop_header_branch
      %20 = sbr.rel (%p18) target = $region8
    $region5: #{tpu_custom_call.1} parent=1 // loop_body
      %s22 = ssub.s32 %s17, 1
      %s23 = ssub.s32 %s17, 2
      %s24 = sadd.s32 %s17, 1
      %s25 = ssub.s32 %s17, %s24
      %p26 = scmp.eq.s32.totalorder %s25, 0
      %s28 = sadd.s32 %s27, 1
      %s29 = scalar_select %p26, %s27, %s28
      %p32 = pneg %p26
      %p33 = scmp.eq.s32.totalorder %s17, 1
      %p34 = por %p32, %p33
      %p35 = scmp.ne.s32.totalorder %s27, %s30
      %p36 = scmp.eq.s32.totalorder %s17, 0
      %p37 = por %p35, %p36
      %p38 = scmp.ne.s32.totalorder %s27, %s30
      %p39 = scmp.eq.s32.totalorder %s22, 1
      %p40 = por %p38, %p39
      %p41 = scmp.ne.s32.totalorder %s30, %s31
      %p42 = scmp.eq.s32.totalorder %s22, 0
      %p43 = por %p41, %p42
      %p44 = scmp.ne.s32.totalorder %s30, %s31
      %p45 = scmp.eq.s32.totalorder %s23, 1
      %p46 = por %p44, %p45
      %p48 = scmp.ne.s32.totalorder %s31, %s47
      %p49 = scmp.eq.s32.totalorder %s23, 0
      %p50 = por %p48, %p49
      %s52 = sadd.s32 %s51, 1
      %p55 = scmp.eq.s32.totalorder %s17, 1
      %p56 = scmp.ne.s32.totalorder %s51, %s53
      %p57 = scmp.eq.s32.totalorder %s17, 0
      %p58 = por %p56, %p57
      %p59 = scmp.ne.s32.totalorder %s51, %s53
      %p60 = scmp.eq.s32.totalorder %s22, 1
      %p61 = por %p59, %p60
      %p62 = scmp.ne.s32.totalorder %s53, %s54
      %p63 = scmp.eq.s32.totalorder %s22, 0
      %p64 = por %p62, %p63
      %p65 = scmp.ne.s32.totalorder %s53, %s54
      %p66 = scmp.eq.s32.totalorder %s23, 1
      %p67 = por %p65, %p66
      %p69 = scmp.ne.s32.totalorder %s54, %s68
      %p70 = scmp.eq.s32.totalorder %s23, 0
      %p71 = por %p69, %p70
      %s73 = sadd.s32 %s72, 1
      %p76 = scmp.eq.s32.totalorder %s17, 1
      %p77 = scmp.ne.s32.totalorder %s72, %s74
      %p78 = scmp.eq.s32.totalorder %s17, 0
      %p79 = por %p77, %p78
      %p80 = scmp.ne.s32.totalorder %s72, %s74
      %p81 = scmp.eq.s32.totalorder %s22, 1
      %p82 = por %p80, %p81
      %p83 = scmp.ne.s32.totalorder %s74, %s75
      %p84 = scmp.eq.s32.totalorder %s22, 0
      %p85 = por %p83, %p84
      %p86 = scmp.ne.s32.totalorder %s74, %s75
      %p87 = scmp.eq.s32.totalorder %s23, 1
      %p88 = por %p86, %p87
      %p90 = scmp.ne.s32.totalorder %s75, %s89
      %p91 = scmp.eq.s32.totalorder %s23, 0
      %p92 = por %p90, %p91
      %s94 = sadd.s32 %s93, 1
      %p97 = scmp.eq.s32.totalorder %s17, 1
      %p98 = scmp.ne.s32.totalorder %s93, %s95
      %p99 = scmp.eq.s32.totalorder %s17, 0
      %p100 = por %p98, %p99
      %p101 = scmp.ne.s32.totalorder %s93, %s95
      %p102 = scmp.eq.s32.totalorder %s22, 1
      %p103 = por %p101, %p102
      %p104 = scmp.ne.s32.totalorder %s95, %s96
      %p105 = scmp.eq.s32.totalorder %s22, 0
      %p106 = por %p104, %p105
      %p107 = scmp.ne.s32.totalorder %s95, %s96
      %p108 = scmp.eq.s32.totalorder %s23, 1
      %p109 = por %p107, %p108
      %p111 = scmp.ne.s32.totalorder %s96, %s110
      %p112 = scmp.eq.s32.totalorder %s23, 0
      %p113 = por %p111, %p112
      %s115 = sadd.s32 %s114, 1
      %p118 = scmp.eq.s32.totalorder %s17, 1
      %p119 = scmp.ne.s32.totalorder %s114, %s116
      %p120 = scmp.eq.s32.totalorder %s17, 0
      %p121 = por %p119, %p120
      %p122 = scmp.ne.s32.totalorder %s114, %s116
      %p123 = scmp.eq.s32.totalorder %s22, 1
      %p124 = por %p122, %p123
      %p125 = scmp.ne.s32.totalorder %s116, %s117
      %p126 = scmp.eq.s32.totalorder %s22, 0
      %p127 = por %p125, %p126
      %p128 = scmp.ne.s32.totalorder %s116, %s117
      %p129 = scmp.eq.s32.totalorder %s23, 1
      %p130 = por %p128, %p129
      %p132 = scmp.ne.s32.totalorder %s117, %s131
      %p133 = scmp.eq.s32.totalorder %s23, 0
      %p134 = por %p132, %p133
      %s135 = ssub.s32 %s17, %s24
      %p136 = scmp.eq.s32.totalorder %s135, 0
      %s138 = sadd.s32 %s137, 1
      %s139 = scalar_select %p136, %s137, %s138
      %p142 = pneg %p136
      %p143 = scmp.eq.s32.totalorder %s17, 1
      %p144 = por %p142, %p143
      %p145 = scmp.ne.s32.totalorder %s137, %s140
      %p146 = scmp.eq.s32.totalorder %s17, 0
      %p147 = por %p145, %p146
      %p148 = scmp.ne.s32.totalorder %s137, %s140
      %p149 = scmp.eq.s32.totalorder %s22, 1
      %p150 = por %p148, %p149
      %p151 = scmp.ne.s32.totalorder %s140, %s141
      %p152 = scmp.eq.s32.totalorder %s22, 0
      %p153 = por %p151, %p152
      %p154 = scmp.ne.s32.totalorder %s140, %s141
      %p155 = scmp.eq.s32.totalorder %s23, 1
      %p156 = por %p154, %p155
      %p158 = scmp.ne.s32.totalorder %s141, %s157
      %p159 = scmp.eq.s32.totalorder %s23, 0
      %p160 = por %p158, %p159
      %p161 = scmp.le.s32.totalorder 1, %s17
      %p162 = scmp.lt.s32.totalorder %s17, 3
      %p163 = pnand %p161, %p162
      %p164 = pneg %p163
      // Predicated region
      $region9: #{tpu_custom_call.1} parent=5 // pred_check
        _
      $region10: #{tpu_custom_call.1} parent=5 // pred_check_branch
        %166 = sbr.rel (%p163) target = $region12
      $region11: #{tpu_custom_call.1} parent=5 // pred_region
        %s167 = ssub.s32 %s17, 1
        // Predicated region
        $region13: #{tpu_custom_call.1} parent=11 // pred_check
          %p168 = pneg %p64
        $region14: #{tpu_custom_call.1} parent=11 // pred_check_branch
          %170 = sbr.rel (%p168) target = $region16
        $region15: #{tpu_custom_call.1} parent=11 // pred_region
          _
        $region16: #{tpu_custom_call.1} parent=11 // pred_fallthru
          _
        // Predicated region
        $region17: #{tpu_custom_call.1} parent=11 // pred_check
          %p171 = pneg %p85
        $region18: #{tpu_custom_call.1} parent=11 // pred_check_branch
          %173 = sbr.rel (%p171) target = $region20
        $region19: #{tpu_custom_call.1} parent=11 // pred_region
          _
        $region20: #{tpu_custom_call.1} parent=11 // pred_fallthru
          _
        // Predicated region
        $region21: #{tpu_custom_call.1} parent=11 // pred_check
          %p174 = pneg %p106
        $region22: #{tpu_custom_call.1} parent=11 // pred_check_branch
          %176 = sbr.rel (%p174) target = $region24
        $region23: #{tpu_custom_call.1} parent=11 // pred_region
          _
        $region24: #{tpu_custom_call.1} parent=11 // pred_fallthru
          _
        // Predicated region
        $region25: #{tpu_custom_call.1} parent=11 // pred_check
          %p177 = pneg %p127
        $region26: #{tpu_custom_call.1} parent=11 // pred_check_branch
          %179 = sbr.rel (%p177) target = $region28
        $region27: #{tpu_custom_call.1} parent=11 // pred_region
          _
        $region28: #{tpu_custom_call.1} parent=11 // pred_fallthru
          _
      $region12: #{tpu_custom_call.1} parent=5 // pred_fallthru
        _
      %p180 = scmp.lt.s32.totalorder %s17, 2
      // Predicated region
      $region29: #{tpu_custom_call.1} parent=5 // pred_check
        %p181 = pneg %p180
      $region30: #{tpu_custom_call.1} parent=5 // pred_check_branch
        %183 = sbr.rel (%p181) target = $region32
      $region31: #{tpu_custom_call.1} parent=5 // pred_region
        // Predicated region
        $region33: #{tpu_custom_call.1} parent=31 // pred_check
          %p184 = pneg %p37
        $region34: #{tpu_custom_call.1} parent=31 // pred_check_branch
          %186 = sbr.rel (%p184) target = $region36
        $region35: #{tpu_custom_call.1} parent=31 // pred_region
          %s187 = sand.u32 %s27, 1
          %s188 = scalar_lea.sflag [#allocation5], %s187
          %s189 = sand.u32 %s27, 1
          %s190 = smul.addr %s189, 64
          %s191 = scalar_lea.vmem [#allocation4], %s190
          %s192 = smul.u32 4, %s17
          %194 = vsyncadd %s188, 0
          %s195 = smul.addr %s192, 4
          %s196 = smul.addr %s195, 4
          %s197 = scalar_lea.hbm %s0, %s196
          %s198 = sshll.u32 %s197, 4
          %s199 = int_to_ptr.hbm [resolvable:$true] %s198
          %s200 = sshll.u32 %s191, 4
          %s201 = int_to_ptr.vmem [resolvable:$true] %s200
          %206 = dma.hbm_to_vmem [thread:$0]  %s199, 1024, %s201, %s188, 128, 128, 8
        $region36: #{tpu_custom_call.1} parent=31 // pred_fallthru
          _
      $region32: #{tpu_custom_call.1} parent=5 // pred_fallthru
        _
      %p207 = scmp.le.s32.totalorder 1, %s17
      %p208 = scmp.lt.s32.totalorder %s17, 3
      %p209 = pnand %p207, %p208
      %p210 = pneg %p209
      // Predicated region
      $region37: #{tpu_custom_call.1} parent=5 // pred_check
        _
      $region38: #{tpu_custom_call.1} parent=5 // pred_check_branch
        %212 = sbr.rel (%p209) target = $region40
      $region39: #{tpu_custom_call.1} parent=5 // pred_region
        %s213 = ssub.s32 %s17, 1
        %s214 = sand.u32 %s30, 1
        %s215 = scalar_lea.sflag [#allocation5], %s214
        %s216 = sand.u32 %s30, 1
        %s217 = smul.addr %s216, 64
        %s218 = scalar_lea.vmem [#allocation4], %s217
        // Predicated region
        $region41: #{tpu_custom_call.1} parent=39 // pred_check
          %p219 = pneg %p43
        $region42: #{tpu_custom_call.1} parent=39 // pred_check_branch
          %221 = sbr.rel (%p219) target = $region44
        $region43: #{tpu_custom_call.1} parent=39 // pred_region
          %223 = dma.done %s215, 1024
        $region44: #{tpu_custom_call.1} parent=39 // pred_fallthru
          _
        %s224 = sand.u32 %s30, 1
        %s225 = scalar_lea.sflag [#allocation5], %s224
        %s226 = sand.u32 %s30, 1
        %s227 = smul.addr %s226, 64
        %s228 = scalar_lea.vmem [#allocation4], %s227
        %p229 = pneg %p43
        %p230 = pneg %p40
        %p231 = pneg %p64
        %p232 = pneg %p61
        %p233 = pneg %p85
        %p234 = pneg %p82
        %p235 = pneg %p106
        %p236 = pneg %p103
        %p237 = pneg %p127
        %p238 = pneg %p124
        %p239 = pneg %p153
        %p240 = pneg %p150
        %s241 = sand.u32 %s140, 1
        %s242 = scalar_lea.sflag [#allocation6], %s241
        %s243 = sand.u32 %s140, 1
        %s244 = smul.addr %s243, 128
        %s245 = scalar_lea.vmem [#allocation7], %s244
        %s246 = smul.u32 4, %s22
        %s247 = smul.u32 4, %s22
        %vm251 = vcmask 134144
        %252 = vst.msk [vmem:[#allocation2] sm:$0xf] %vm251, 0
        %253 = vst.msk [vmem:[#allocation2 + $0xc] sm:$0xf] %vm251, 0
        %vm254 = vcmask 273544
        %255 = vst.msk [vmem:[#allocation2 + $0x8] sm:$0xf] %vm254, 0
        %256 = vst.msk [vmem:[#allocation2 + $0x14] sm:$0xf] %vm254, 0
        %v257 = vlaneseq
        %v258 = vand.u32 %v257, 127
        %v259 = vadd.s32 %v258, 128
        %vm260 = vcmp.lt.s32.totalorder %v258, 0
        %v261 = vsub.s32 0, %v258
        %v262 = vsel %vm260, %v261, %v258
        %v263 = vshrl.u32 %v262, 4
        %v264 = vand.u32 %v262, 15
        %v265 = vsub.s32 0, %v264
        %v266 = vsel %vm260, %v265, %v264
        %vm267 = vcmp.lt.s32.totalorder %v259, 0
        %v268 = vsub.s32 0, %v259
        %v269 = vsel %vm267, %v268, %v259
        %v270 = vshrl.u32 %v269, 4
        %v271 = vand.u32 %v269, 15
        %v272 = vsub.s32 0, %v271
        %v273 = vsel %vm267, %v272, %v271
        %vm274 = vcmp.ne.s32.totalorder %v266, 0
        %vm275 = vcmp.ne.s32.totalorder %v273, 0
        %vm276 = vcmp.lt.s32.totalorder %v266, 0
        %vm277 = vcmp.lt.s32.totalorder %v273, 0
        %vm278 = vmand %vm276, %vm274
        %vm279 = vmand %vm277, %vm275
        %v280 = vadd.s32 %v266, 16
        %v281 = vadd.s32 %v273, 16
        %v282 = vsel %vm278, %v280, %v266
        %v283 = vsel %vm279, %v281, %v273
        %vm284 = vcmp.gt.s32.totalorder %v282, 0
        %vm285 = vcmp.gt.s32.totalorder %v283, 0
        %vm286 = vcmp.lt.s32.totalorder %v282, 15
        %vm287 = vcmp.lt.s32.totalorder %v283, 15
        %v288 = vld [vmem:[%s218] sm:$0xff]
        %v289 = vld [vmem:[%s218 + $0x8] sm:$0xff]
        %v290 = vld [vmem:[%s1] sm:$0xf]
        %v291 = vld [vmem:[%s1 + $0x4] sm:$0xf]
        %v292 = vld [vmem:[%s2] sm:$0xff]
        %v293 = vld [vmem:[%s2 + $0x8] sm:$0xff]
        %295 = vset.pattern.permute.xlu0 0
        %296 = vperm.xlu0 %295, %v292
        %v297 = vpop.permute.xlu0 %296
        %300 = vset.pattern.permute.xlu0 0
        %301 = vperm.xlu0 %300, %v293
        %v302 = vpop.permute.xlu0 %301
        %v306 = vunpack.c.l.b16 %v290
        %v307 = vunpack.c.l.b16 %v291
        %v308 = vpack.c.b16 %v307, %v306
        %v311 = vunpack.c.l.b16 %v288
        %v312 = vunpack.c.h.b16 %v288
        %v313 = vunpack.c.l.b16 %v289
        %v314 = vunpack.c.h.b16 %v289
        %v315 = vpack.c.b16 %v313, %v311
        %v316 = vpack.c.b16 %v314, %v312
        %vm319 = vcmask 130048
        %v321 = vsel %vm319, %v308, 0
        %323 = vmatpush.bf16.msra.mxu0 0
        %324 = vmatpush.bf16.msra.mxu0 0
        %325 = vmatpush.bf16.msra.mxu0 0
        %326 = vmatpush.bf16.msra.mxu0 0
        %327 = vmatpush.bf16.msra.mxu0 0
        %328 = vmatpush.bf16.msra.mxu0 0
        %329 = vmatpush.bf16.msra.mxu0 0
        %330 = vmatpush.bf16.msra.mxu0 %v315
        %331 = vmatmul.bf16.gmra.mxu0 %v321
        %v332 = vpop.f32.mrf.mxu0
        %v333 = vadd.f32 %v297, %v332
        %v334 = vpop.f32.mrf.mxu0
        %v335 = vadd.f32 %v302, %v334
        %336 = vdwg.mxu0
        %337 = vmatpush.bf16.msra.mxu0 0
        %338 = vmatpush.bf16.msra.mxu0 0
        %339 = vmatpush.bf16.msra.mxu0 0
        %340 = vmatpush.bf16.msra.mxu0 0
        %341 = vmatpush.bf16.msra.mxu0 0
        %342 = vmatpush.bf16.msra.mxu0 0
        %343 = vmatpush.bf16.msra.mxu0 0
        %344 = vmatpush.bf16.msra.mxu0 %v316
        %345 = vmatmul.bf16.gmra.mxu0 %v321
        %v346 = vpop.f32.mrf.mxu0
        %v347 = vadd.f32 %v297, %v346
        %v348 = vpop.f32.mrf.mxu0
        %v349 = vadd.f32 %v302, %v348
        %350 = vdwg.mxu0
        %v351 = vmax.f32 %v333, 0.0
        %v352 = vmax.f32 %v347, 0.0
        %v353 = vmax.f32 %v335, 0.0
        %v354 = vmax.f32 %v349, 0.0
        %v355 = vpack.c.bf16 %v352, %v351
        %v356 = vpack.c.bf16 %v354, %v353
        %359 = vrot.lane.b32.xlu0 %v355, 17
        %v360 = vpop.permute.xlu0 %359
        %361 = vrot.lane.b32.xlu0 %v356, 17
        %v362 = vpop.permute.xlu0 %361
        %v363 = vrot.slane %v360, 4
        %v364 = vrot.slane %v362, 4
        %vm365 = vcmask 138240
        %v366 = vsel %vm365, %v363, %v360
        %v367 = vsel %vm365, %v364, %v362
        %vm372 = vcmask 1043592
        %vm373 = vcmask 1047556
        %vm374 = vmor %vm373, %vm372
        %375 = vst.msk [vmem:[#allocation2] sm:$0xff] %vm374, %v366
        %376 = vst.msk [vmem:[#allocation2 + $0x8] sm:$0xf] %vm251, %v363
        %377 = vst.msk [vmem:[#allocation2 + $0xc] sm:$0xff] %vm374, %v367
        %378 = vst.msk [vmem:[#allocation2 + $0x14] sm:$0xf] %vm251, %v364
        %v379 = vld [vmem:[#allocation2] sm:$0xff]
        %v380 = vld [vmem:[#allocation2 + $0xc] sm:$0xff]
        %vm381 = vmpackc.low %vm285, %vm284
        %v382 = vsel %vm381, %v379, 0
        %v383 = vsel %vm381, %v380, 0
        %384 = vst [vmem:[#allocation3] sm:$0xff] %v382
        %385 = vst [vmem:[#allocation3 + $0x8] sm:$0xff] %v383
        %v386 = vld [vmem:[#allocation2] sm:$0xff]
        %v387 = vld [vmem:[#allocation2 + $0x8] sm:$0xf]
        %v388 = vld [vmem:[#allocation2 + $0xc] sm:$0xff]
        %v389 = vld [vmem:[#allocation2 + $0x14] sm:$0xf]
        %394 = vrot.lane.b32.xlu0 %v386, 127
        %v395 = vpop.permute.xlu0 %394
        %396 = vrot.lane.b32.xlu0 %v387, 127
        %v397 = vpop.permute.xlu0 %396
        %398 = vrot.lane.b32.xlu0 %v388, 127
        %v399 = vpop.permute.xlu0 %398
        %400 = vrot.lane.b32.xlu0 %v389, 127
        %v401 = vpop.permute.xlu0 %400
        %v402 = vrot.slane %v395, 4
        %v403 = vrot.slane %v397, 4
        %v404 = vrot.slane %v399, 4
        %v405 = vrot.slane %v401, 4
        %vm406 = vcmask 1043456
        %v407 = vsel %vm406, %v402, %v403
        %vm408 = vcmask 1039360
        %v409 = vsel %vm408, %v395, %v407
        %v410 = vsel %vm406, %v404, %v405
        %v411 = vsel %vm408, %v399, %v410
        %414 = vst [vmem:[#allocation3 + $0x10] sm:$0xff] %v409
        %415 = vst [vmem:[#allocation3 + $0x18] sm:$0xff] %v411
        %v416 = vld [vmem:[#allocation2] sm:$0xff]
        %v417 = vld [vmem:[#allocation2 + $0x8] sm:$0xf]
        %v418 = vld [vmem:[#allocation2 + $0xc] sm:$0xff]
        %v419 = vld [vmem:[#allocation2 + $0x14] sm:$0xf]
        %vm420 = vmpackc.low %vm287, %vm286
        %v421 = vsel %vm420, 65537, 0
        %422 = vrot.lane.b32.xlu0 %v421, 2
        %v423 = vpop.permute.xlu0 %422
        %v424 = vrot.slane %v423, 4
        %vm425 = vcmask 15360
        %v426 = vsel %vm425, %v424, %v423
        %v427 = vunpack.c.l.b16 %v426
        %v428 = vunpack.c.h.b16 %v426
        %v429 = vunpack.c.l.b16 0
        %v430 = vunpack.c.h.b16 0
        %vm431 = vcmp.ne.s32.totalorder %v427, %v429
        %vm432 = vcmp.ne.s32.totalorder %v428, %v430
        %vm433 = vmpackc.low %vm432, %vm431
        %v434 = vunpack.c.l.b16 %v424
        %v435 = vunpack.c.h.b16 %v424
        %v436 = vunpack.c.l.b16 0
        %v437 = vunpack.c.h.b16 0
        %vm438 = vcmp.ne.s32.totalorder %v434, %v436
        %vm439 = vcmp.ne.s32.totalorder %v435, %v437
        %vm440 = vmpackc.low %vm439, %vm438
        %v441 = vsel %vm433, %v416, 0
        %v442 = vsel %vm440, %v417, 0
        %v443 = vsel %vm433, %v418, 0
        %v444 = vsel %vm440, %v419, 0
        %449 = vrot.lane.b32.xlu0 %v441, 126
        %v450 = vpop.permute.xlu0 %449
        %451 = vrot.lane.b32.xlu0 %v442, 126
        %v452 = vpop.permute.xlu0 %451
        %453 = vrot.lane.b32.xlu0 %v443, 126
        %v454 = vpop.permute.xlu0 %453
        %455 = vrot.lane.b32.xlu0 %v444, 126
        %v456 = vpop.permute.xlu0 %455
        %v457 = vrot.slane %v450, 4
        %v458 = vrot.slane %v452, 4
        %v459 = vrot.slane %v454, 4
        %v460 = vrot.slane %v456, 4
        %v461 = vsel %vm406, %v457, %v458
        %vm462 = vcmask 1031168
        %v463 = vsel %vm462, %v450, %v461
        %v464 = vsel %vm406, %v459, %v460
        %v465 = vsel %vm462, %v454, %v464
        %468 = vst [vmem:[#allocation3 + $0x20] sm:$0xff] %v463
        %469 = vst [vmem:[#allocation3 + $0x28] sm:$0xff] %v465
        %v470 = vld [vmem:[#allocation2] sm:$0xff]
        %v471 = vld [vmem:[#allocation2 + $0x8] sm:$0xf]
        %v472 = vld [vmem:[#allocation2 + $0xc] sm:$0xff]
        %v473 = vld [vmem:[#allocation2 + $0x14] sm:$0xf]
        %v474 = vsel %vm381, 65537, 0
        %475 = vrot.lane.b32.xlu0 %v474, 16
        %v476 = vpop.permute.xlu0 %475
        %v477 = vrot.slane %v476, 4
        %vm478 = vcmask 130048
        %v479 = vsel %vm478, %v477, %v476
        %v480 = vunpack.c.l.b16 %v479
        %v481 = vunpack.c.h.b16 %v479
        %v482 = vunpack.c.l.b16 0
        %v483 = vunpack.c.h.b16 0
        %vm484 = vcmp.ne.s32.totalorder %v480, %v482
        %vm485 = vcmp.ne.s32.totalorder %v481, %v483
        %vm486 = vmpackc.low %vm485, %vm484
        %v487 = vunpack.c.l.b16 %v477
        %v488 = vunpack.c.h.b16 %v477
        %v489 = vunpack.c.l.b16 0
        %v490 = vunpack.c.h.b16 0
        %vm491 = vcmp.ne.s32.totalorder %v487, %v489
        %vm492 = vcmp.ne.s32.totalorder %v488, %v490
        %vm493 = vmpackc.low %vm492, %vm491
        %v494 = vsel %vm486, %v470, 0
        %v495 = vsel %vm493, %v471, 0
        %v496 = vsel %vm486, %v472, 0
        %v497 = vsel %vm493, %v473, 0
        %502 = vrot.lane.b32.xlu0 %v494, 112
        %v503 = vpop.permute.xlu0 %502
        %504 = vrot.lane.b32.xlu0 %v495, 112
        %v505 = vpop.permute.xlu0 %504
        %506 = vrot.lane.b32.xlu0 %v496, 112
        %v507 = vpop.permute.xlu0 %506
        %508 = vrot.lane.b32.xlu0 %v497, 112
        %v509 = vpop.permute.xlu0 %508
        %v510 = vrot.slane %v503, 4
        %v511 = vrot.slane %v505, 4
        %v512 = vrot.slane %v507, 4
        %v513 = vrot.slane %v509, 4
        %v514 = vsel %vm406, %v510, %v511
        %vm515 = vcmask 916480
        %v516 = vsel %vm515, %v503, %v514
        %v517 = vsel %vm406, %v512, %v513
        %v518 = vsel %vm515, %v507, %v517
        %521 = vst [vmem:[#allocation3 + $0x30] sm:$0xff] %v516
        %522 = vst [vmem:[#allocation3 + $0x38] sm:$0xff] %v518
        %v523 = vld [vmem:[#allocation2] sm:$0xff]
        %v524 = vld [vmem:[#allocation2 + $0x8] sm:$0xf]
        %v525 = vld [vmem:[#allocation2 + $0xc] sm:$0xff]
        %v526 = vld [vmem:[#allocation2 + $0x14] sm:$0xf]
        %531 = vrot.lane.b32.xlu0 %v523, 111
        %v532 = vpop.permute.xlu0 %531
        %533 = vrot.lane.b32.xlu0 %v524, 111
        %v534 = vpop.permute.xlu0 %533
        %535 = vrot.lane.b32.xlu0 %v525, 111
        %v536 = vpop.permute.xlu0 %535
        %537 = vrot.lane.b32.xlu0 %v526, 111
        %v538 = vpop.permute.xlu0 %537
        %v539 = vrot.slane %v532, 4
        %v540 = vrot.slane %v534, 4
        %v541 = vrot.slane %v536, 4
        %v542 = vrot.slane %v538, 4
        %v543 = vsel %vm406, %v539, %v540
        %vm544 = vcmask 908288
        %v545 = vsel %vm544, %v532, %v543
        %v546 = vsel %vm406, %v541, %v542
        %v547 = vsel %vm544, %v536, %v546
        %550 = vst [vmem:[#allocation3 + $0x40] sm:$0xff] %v545
        %551 = vst [vmem:[#allocation3 + $0x48] sm:$0xff] %v547
        %v552 = vld [vmem:[#allocation2] sm:$0xff]
        %v553 = vld [vmem:[#allocation2 + $0x8] sm:$0xf]
        %v554 = vld [vmem:[#allocation2 + $0xc] sm:$0xff]
        %v555 = vld [vmem:[#allocation2 + $0x14] sm:$0xf]
        %556 = vrot.lane.b32.xlu0 %v421, 18
        %v557 = vpop.permute.xlu0 %556
        %v558 = vrot.slane %v557, 4
        %vm559 = vcmask 146432
        %v560 = vsel %vm559, %v558, %v557
        %v561 = vunpack.c.l.b16 %v560
        %v562 = vunpack.c.h.b16 %v560
        %v563 = vunpack.c.l.b16 0
        %v564 = vunpack.c.h.b16 0
        %vm565 = vcmp.ne.s32.totalorder %v561, %v563
        %vm566 = vcmp.ne.s32.totalorder %v562, %v564
        %vm567 = vmpackc.low %vm566, %vm565
        %v568 = vunpack.c.l.b16 %v558
        %v569 = vunpack.c.h.b16 %v558
        %v570 = vunpack.c.l.b16 0
        %v571 = vunpack.c.h.b16 0
        %vm572 = vcmp.ne.s32.totalorder %v568, %v570
        %vm573 = vcmp.ne.s32.totalorder %v569, %v571
        %vm574 = vmpackc.low %vm573, %vm572
        %v575 = vsel %vm567, %v552, 0
        %v576 = vsel %vm574, %v553, 0
        %v577 = vsel %vm567, %v554, 0
        %v578 = vsel %vm574, %v555, 0
        %583 = vrot.lane.b32.xlu0 %v575, 110
        %v584 = vpop.permute.xlu0 %583
        %585 = vrot.lane.b32.xlu0 %v576, 110
        %v586 = vpop.permute.xlu0 %585
        %587 = vrot.lane.b32.xlu0 %v577, 110
        %v588 = vpop.permute.xlu0 %587
        %589 = vrot.lane.b32.xlu0 %v578, 110
        %v590 = vpop.permute.xlu0 %589
        %v591 = vrot.slane %v584, 4
        %v592 = vrot.slane %v586, 4
        %v593 = vrot.slane %v588, 4
        %v594 = vrot.slane %v590, 4
        %v595 = vsel %vm406, %v591, %v592
        %vm596 = vcmask 900096
        %v597 = vsel %vm596, %v584, %v595
        %v598 = vsel %vm406, %v593, %v594
        %v599 = vsel %vm596, %v588, %v598
        %602 = vst [vmem:[#allocation3 + $0x50] sm:$0xff] %v597
        %603 = vst [vmem:[#allocation3 + $0x58] sm:$0xff] %v599
        %v604 = vld [vmem:[#allocation2] sm:$0xff]
        %v605 = vld [vmem:[#allocation2 + $0x8] sm:$0xf]
        %v606 = vld [vmem:[#allocation2 + $0xc] sm:$0xff]
        %v607 = vld [vmem:[#allocation2 + $0x14] sm:$0xf]
        %608 = vrot.lane.b32.xlu0 %v474, 32
        %v609 = vpop.permute.xlu0 %608
        %v610 = vrot.slane %v609, 4
        %vm611 = vcmask 261120
        %v612 = vsel %vm611, %v610, %v609
        %v613 = vunpack.c.l.b16 %v612
        %v614 = vunpack.c.h.b16 %v612
        %v615 = vunpack.c.l.b16 0
        %v616 = vunpack.c.h.b16 0
        %vm617 = vcmp.ne.s32.totalorder %v613, %v615
        %vm618 = vcmp.ne.s32.totalorder %v614, %v616
        %vm619 = vmpackc.low %vm618, %vm617
        %v620 = vunpack.c.l.b16 %v610
        %v621 = vunpack.c.h.b16 %v610
        %v622 = vunpack.c.l.b16 0
        %v623 = vunpack.c.h.b16 0
        %vm624 = vcmp.ne.s32.totalorder %v620, %v622
        %vm625 = vcmp.ne.s32.totalorder %v621, %v623
        %vm626 = vmpackc.low %vm625, %vm624
        %v627 = vsel %vm619, %v604, 0
        %v628 = vsel %vm626, %v605, 0
        %v629 = vsel %vm619, %v606, 0
        %v630 = vsel %vm626, %v607, 0
        %635 = vrot.lane.b32.xlu0 %v627, 96
        %v636 = vpop.permute.xlu0 %635
        %637 = vrot.lane.b32.xlu0 %v628, 96
        %v638 = vpop.permute.xlu0 %637
        %639 = vrot.lane.b32.xlu0 %v629, 96
        %v640 = vpop.permute.xlu0 %639
        %641 = vrot.lane.b32.xlu0 %v630, 96
        %v642 = vpop.permute.xlu0 %641
        %v643 = vrot.slane %v636, 4
        %v644 = vrot.slane %v638, 4
        %v645 = vrot.slane %v640, 4
        %v646 = vrot.slane %v642, 4
        %v647 = vsel %vm406, %v643, %v644
        %vm648 = vcmask 785408
        %v649 = vsel %vm648, %v636, %v647
        %v650 = vsel %vm406, %v645, %v646
        %v651 = vsel %vm648, %v640, %v650
        %654 = vst [vmem:[#allocation3 + $0x60] sm:$0xff] %v649
        %655 = vst [vmem:[#allocation3 + $0x68] sm:$0xff] %v651
        %v656 = vld [vmem:[#allocation2] sm:$0xff]
        %v657 = vld [vmem:[#allocation2 + $0x8] sm:$0xf]
        %v658 = vld [vmem:[#allocation2 + $0xc] sm:$0xff]
        %v659 = vld [vmem:[#allocation2 + $0x14] sm:$0xf]
        %664 = vrot.lane.b32.xlu0 %v656, 95
        %v665 = vpop.permute.xlu0 %664
        %666 = vrot.lane.b32.xlu0 %v657, 95
        %v667 = vpop.permute.xlu0 %666
        %668 = vrot.lane.b32.xlu0 %v658, 95
        %v669 = vpop.permute.xlu0 %668
        %670 = vrot.lane.b32.xlu0 %v659, 95
        %v671 = vpop.permute.xlu0 %670
        %v672 = vrot.slane %v665, 4
        %v673 = vrot.slane %v667, 4
        %v674 = vrot.slane %v669, 4
        %v675 = vrot.slane %v671, 4
        %v676 = vsel %vm406, %v672, %v673
        %vm677 = vcmask 777216
        %v678 = vsel %vm677, %v665, %v676
        %v679 = vsel %vm406, %v674, %v675
        %v680 = vsel %vm677, %v669, %v679
        %683 = vst [vmem:[#allocation3 + $0x70] sm:$0xff] %v678
        %684 = vst [vmem:[#allocation3 + $0x78] sm:$0xff] %v680
        %v685 = vld [vmem:[#allocation2] sm:$0xff]
        %v686 = vld [vmem:[#allocation2 + $0x8] sm:$0xf]
        %v687 = vld [vmem:[#allocation2 + $0xc] sm:$0xff]
        %v688 = vld [vmem:[#allocation2 + $0x14] sm:$0xf]
        %689 = vrot.lane.b32.xlu0 %v421, 34
        %v690 = vpop.permute.xlu0 %689
        %v691 = vrot.slane %v690, 4
        %vm692 = vcmask 277504
        %v693 = vsel %vm692, %v691, %v690
        %v694 = vunpack.c.l.b16 %v693
        %v695 = vunpack.c.h.b16 %v693
        %v696 = vunpack.c.l.b16 0
        %v697 = vunpack.c.h.b16 0
        %vm698 = vcmp.ne.s32.totalorder %v694, %v696
        %vm699 = vcmp.ne.s32.totalorder %v695, %v697
        %vm700 = vmpackc.low %vm699, %vm698
        %v701 = vunpack.c.l.b16 %v691
        %v702 = vunpack.c.h.b16 %v691
        %v703 = vunpack.c.l.b16 0
        %v704 = vunpack.c.h.b16 0
        %vm705 = vcmp.ne.s32.totalorder %v701, %v703
        %vm706 = vcmp.ne.s32.totalorder %v702, %v704
        %vm707 = vmpackc.low %vm706, %vm705
        %v708 = vsel %vm700, %v685, 0
        %v709 = vsel %vm707, %v686, 0
        %v710 = vsel %vm700, %v687, 0
        %v711 = vsel %vm707, %v688, 0
        %716 = vrot.lane.b32.xlu0 %v708, 94
        %v717 = vpop.permute.xlu0 %716
        %718 = vrot.lane.b32.xlu0 %v709, 94
        %v719 = vpop.permute.xlu0 %718
        %720 = vrot.lane.b32.xlu0 %v710, 94
        %v721 = vpop.permute.xlu0 %720
        %722 = vrot.lane.b32.xlu0 %v711, 94
        %v723 = vpop.permute.xlu0 %722
        %v724 = vrot.slane %v717, 4
        %v725 = vrot.slane %v719, 4
        %v726 = vrot.slane %v721, 4
        %v727 = vrot.slane %v723, 4
        %v728 = vsel %vm406, %v724, %v725
        %vm729 = vcmask 769024
        %v730 = vsel %vm729, %v717, %v728
        %v731 = vsel %vm406, %v726, %v727
        %v732 = vsel %vm729, %v721, %v731
        %735 = vst [vmem:[#allocation3 + $0x80] sm:$0xff] %v730
        %736 = vst [vmem:[#allocation3 + $0x88] sm:$0xff] %v732
        %v737 = vld [vmem:[%s3] sm:$0xff]
        %v738 = vld [vmem:[%s3 + $0x8] sm:$0xff]
        %v739 = vld [vmem:[#allocation3] sm:$0xff]
        %v740 = vld [vmem:[#allocation3 + $0x8] sm:$0xff]
        %v741 = vld [vmem:[#allocation3 + $0x10] sm:$0xff]
        %v742 = vld [vmem:[#allocation3 + $0x18] sm:$0xff]
        %v743 = vld [vmem:[#allocation3 + $0x20] sm:$0xff]
        %v744 = vld [vmem:[#allocation3 + $0x28] sm:$0xff]
        %v745 = vld [vmem:[#allocation3 + $0x30] sm:$0xff]
        %v746 = vld [vmem:[#allocation3 + $0x38] sm:$0xff]
        %v747 = vld [vmem:[#allocation3 + $0x40] sm:$0xff]
        %v748 = vld [vmem:[#allocation3 + $0x48] sm:$0xff]
        %v749 = vld [vmem:[#allocation3 + $0x50] sm:$0xff]
        %v750 = vld [vmem:[#allocation3 + $0x58] sm:$0xff]
        %v751 = vld [vmem:[#allocation3 + $0x60] sm:$0xff]
        %v752 = vld [vmem:[#allocation3 + $0x68] sm:$0xff]
        %v753 = vld [vmem:[#allocation3 + $0x70] sm:$0xff]
        %v754 = vld [vmem:[#allocation3 + $0x78] sm:$0xff]
        %v755 = vld [vmem:[#allocation3 + $0x80] sm:$0xff]
        %v756 = vld [vmem:[#allocation3 + $0x88] sm:$0xff]
        %v757 = vld [vmem:[%s218] sm:$0xff]
        %v758 = vld [vmem:[%s218 + $0x8] sm:$0xff]
        %v759 = vunpack.c.l.bf16 %v757
        %v760 = vunpack.c.h.bf16 %v757
        %v761 = vunpack.c.l.bf16 %v758
        %v762 = vunpack.c.h.bf16 %v758
        %v763 = vld [vmem:[%s4] sm:$0xff]
        %v764 = vld [vmem:[%s4 + $0x8] sm:$0xff]
        %766 = vset.pattern.permute.xlu0 0
        %767 = vperm.xlu0 %766, %v763
        %v768 = vpop.permute.xlu0 %767
        %771 = vset.pattern.permute.xlu0 0
        %772 = vperm.xlu0 %771, %v764
        %v773 = vpop.permute.xlu0 %772
        %v777 = vunpack.c.l.b16 %v737
        %v778 = vunpack.c.h.b16 %v737
        %v779 = vunpack.c.l.b16 %v738
        %v780 = vunpack.c.h.b16 %v738
        %v781 = vpack.c.b16 %v779, %v777
        %v782 = vpack.c.b16 %v780, %v778
        %v802 = vunpack.c.l.b16 %v739
        %v803 = vunpack.c.h.b16 %v739
        %v804 = vunpack.c.l.b16 %v740
        %v805 = vunpack.c.h.b16 %v740
        %v806 = vunpack.c.l.b16 %v741
        %v807 = vunpack.c.h.b16 %v741
        %v808 = vunpack.c.l.b16 %v742
        %v809 = vunpack.c.h.b16 %v742
        %v810 = vunpack.c.l.b16 %v743
        %v811 = vunpack.c.h.b16 %v743
        %v812 = vunpack.c.l.b16 %v744
        %v813 = vunpack.c.h.b16 %v744
        %v814 = vunpack.c.l.b16 %v745
        %v815 = vunpack.c.h.b16 %v745
        %v816 = vunpack.c.l.b16 %v746
        %v817 = vunpack.c.h.b16 %v746
        %v818 = vunpack.c.l.b16 %v747
        %v819 = vunpack.c.h.b16 %v747
        %v820 = vunpack.c.l.b16 %v748
        %v821 = vunpack.c.h.b16 %v748
        %v822 = vunpack.c.l.b16 %v749
        %v823 = vunpack.c.h.b16 %v749
        %v824 = vunpack.c.l.b16 %v750
        %v825 = vunpack.c.h.b16 %v750
        %v826 = vunpack.c.l.b16 %v751
        %v827 = vunpack.c.h.b16 %v751
        %v828 = vunpack.c.l.b16 %v752
        %v829 = vunpack.c.h.b16 %v752
        %v830 = vunpack.c.l.b16 %v753
        %v831 = vunpack.c.h.b16 %v753
        %v832 = vunpack.c.l.b16 %v754
        %v833 = vunpack.c.h.b16 %v754
        %v834 = vunpack.c.l.b16 %v755
        %v835 = vunpack.c.h.b16 %v755
        %v836 = vunpack.c.l.b16 %v756
        %v837 = vunpack.c.h.b16 %v756
        %v838 = vpack.c.b16 %v804, %v802
        %v839 = vpack.c.b16 %v805, %v803
        %v840 = vpack.c.b16 %v808, %v806
        %v841 = vpack.c.b16 %v809, %v807
        %v842 = vpack.c.b16 %v812, %v810
        %v843 = vpack.c.b16 %v813, %v811
        %v844 = vpack.c.b16 %v816, %v814
        %v845 = vpack.c.b16 %v817, %v815
        %v846 = vpack.c.b16 %v820, %v818
        %v847 = vpack.c.b16 %v821, %v819
        %v848 = vpack.c.b16 %v824, %v822
        %v849 = vpack.c.b16 %v825, %v823
        %v850 = vpack.c.b16 %v828, %v826
        %v851 = vpack.c.b16 %v829, %v827
        %v852 = vpack.c.b16 %v832, %v830
        %v853 = vpack.c.b16 %v833, %v831
        %v854 = vpack.c.b16 %v836, %v834
        %v855 = vpack.c.b16 %v837, %v835
        %v875 = vsel %vm319, %v782, 0
        %877 = vmatpush.bf16.msra.mxu0 %v852
        %878 = vmatpush.bf16.msra.mxu0 %v850
        %879 = vmatpush.bf16.msra.mxu0 %v848
        %880 = vmatpush.bf16.msra.mxu0 %v846
        %881 = vmatpush.bf16.msra.mxu0 %v844
        %882 = vmatpush.bf16.msra.mxu0 %v842
        %883 = vmatpush.bf16.msra.mxu0 %v840
        %884 = vmatpush.bf16.msra.mxu0 %v838
        %885 = vmatmul.bf16.gmra.mxu0 %v781
        %v886 = vpop.f32.mrf.mxu0
        %v887 = vadd.f32 %v768, %v886
        %v888 = vpop.f32.mrf.mxu0
        %v889 = vadd.f32 %v773, %v888
        %890 = vdwg.mxu0
        %891 = vmatpush.bf16.msra.mxu0 0
        %892 = vmatpush.bf16.msra.mxu0 0
        %893 = vmatpush.bf16.msra.mxu0 0
        %894 = vmatpush.bf16.msra.mxu0 0
        %895 = vmatpush.bf16.msra.mxu0 0
        %896 = vmatpush.bf16.msra.mxu0 0
        %897 = vmatpush.bf16.msra.mxu0 0
        %898 = vmatpush.bf16.msra.mxu0 %v854
        %899 = vmatmul.bf16.gmra.mxu0 %v875
        %v900 = vpop.f32.mrf.mxu0
        %v901 = vadd.f32 %v887, %v900
        %v902 = vpop.f32.mrf.mxu0
        %v903 = vadd.f32 %v889, %v902
        %904 = vdwg.mxu0
        %905 = vmatpush.bf16.msra.mxu0 %v853
        %906 = vmatpush.bf16.msra.mxu0 %v851
        %907 = vmatpush.bf16.msra.mxu0 %v849
        %908 = vmatpush.bf16.msra.mxu0 %v847
        %909 = vmatpush.bf16.msra.mxu0 %v845
        %910 = vmatpush.bf16.msra.mxu0 %v843
        %911 = vmatpush.bf16.msra.mxu0 %v841
        %912 = vmatpush.bf16.msra.mxu0 %v839
        %913 = vmatmul.bf16.gmra.mxu0 %v781
        %v914 = vpop.f32.mrf.mxu0
        %v915 = vadd.f32 %v768, %v914
        %v916 = vpop.f32.mrf.mxu0
        %v917 = vadd.f32 %v773, %v916
        %918 = vdwg.mxu0
        %919 = vmatpush.bf16.msra.mxu0 0
        %920 = vmatpush.bf16.msra.mxu0 0
        %921 = vmatpush.bf16.msra.mxu0 0
        %922 = vmatpush.bf16.msra.mxu0 0
        %923 = vmatpush.bf16.msra.mxu0 0
        %924 = vmatpush.bf16.msra.mxu0 0
        %925 = vmatpush.bf16.msra.mxu0 0
        %926 = vmatpush.bf16.msra.mxu0 %v855
        %927 = vmatmul.bf16.gmra.mxu0 %v875
        %v928 = vpop.f32.mrf.mxu0
        %v929 = vadd.f32 %v915, %v928
        %v930 = vpop.f32.mrf.mxu0
        %v931 = vadd.f32 %v917, %v930
        %932 = vdwg.mxu0
        %v933 = vadd.f32 %v901, %v759
        %v934 = vadd.f32 %v929, %v760
        %v935 = vadd.f32 %v903, %v761
        %v936 = vadd.f32 %v931, %v762
        %v937 = vmax.f32 %v933, 0.0
        %v938 = vmax.f32 %v934, 0.0
        %v939 = vmax.f32 %v935, 0.0
        %v940 = vmax.f32 %v936, 0.0
        %941 = vst [vmem:[%s245] sm:$0xff] %v937
        %942 = vst [vmem:[%s245 + $0x8] sm:$0xff] %v938
        %943 = vst [vmem:[%s245 + $0x10] sm:$0xff] %v939
        %944 = vst [vmem:[%s245 + $0x18] sm:$0xff] %v940
        %s945 = scalar_lea.vmem %s218, 16 [#allocation4]
        %v946 = vld [vmem:[%s945] sm:$0xff]
        %v947 = vld [vmem:[%s945 + $0x8] sm:$0xff]
        %v948 = vld [vmem:[%s1] sm:$0xf]
        %v949 = vld [vmem:[%s1 + $0x4] sm:$0xf]
        %v950 = vld [vmem:[%s2] sm:$0xff]
        %v951 = vld [vmem:[%s2 + $0x8] sm:$0xff]
        %953 = vset.pattern.permute.xlu0 0
        %954 = vperm.xlu0 %953, %v950
        %v955 = vpop.permute.xlu0 %954
        %958 = vset.pattern.permute.xlu0 0
        %959 = vperm.xlu0 %958, %v951
        %v960 = vpop.permute.xlu0 %959
        %v964 = vunpack.c.l.b16 %v948
        %v965 = vunpack.c.l.b16 %v949
        %v966 = vpack.c.b16 %v965, %v964
        %v969 = vunpack.c.l.b16 %v946
        %v970 = vunpack.c.h.b16 %v946
        %v971 = vunpack.c.l.b16 %v947
        %v972 = vunpack.c.h.b16 %v947
        %v973 = vpack.c.b16 %v971, %v969
        %v974 = vpack.c.b16 %v972, %v970
        %v978 = vsel %vm319, %v966, 0
        %980 = vmatpush.bf16.msra.mxu0 0
        %981 = vmatpush.bf16.msra.mxu0 0
        %982 = vmatpush.bf16.msra.mxu0 0
        %983 = vmatpush.bf16.msra.mxu0 0
        %984 = vmatpush.bf16.msra.mxu0 0
        %985 = vmatpush.bf16.msra.mxu0 0
        %986 = vmatpush.bf16.msra.mxu0 0
        %987 = vmatpush.bf16.msra.mxu0 %v973
        %988 = vmatmul.bf16.gmra.mxu0 %v978
        %v989 = vpop.f32.mrf.mxu0
        %v990 = vadd.f32 %v955, %v989
        %v991 = vpop.f32.mrf.mxu0
        %v992 = vadd.f32 %v960, %v991
        %993 = vdwg.mxu0
        %994 = vmatpush.bf16.msra.mxu0 0
        %995 = vmatpush.bf16.msra.mxu0 0
        %996 = vmatpush.bf16.msra.mxu0 0
        %997 = vmatpush.bf16.msra.mxu0 0
        %998 = vmatpush.bf16.msra.mxu0 0
        %999 = vmatpush.bf16.msra.mxu0 0
        %1000 = vmatpush.bf16.msra.mxu0 0
        %1001 = vmatpush.bf16.msra.mxu0 %v974
        %1002 = vmatmul.bf16.gmra.mxu0 %v978
        %v1003 = vpop.f32.mrf.mxu0
        %v1004 = vadd.f32 %v955, %v1003
        %v1005 = vpop.f32.mrf.mxu0
        %v1006 = vadd.f32 %v960, %v1005
        %1007 = vdwg.mxu0
        %v1008 = vmax.f32 %v990, 0.0
        %v1009 = vmax.f32 %v1004, 0.0
        %v1010 = vmax.f32 %v992, 0.0
        %v1011 = vmax.f32 %v1006, 0.0
        %v1012 = vpack.c.bf16 %v1009, %v1008
        %v1013 = vpack.c.bf16 %v1011, %v1010
        %1016 = vrot.lane.b32.xlu0 %v1012, 17
        %v1017 = vpop.permute.xlu0 %1016
        %1018 = vrot.lane.b32.xlu0 %v1013, 17
        %v1019 = vpop.permute.xlu0 %1018
        %v1020 = vrot.slane %v1017, 4
        %v1021 = vrot.slane %v1019, 4
        %v1022 = vsel %vm365, %v1020, %v1017
        %v1023 = vsel %vm365, %v1021, %v1019
        %1028 = vst.msk [vmem:[#allocation2] sm:$0xff] %vm374, %v1022
        %1029 = vst.msk [vmem:[#allocation2 + $0x8] sm:$0xf] %vm251, %v1020
        %1030 = vst.msk [vmem:[#allocation2 + $0xc] sm:$0xff] %vm374, %v1023
        %1031 = vst.msk [vmem:[#allocation2 + $0x14] sm:$0xf] %vm251, %v1021
        %v1032 = vld [vmem:[#allocation2] sm:$0xff]
        %v1033 = vld [vmem:[#allocation2 + $0xc] sm:$0xff]
        %v1034 = vsel %vm381, %v1032, 0
        %v1035 = vsel %vm381, %v1033, 0
        %1036 = vst [vmem:[#allocation3] sm:$0xff] %v1034
        %1037 = vst [vmem:[#allocation3 + $0x8] sm:$0xff] %v1035
        %v1038 = vld [vmem:[#allocation2] sm:$0xff]
        %v1039 = vld [vmem:[#allocation2 + $0x8] sm:$0xf]
        %v1040 = vld [vmem:[#allocation2 + $0xc] sm:$0xff]
        %v1041 = vld [vmem:[#allocation2 + $0x14] sm:$0xf]
        %1046 = vrot.lane.b32.xlu0 %v1038, 127
        %v1047 = vpop.permute.xlu0 %1046
        %1048 = vrot.lane.b32.xlu0 %v1039, 127
        %v1049 = vpop.permute.xlu0 %1048
        %1050 = vrot.lane.b32.xlu0 %v1040, 127
        %v1051 = vpop.permute.xlu0 %1050
        %1052 = vrot.lane.b32.xlu0 %v1041, 127
        %v1053 = vpop.permute.xlu0 %1052
        %v1054 = vrot.slane %v1047, 4
        %v1055 = vrot.slane %v1049, 4
        %v1056 = vrot.slane %v1051, 4
        %v1057 = vrot.slane %v1053, 4
        %v1058 = vsel %vm406, %v1054, %v1055
        %v1059 = vsel %vm408, %v1047, %v1058
        %v1060 = vsel %vm406, %v1056, %v1057
        %v1061 = vsel %vm408, %v1051, %v1060
        %1064 = vst [vmem:[#allocation3 + $0x10] sm:$0xff] %v1059
        %1065 = vst [vmem:[#allocation3 + $0x18] sm:$0xff] %v1061
        %v1066 = vld [vmem:[#allocation2] sm:$0xff]
        %v1067 = vld [vmem:[#allocation2 + $0x8] sm:$0xf]
        %v1068 = vld [vmem:[#allocation2 + $0xc] sm:$0xff]
        %v1069 = vld [vmem:[#allocation2 + $0x14] sm:$0xf]
        %v1070 = vsel %vm433, %v1066, 0
        %v1071 = vsel %vm440, %v1067, 0
        %v1072 = vsel %vm433, %v1068, 0
        %v1073 = vsel %vm440, %v1069, 0
        %1078 = vrot.lane.b32.xlu0 %v1070, 126
        %v1079 = vpop.permute.xlu0 %1078
        %1080 = vrot.lane.b32.xlu0 %v1071, 126
        %v1081 = vpop.permute.xlu0 %1080
        %1082 = vrot.lane.b32.xlu0 %v1072, 126
        %v1083 = vpop.permute.xlu0 %1082
        %1084 = vrot.lane.b32.xlu0 %v1073, 126
        %v1085 = vpop.permute.xlu0 %1084
        %v1086 = vrot.slane %v1079, 4
        %v1087 = vrot.slane %v1081, 4
        %v1088 = vrot.slane %v1083, 4
        %v1089 = vrot.slane %v1085, 4
        %v1090 = vsel %vm406, %v1086, %v1087
        %v1091 = vsel %vm462, %v1079, %v1090
        %v1092 = vsel %vm406, %v1088, %v1089
        %v1093 = vsel %vm462, %v1083, %v1092
        %1096 = vst [vmem:[#allocation3 + $0x20] sm:$0xff] %v1091
        %1097 = vst [vmem:[#allocation3 + $0x28] sm:$0xff] %v1093
        %v1098 = vld [vmem:[#allocation2] sm:$0xff]
        %v1099 = vld [vmem:[#allocation2 + $0x8] sm:$0xf]
        %v1100 = vld [vmem:[#allocation2 + $0xc] sm:$0xff]
        %v1101 = vld [vmem:[#allocation2 + $0x14] sm:$0xf]
        %v1102 = vsel %vm486, %v1098, 0
        %v1103 = vsel %vm493, %v1099, 0
        %v1104 = vsel %vm486, %v1100, 0
        %v1105 = vsel %vm493, %v1101, 0
        %1110 = vrot.lane.b32.xlu0 %v1102, 112
        %v1111 = vpop.permute.xlu0 %1110
        %1112 = vrot.lane.b32.xlu0 %v1103, 112
        %v1113 = vpop.permute.xlu0 %1112
        %1114 = vrot.lane.b32.xlu0 %v1104, 112
        %v1115 = vpop.permute.xlu0 %1114
        %1116 = vrot.lane.b32.xlu0 %v1105, 112
        %v1117 = vpop.permute.xlu0 %1116
        %v1118 = vrot.slane %v1111, 4
        %v1119 = vrot.slane %v1113, 4
        %v1120 = vrot.slane %v1115, 4
        %v1121 = vrot.slane %v1117, 4
        %v1122 = vsel %vm406, %v1118, %v1119
        %v1123 = vsel %vm515, %v1111, %v1122
        %v1124 = vsel %vm406, %v1120, %v1121
        %v1125 = vsel %vm515, %v1115, %v1124
        %1128 = vst [vmem:[#allocation3 + $0x30] sm:$0xff] %v1123
        %1129 = vst [vmem:[#allocation3 + $0x38] sm:$0xff] %v1125
        %v1130 = vld [vmem:[#allocation2] sm:$0xff]
        %v1131 = vld [vmem:[#allocation2 + $0x8] sm:$0xf]
        %v1132 = vld [vmem:[#allocation2 + $0xc] sm:$0xff]
        %v1133 = vld [vmem:[#allocation2 + $0x14] sm:$0xf]
        %1138 = vrot.lane.b32.xlu0 %v1130, 111
        %v1139 = vpop.permute.xlu0 %1138
        %1140 = vrot.lane.b32.xlu0 %v1131, 111
        %v1141 = vpop.permute.xlu0 %1140
        %1142 = vrot.lane.b32.xlu0 %v1132, 111
        %v1143 = vpop.permute.xlu0 %1142
        %1144 = vrot.lane.b32.xlu0 %v1133, 111
        %v1145 = vpop.permute.xlu0 %1144
        %v1146 = vrot.slane %v1139, 4
        %v1147 = vrot.slane %v1141, 4
        %v1148 = vrot.slane %v1143, 4
        %v1149 = vrot.slane %v1145, 4
        %v1150 = vsel %vm406, %v1146, %v1147
        %v1151 = vsel %vm544, %v1139, %v1150
        %v1152 = vsel %vm406, %v1148, %v1149
        %v1153 = vsel %vm544, %v1143, %v1152
        %1156 = vst [vmem:[#allocation3 + $0x40] sm:$0xff] %v1151
        %1157 = vst [vmem:[#allocation3 + $0x48] sm:$0xff] %v1153
        %v1158 = vld [vmem:[#allocation2] sm:$0xff]
        %v1159 = vld [vmem:[#allocation2 + $0x8] sm:$0xf]
        %v1160 = vld [vmem:[#allocation2 + $0xc] sm:$0xff]
        %v1161 = vld [vmem:[#allocation2 + $0x14] sm:$0xf]
        %v1162 = vsel %vm567, %v1158, 0
        %v1163 = vsel %vm574, %v1159, 0
        %v1164 = vsel %vm567, %v1160, 0
        %v1165 = vsel %vm574, %v1161, 0
        %1170 = vrot.lane.b32.xlu0 %v1162, 110
        %v1171 = vpop.permute.xlu0 %1170
        %1172 = vrot.lane.b32.xlu0 %v1163, 110
        %v1173 = vpop.permute.xlu0 %1172
        %1174 = vrot.lane.b32.xlu0 %v1164, 110
        %v1175 = vpop.permute.xlu0 %1174
        %1176 = vrot.lane.b32.xlu0 %v1165, 110
        %v1177 = vpop.permute.xlu0 %1176
        %v1178 = vrot.slane %v1171, 4
        %v1179 = vrot.slane %v1173, 4
        %v1180 = vrot.slane %v1175, 4
        %v1181 = vrot.slane %v1177, 4
        %v1182 = vsel %vm406, %v1178, %v1179
        %v1183 = vsel %vm596, %v1171, %v1182
        %v1184 = vsel %vm406, %v1180, %v1181
        %v1185 = vsel %vm596, %v1175, %v1184
        %1188 = vst [vmem:[#allocation3 + $0x50] sm:$0xff] %v1183
        %1189 = vst [vmem:[#allocation3 + $0x58] sm:$0xff] %v1185
        %v1190 = vld [vmem:[#allocation2] sm:$0xff]
        %v1191 = vld [vmem:[#allocation2 + $0x8] sm:$0xf]
        %v1192 = vld [vmem:[#allocation2 + $0xc] sm:$0xff]
        %v1193 = vld [vmem:[#allocation2 + $0x14] sm:$0xf]
        %v1194 = vsel %vm619, %v1190, 0
        %v1195 = vsel %vm626, %v1191, 0
        %v1196 = vsel %vm619, %v1192, 0
        %v1197 = vsel %vm626, %v1193, 0
        %1202 = vrot.lane.b32.xlu0 %v1194, 96
        %v1203 = vpop.permute.xlu0 %1202
        %1204 = vrot.lane.b32.xlu0 %v1195, 96
        %v1205 = vpop.permute.xlu0 %1204
        %1206 = vrot.lane.b32.xlu0 %v1196, 96
        %v1207 = vpop.permute.xlu0 %1206
        %1208 = vrot.lane.b32.xlu0 %v1197, 96
        %v1209 = vpop.permute.xlu0 %1208
        %v1210 = vrot.slane %v1203, 4
        %v1211 = vrot.slane %v1205, 4
        %v1212 = vrot.slane %v1207, 4
        %v1213 = vrot.slane %v1209, 4
        %v1214 = vsel %vm406, %v1210, %v1211
        %v1215 = vsel %vm648, %v1203, %v1214
        %v1216 = vsel %vm406, %v1212, %v1213
        %v1217 = vsel %vm648, %v1207, %v1216
        %1220 = vst [vmem:[#allocation3 + $0x60] sm:$0xff] %v1215
        %1221 = vst [vmem:[#allocation3 + $0x68] sm:$0xff] %v1217
        %v1222 = vld [vmem:[#allocation2] sm:$0xff]
        %v1223 = vld [vmem:[#allocation2 + $0x8] sm:$0xf]
        %v1224 = vld [vmem:[#allocation2 + $0xc] sm:$0xff]
        %v1225 = vld [vmem:[#allocation2 + $0x14] sm:$0xf]
        %1230 = vrot.lane.b32.xlu0 %v1222, 95
        %v1231 = vpop.permute.xlu0 %1230
        %1232 = vrot.lane.b32.xlu0 %v1223, 95
        %v1233 = vpop.permute.xlu0 %1232
        %1234 = vrot.lane.b32.xlu0 %v1224, 95
        %v1235 = vpop.permute.xlu0 %1234
        %1236 = vrot.lane.b32.xlu0 %v1225, 95
        %v1237 = vpop.permute.xlu0 %1236
        %v1238 = vrot.slane %v1231, 4
        %v1239 = vrot.slane %v1233, 4
        %v1240 = vrot.slane %v1235, 4
        %v1241 = vrot.slane %v1237, 4
        %v1242 = vsel %vm406, %v1238, %v1239
        %v1243 = vsel %vm677, %v1231, %v1242
        %v1244 = vsel %vm406, %v1240, %v1241
        %v1245 = vsel %vm677, %v1235, %v1244
        %1248 = vst [vmem:[#allocation3 + $0x70] sm:$0xff] %v1243
        %1249 = vst [vmem:[#allocation3 + $0x78] sm:$0xff] %v1245
        %v1250 = vld [vmem:[#allocation2] sm:$0xff]
        %v1251 = vld [vmem:[#allocation2 + $0x8] sm:$0xf]
        %v1252 = vld [vmem:[#allocation2 + $0xc] sm:$0xff]
        %v1253 = vld [vmem:[#allocation2 + $0x14] sm:$0xf]
        %v1254 = vsel %vm700, %v1250, 0
        %v1255 = vsel %vm707, %v1251, 0
        %v1256 = vsel %vm700, %v1252, 0
        %v1257 = vsel %vm707, %v1253, 0
        %1262 = vrot.lane.b32.xlu0 %v1254, 94
        %v1263 = vpop.permute.xlu0 %1262
        %1264 = vrot.lane.b32.xlu0 %v1255, 94
        %v1265 = vpop.permute.xlu0 %1264
        %1266 = vrot.lane.b32.xlu0 %v1256, 94
        %v1267 = vpop.permute.xlu0 %1266
        %1268 = vrot.lane.b32.xlu0 %v1257, 94
        %v1269 = vpop.permute.xlu0 %1268
        %v1270 = vrot.slane %v1263, 4
        %v1271 = vrot.slane %v1265, 4
        %v1272 = vrot.slane %v1267, 4
        %v1273 = vrot.slane %v1269, 4
        %v1274 = vsel %vm406, %v1270, %v1271
        %v1275 = vsel %vm729, %v1263, %v1274
        %v1276 = vsel %vm406, %v1272, %v1273
        %v1277 = vsel %vm729, %v1267, %v1276
        %1280 = vst [vmem:[#allocation3 + $0x80] sm:$0xff] %v1275
        %1281 = vst [vmem:[#allocation3 + $0x88] sm:$0xff] %v1277
        %v1282 = vld [vmem:[%s3] sm:$0xff]
        %v1283 = vld [vmem:[%s3 + $0x8] sm:$0xff]
        %v1284 = vld [vmem:[#allocation3] sm:$0xff]
        %v1285 = vld [vmem:[#allocation3 + $0x8] sm:$0xff]
        %v1286 = vld [vmem:[#allocation3 + $0x10] sm:$0xff]
        %v1287 = vld [vmem:[#allocation3 + $0x18] sm:$0xff]
        %v1288 = vld [vmem:[#allocation3 + $0x20] sm:$0xff]
        %v1289 = vld [vmem:[#allocation3 + $0x28] sm:$0xff]
        %v1290 = vld [vmem:[#allocation3 + $0x30] sm:$0xff]
        %v1291 = vld [vmem:[#allocation3 + $0x38] sm:$0xff]
        %v1292 = vld [vmem:[#allocation3 + $0x40] sm:$0xff]
        %v1293 = vld [vmem:[#allocation3 + $0x48] sm:$0xff]
        %v1294 = vld [vmem:[#allocation3 + $0x50] sm:$0xff]
        %v1295 = vld [vmem:[#allocation3 + $0x58] sm:$0xff]
        %v1296 = vld [vmem:[#allocation3 + $0x60] sm:$0xff]
        %v1297 = vld [vmem:[#allocation3 + $0x68] sm:$0xff]
        %v1298 = vld [vmem:[#allocation3 + $0x70] sm:$0xff]
        %v1299 = vld [vmem:[#allocation3 + $0x78] sm:$0xff]
        %v1300 = vld [vmem:[#allocation3 + $0x80] sm:$0xff]
        %v1301 = vld [vmem:[#allocation3 + $0x88] sm:$0xff]
        %v1302 = vld [vmem:[%s945] sm:$0xff]
        %v1303 = vld [vmem:[%s945 + $0x8] sm:$0xff]
        %v1304 = vunpack.c.l.bf16 %v1302
        %v1305 = vunpack.c.h.bf16 %v1302
        %v1306 = vunpack.c.l.bf16 %v1303
        %v1307 = vunpack.c.h.bf16 %v1303
        %v1308 = vld [vmem:[%s4] sm:$0xff]
        %v1309 = vld [vmem:[%s4 + $0x8] sm:$0xff]
        %1311 = vset.pattern.permute.xlu0 0
        %1312 = vperm.xlu0 %1311, %v1308
        %v1313 = vpop.permute.xlu0 %1312
        %1316 = vset.pattern.permute.xlu0 0
        %1317 = vperm.xlu0 %1316, %v1309
        %v1318 = vpop.permute.xlu0 %1317
        %v1322 = vunpack.c.l.b16 %v1282
        %v1323 = vunpack.c.h.b16 %v1282
        %v1324 = vunpack.c.l.b16 %v1283
        %v1325 = vunpack.c.h.b16 %v1283
        %v1326 = vpack.c.b16 %v1324, %v1322
        %v1327 = vpack.c.b16 %v1325, %v1323
        %v1347 = vunpack.c.l.b16 %v1284
        %v1348 = vunpack.c.h.b16 %v1284
        %v1349 = vunpack.c.l.b16 %v1285
        %v1350 = vunpack.c.h.b16 %v1285
        %v1351 = vunpack.c.l.b16 %v1286
        %v1352 = vunpack.c.h.b16 %v1286
        %v1353 = vunpack.c.l.b16 %v1287
        %v1354 = vunpack.c.h.b16 %v1287
        %v1355 = vunpack.c.l.b16 %v1288
        %v1356 = vunpack.c.h.b16 %v1288
        %v1357 = vunpack.c.l.b16 %v1289
        %v1358 = vunpack.c.h.b16 %v1289
        %v1359 = vunpack.c.l.b16 %v1290
        %v1360 = vunpack.c.h.b16 %v1290
        %v1361 = vunpack.c.l.b16 %v1291
        %v1362 = vunpack.c.h.b16 %v1291
        %v1363 = vunpack.c.l.b16 %v1292
        %v1364 = vunpack.c.h.b16 %v1292
        %v1365 = vunpack.c.l.b16 %v1293
        %v1366 = vunpack.c.h.b16 %v1293
        %v1367 = vunpack.c.l.b16 %v1294
        %v1368 = vunpack.c.h.b16 %v1294
        %v1369 = vunpack.c.l.b16 %v1295
        %v1370 = vunpack.c.h.b16 %v1295
        %v1371 = vunpack.c.l.b16 %v1296
        %v1372 = vunpack.c.h.b16 %v1296
        %v1373 = vunpack.c.l.b16 %v1297
        %v1374 = vunpack.c.h.b16 %v1297
        %v1375 = vunpack.c.l.b16 %v1298
        %v1376 = vunpack.c.h.b16 %v1298
        %v1377 = vunpack.c.l.b16 %v1299
        %v1378 = vunpack.c.h.b16 %v1299
        %v1379 = vunpack.c.l.b16 %v1300
        %v1380 = vunpack.c.h.b16 %v1300
        %v1381 = vunpack.c.l.b16 %v1301
        %v1382 = vunpack.c.h.b16 %v1301
        %v1383 = vpack.c.b16 %v1349, %v1347
        %v1384 = vpack.c.b16 %v1350, %v1348
        %v1385 = vpack.c.b16 %v1353, %v1351
        %v1386 = vpack.c.b16 %v1354, %v1352
        %v1387 = vpack.c.b16 %v1357, %v1355
        %v1388 = vpack.c.b16 %v1358, %v1356
        %v1389 = vpack.c.b16 %v1361, %v1359
        %v1390 = vpack.c.b16 %v1362, %v1360
        %v1391 = vpack.c.b16 %v1365, %v1363
        %v1392 = vpack.c.b16 %v1366, %v1364
        %v1393 = vpack.c.b16 %v1369, %v1367
        %v1394 = vpack.c.b16 %v1370, %v1368
        %v1395 = vpack.c.b16 %v1373, %v1371
        %v1396 = vpack.c.b16 %v1374, %v1372
        %v1397 = vpack.c.b16 %v1377, %v1375
        %v1398 = vpack.c.b16 %v1378, %v1376
        %v1399 = vpack.c.b16 %v1381, %v1379
        %v1400 = vpack.c.b16 %v1382, %v1380
        %v1420 = vsel %vm319, %v1327, 0
        %1422 = vmatpush.bf16.msra.mxu0 %v1397
        %1423 = vmatpush.bf16.msra.mxu0 %v1395
        %1424 = vmatpush.bf16.msra.mxu0 %v1393
        %1425 = vmatpush.bf16.msra.mxu0 %v1391
        %1426 = vmatpush.bf16.msra.mxu0 %v1389
        %1427 = vmatpush.bf16.msra.mxu0 %v1387
        %1428 = vmatpush.bf16.msra.mxu0 %v1385
        %1429 = vmatpush.bf16.msra.mxu0 %v1383
        %1430 = vmatmul.bf16.gmra.mxu0 %v1326
        %v1431 = vpop.f32.mrf.mxu0
        %v1432 = vadd.f32 %v1313, %v1431
        %v1433 = vpop.f32.mrf.mxu0
        %v1434 = vadd.f32 %v1318, %v1433
        %1435 = vdwg.mxu0
        %1436 = vmatpush.bf16.msra.mxu0 0
        %1437 = vmatpush.bf16.msra.mxu0 0
        %1438 = vmatpush.bf16.msra.mxu0 0
        %1439 = vmatpush.bf16.msra.mxu0 0
        %1440 = vmatpush.bf16.msra.mxu0 0
        %1441 = vmatpush.bf16.msra.mxu0 0
        %1442 = vmatpush.bf16.msra.mxu0 0
        %1443 = vmatpush.bf16.msra.mxu0 %v1399
        %1444 = vmatmul.bf16.gmra.mxu0 %v1420
        %v1445 = vpop.f32.mrf.mxu0
        %v1446 = vadd.f32 %v1432, %v1445
        %v1447 = vpop.f32.mrf.mxu0
        %v1448 = vadd.f32 %v1434, %v1447
        %1449 = vdwg.mxu0
        %1450 = vmatpush.bf16.msra.mxu0 %v1398
        %1451 = vmatpush.bf16.msra.mxu0 %v1396
        %1452 = vmatpush.bf16.msra.mxu0 %v1394
        %1453 = vmatpush.bf16.msra.mxu0 %v1392
        %1454 = vmatpush.bf16.msra.mxu0 %v1390
        %1455 = vmatpush.bf16.msra.mxu0 %v1388
        %1456 = vmatpush.bf16.msra.mxu0 %v1386
        %1457 = vmatpush.bf16.msra.mxu0 %v1384
        %1458 = vmatmul.bf16.gmra.mxu0 %v1326
        %v1459 = vpop.f32.mrf.mxu0
        %v1460 = vadd.f32 %v1313, %v1459
        %v1461 = vpop.f32.mrf.mxu0
        %v1462 = vadd.f32 %v1318, %v1461
        %1463 = vdwg.mxu0
        %1464 = vmatpush.bf16.msra.mxu0 0
        %1465 = vmatpush.bf16.msra.mxu0 0
        %1466 = vmatpush.bf16.msra.mxu0 0
        %1467 = vmatpush.bf16.msra.mxu0 0
        %1468 = vmatpush.bf16.msra.mxu0 0
        %1469 = vmatpush.bf16.msra.mxu0 0
        %1470 = vmatpush.bf16.msra.mxu0 0
        %1471 = vmatpush.bf16.msra.mxu0 %v1400
        %1472 = vmatmul.bf16.gmra.mxu0 %v1420
        %v1473 = vpop.f32.mrf.mxu0
        %v1474 = vadd.f32 %v1460, %v1473
        %v1475 = vpop.f32.mrf.mxu0
        %v1476 = vadd.f32 %v1462, %v1475
        %1477 = vdwg.mxu0
        %v1478 = vadd.f32 %v1446, %v1304
        %v1479 = vadd.f32 %v1474, %v1305
        %v1480 = vadd.f32 %v1448, %v1306
        %v1481 = vadd.f32 %v1476, %v1307
        %v1482 = vmax.f32 %v1478, 0.0
        %v1483 = vmax.f32 %v1479, 0.0
        %v1484 = vmax.f32 %v1480, 0.0
        %v1485 = vmax.f32 %v1481, 0.0
        %s1486 = scalar_lea.vmem %s245, 32 [#allocation7]
        %1487 = vst [vmem:[%s1486] sm:$0xff] %v1482
        %1488 = vst [vmem:[%s1486 + $0x8] sm:$0xff] %v1483
        %1489 = vst [vmem:[%s1486 + $0x10] sm:$0xff] %v1484
        %1490 = vst [vmem:[%s1486 + $0x18] sm:$0xff] %v1485
        %s1491 = scalar_lea.vmem %s218, 32 [#allocation4]
        %v1492 = vld [vmem:[%s1491] sm:$0xff]
        %v1493 = vld [vmem:[%s1491 + $0x8] sm:$0xff]
        %v1494 = vld [vmem:[%s1] sm:$0xf]
        %v1495 = vld [vmem:[%s1 + $0x4] sm:$0xf]
        %v1496 = vld [vmem:[%s2] sm:$0xff]
        %v1497 = vld [vmem:[%s2 + $0x8] sm:$0xff]
        %1499 = vset.pattern.permute.xlu0 0
        %1500 = vperm.xlu0 %1499, %v1496
        %v1501 = vpop.permute.xlu0 %1500
        %1504 = vset.pattern.permute.xlu0 0
        %1505 = vperm.xlu0 %1504, %v1497
        %v1506 = vpop.permute.xlu0 %1505
        %v1510 = vunpack.c.l.b16 %v1494
        %v1511 = vunpack.c.l.b16 %v1495
        %v1512 = vpack.c.b16 %v1511, %v1510
        %v1515 = vunpack.c.l.b16 %v1492
        %v1516 = vunpack.c.h.b16 %v1492
        %v1517 = vunpack.c.l.b16 %v1493
        %v1518 = vunpack.c.h.b16 %v1493
        %v1519 = vpack.c.b16 %v1517, %v1515
        %v1520 = vpack.c.b16 %v1518, %v1516
        %v1524 = vsel %vm319, %v1512, 0
        %1526 = vmatpush.bf16.msra.mxu0 0
        %1527 = vmatpush.bf16.msra.mxu0 0
        %1528 = vmatpush.bf16.msra.mxu0 0
        %1529 = vmatpush.bf16.msra.mxu0 0
        %1530 = vmatpush.bf16.msra.mxu0 0
        %1531 = vmatpush.bf16.msra.mxu0 0
        %1532 = vmatpush.bf16.msra.mxu0 0
        %1533 = vmatpush.bf16.msra.mxu0 %v1519
        %1534 = vmatmul.bf16.gmra.mxu0 %v1524
        %v1535 = vpop.f32.mrf.mxu0
        %v1536 = vadd.f32 %v1501, %v1535
        %v1537 = vpop.f32.mrf.mxu0
        %v1538 = vadd.f32 %v1506, %v1537
        %1539 = vdwg.mxu0
        %1540 = vmatpush.bf16.msra.mxu0 0
        %1541 = vmatpush.bf16.msra.mxu0 0
        %1542 = vmatpush.bf16.msra.mxu0 0
        %1543 = vmatpush.bf16.msra.mxu0 0
        %1544 = vmatpush.bf16.msra.mxu0 0
        %1545 = vmatpush.bf16.msra.mxu0 0
        %1546 = vmatpush.bf16.msra.mxu0 0
        %1547 = vmatpush.bf16.msra.mxu0 %v1520
        %1548 = vmatmul.bf16.gmra.mxu0 %v1524
        %v1549 = vpop.f32.mrf.mxu0
        %v1550 = vadd.f32 %v1501, %v1549
        %v1551 = vpop.f32.mrf.mxu0
        %v1552 = vadd.f32 %v1506, %v1551
        %1553 = vdwg.mxu0
        %v1554 = vmax.f32 %v1536, 0.0
        %v1555 = vmax.f32 %v1550, 0.0
        %v1556 = vmax.f32 %v1538, 0.0
        %v1557 = vmax.f32 %v1552, 0.0
        %v1558 = vpack.c.bf16 %v1555, %v1554
        %v1559 = vpack.c.bf16 %v1557, %v1556
        %1562 = vrot.lane.b32.xlu0 %v1558, 17
        %v1563 = vpop.permute.xlu0 %1562
        %1564 = vrot.lane.b32.xlu0 %v1559, 17
        %v1565 = vpop.permute.xlu0 %1564
        %v1566 = vrot.slane %v1563, 4
        %v1567 = vrot.slane %v1565, 4
        %v1568 = vsel %vm365, %v1566, %v1563
        %v1569 = vsel %vm365, %v1567, %v1565
        %1574 = vst.msk [vmem:[#allocation2] sm:$0xff] %vm374, %v1568
        %1575 = vst.msk [vmem:[#allocation2 + $0x8] sm:$0xf] %vm251, %v1566
        %1576 = vst.msk [vmem:[#allocation2 + $0xc] sm:$0xff] %vm374, %v1569
        %1577 = vst.msk [vmem:[#allocation2 + $0x14] sm:$0xf] %vm251, %v1567
        %v1578 = vld [vmem:[#allocation2] sm:$0xff]
        %v1579 = vld [vmem:[#allocation2 + $0xc] sm:$0xff]
        %v1580 = vsel %vm381, %v1578, 0
        %v1581 = vsel %vm381, %v1579, 0
        %1582 = vst [vmem:[#allocation3] sm:$0xff] %v1580
        %1583 = vst [vmem:[#allocation3 + $0x8] sm:$0xff] %v1581
        %v1584 = vld [vmem:[#allocation2] sm:$0xff]
        %v1585 = vld [vmem:[#allocation2 + $0x8] sm:$0xf]
        %v1586 = vld [vmem:[#allocation2 + $0xc] sm:$0xff]
        %v1587 = vld [vmem:[#allocation2 + $0x14] sm:$0xf]
        %1592 = vrot.lane.b32.xlu0 %v1584, 127
        %v1593 = vpop.permute.xlu0 %1592
        %1594 = vrot.lane.b32.xlu0 %v1585, 127
        %v1595 = vpop.permute.xlu0 %1594
        %1596 = vrot.lane.b32.xlu0 %v1586, 127
        %v1597 = vpop.permute.xlu0 %1596
        %1598 = vrot.lane.b32.xlu0 %v1587, 127
        %v1599 = vpop.permute.xlu0 %1598
        %v1600 = vrot.slane %v1593, 4
        %v1601 = vrot.slane %v1595, 4
        %v1602 = vrot.slane %v1597, 4
        %v1603 = vrot.slane %v1599, 4
        %v1604 = vsel %vm406, %v1600, %v1601
        %v1605 = vsel %vm408, %v1593, %v1604
        %v1606 = vsel %vm406, %v1602, %v1603
        %v1607 = vsel %vm408, %v1597, %v1606
        %1610 = vst [vmem:[#allocation3 + $0x10] sm:$0xff] %v1605
        %1611 = vst [vmem:[#allocation3 + $0x18] sm:$0xff] %v1607
        %v1612 = vld [vmem:[#allocation2] sm:$0xff]
        %v1613 = vld [vmem:[#allocation2 + $0x8] sm:$0xf]
        %v1614 = vld [vmem:[#allocation2 + $0xc] sm:$0xff]
        %v1615 = vld [vmem:[#allocation2 + $0x14] sm:$0xf]
        %v1616 = vsel %vm433, %v1612, 0
        %v1617 = vsel %vm440, %v1613, 0
        %v1618 = vsel %vm433, %v1614, 0
        %v1619 = vsel %vm440, %v1615, 0
        %1624 = vrot.lane.b32.xlu0 %v1616, 126
        %v1625 = vpop.permute.xlu0 %1624
        %1626 = vrot.lane.b32.xlu0 %v1617, 126
        %v1627 = vpop.permute.xlu0 %1626
        %1628 = vrot.lane.b32.xlu0 %v1618, 126
        %v1629 = vpop.permute.xlu0 %1628
        %1630 = vrot.lane.b32.xlu0 %v1619, 126
        %v1631 = vpop.permute.xlu0 %1630
        %v1632 = vrot.slane %v1625, 4
        %v1633 = vrot.slane %v1627, 4
        %v1634 = vrot.slane %v1629, 4
        %v1635 = vrot.slane %v1631, 4
        %v1636 = vsel %vm406, %v1632, %v1633
        %v1637 = vsel %vm462, %v1625, %v1636
        %v1638 = vsel %vm406, %v1634, %v1635
        %v1639 = vsel %vm462, %v1629, %v1638
        %1642 = vst [vmem:[#allocation3 + $0x20] sm:$0xff] %v1637
        %1643 = vst [vmem:[#allocation3 + $0x28] sm:$0xff] %v1639
        %v1644 = vld [vmem:[#allocation2] sm:$0xff]
        %v1645 = vld [vmem:[#allocation2 + $0x8] sm:$0xf]
        %v1646 = vld [vmem:[#allocation2 + $0xc] sm:$0xff]
        %v1647 = vld [vmem:[#allocation2 + $0x14] sm:$0xf]
        %v1648 = vsel %vm486, %v1644, 0
        %v1649 = vsel %vm493, %v1645, 0
        %v1650 = vsel %vm486, %v1646, 0
        %v1651 = vsel %vm493, %v1647, 0
        %1656 = vrot.lane.b32.xlu0 %v1648, 112
        %v1657 = vpop.permute.xlu0 %1656
        %1658 = vrot.lane.b32.xlu0 %v1649, 112
        %v1659 = vpop.permute.xlu0 %1658
        %1660 = vrot.lane.b32.xlu0 %v1650, 112
        %v1661 = vpop.permute.xlu0 %1660
        %1662 = vrot.lane.b32.xlu0 %v1651, 112
        %v1663 = vpop.permute.xlu0 %1662
        %v1664 = vrot.slane %v1657, 4
        %v1665 = vrot.slane %v1659, 4
        %v1666 = vrot.slane %v1661, 4
        %v1667 = vrot.slane %v1663, 4
        %v1668 = vsel %vm406, %v1664, %v1665
        %v1669 = vsel %vm515, %v1657, %v1668
        %v1670 = vsel %vm406, %v1666, %v1667
        %v1671 = vsel %vm515, %v1661, %v1670
        %1674 = vst [vmem:[#allocation3 + $0x30] sm:$0xff] %v1669
        %1675 = vst [vmem:[#allocation3 + $0x38] sm:$0xff] %v1671
        %v1676 = vld [vmem:[#allocation2] sm:$0xff]
        %v1677 = vld [vmem:[#allocation2 + $0x8] sm:$0xf]
        %v1678 = vld [vmem:[#allocation2 + $0xc] sm:$0xff]
        %v1679 = vld [vmem:[#allocation2 + $0x14] sm:$0xf]
        %1684 = vrot.lane.b32.xlu0 %v1676, 111
        %v1685 = vpop.permute.xlu0 %1684
        %1686 = vrot.lane.b32.xlu0 %v1677, 111
        %v1687 = vpop.permute.xlu0 %1686
        %1688 = vrot.lane.b32.xlu0 %v1678, 111
        %v1689 = vpop.permute.xlu0 %1688
        %1690 = vrot.lane.b32.xlu0 %v1679, 111
        %v1691 = vpop.permute.xlu0 %1690
        %v1692 = vrot.slane %v1685, 4
        %v1693 = vrot.slane %v1687, 4
        %v1694 = vrot.slane %v1689, 4
        %v1695 = vrot.slane %v1691, 4
        %v1696 = vsel %vm406, %v1692, %v1693
        %v1697 = vsel %vm544, %v1685, %v1696
        %v1698 = vsel %vm406, %v1694, %v1695
        %v1699 = vsel %vm544, %v1689, %v1698
        %1702 = vst [vmem:[#allocation3 + $0x40] sm:$0xff] %v1697
        %1703 = vst [vmem:[#allocation3 + $0x48] sm:$0xff] %v1699
        %v1704 = vld [vmem:[#allocation2] sm:$0xff]
        %v1705 = vld [vmem:[#allocation2 + $0x8] sm:$0xf]
        %v1706 = vld [vmem:[#allocation2 + $0xc] sm:$0xff]
        %v1707 = vld [vmem:[#allocation2 + $0x14] sm:$0xf]
        %v1708 = vsel %vm567, %v1704, 0
        %v1709 = vsel %vm574, %v1705, 0
        %v1710 = vsel %vm567, %v1706, 0
        %v1711 = vsel %vm574, %v1707, 0
        %1716 = vrot.lane.b32.xlu0 %v1708, 110
        %v1717 = vpop.permute.xlu0 %1716
        %1718 = vrot.lane.b32.xlu0 %v1709, 110
        %v1719 = vpop.permute.xlu0 %1718
        %1720 = vrot.lane.b32.xlu0 %v1710, 110
        %v1721 = vpop.permute.xlu0 %1720
        %1722 = vrot.lane.b32.xlu0 %v1711, 110
        %v1723 = vpop.permute.xlu0 %1722
        %v1724 = vrot.slane %v1717, 4
        %v1725 = vrot.slane %v1719, 4
        %v1726 = vrot.slane %v1721, 4
        %v1727 = vrot.slane %v1723, 4
        %v1728 = vsel %vm406, %v1724, %v1725
        %v1729 = vsel %vm596, %v1717, %v1728
        %v1730 = vsel %vm406, %v1726, %v1727
        %v1731 = vsel %vm596, %v1721, %v1730
        %1734 = vst [vmem:[#allocation3 + $0x50] sm:$0xff] %v1729
        %1735 = vst [vmem:[#allocation3 + $0x58] sm:$0xff] %v1731
        %v1736 = vld [vmem:[#allocation2] sm:$0xff]
        %v1737 = vld [vmem:[#allocation2 + $0x8] sm:$0xf]
        %v1738 = vld [vmem:[#allocation2 + $0xc] sm:$0xff]
        %v1739 = vld [vmem:[#allocation2 + $0x14] sm:$0xf]
        %v1740 = vsel %vm619, %v1736, 0
        %v1741 = vsel %vm626, %v1737, 0
        %v1742 = vsel %vm619, %v1738, 0
        %v1743 = vsel %vm626, %v1739, 0
        %1748 = vrot.lane.b32.xlu0 %v1740, 96
        %v1749 = vpop.permute.xlu0 %1748
        %1750 = vrot.lane.b32.xlu0 %v1741, 96
        %v1751 = vpop.permute.xlu0 %1750
        %1752 = vrot.lane.b32.xlu0 %v1742, 96
        %v1753 = vpop.permute.xlu0 %1752
        %1754 = vrot.lane.b32.xlu0 %v1743, 96
        %v1755 = vpop.permute.xlu0 %1754
        %v1756 = vrot.slane %v1749, 4
        %v1757 = vrot.slane %v1751, 4
        %v1758 = vrot.slane %v1753, 4
        %v1759 = vrot.slane %v1755, 4
        %v1760 = vsel %vm406, %v1756, %v1757
        %v1761 = vsel %vm648, %v1749, %v1760
        %v1762 = vsel %vm406, %v1758, %v1759
        %v1763 = vsel %vm648, %v1753, %v1762
        %1766 = vst [vmem:[#allocation3 + $0x60] sm:$0xff] %v1761
        %1767 = vst [vmem:[#allocation3 + $0x68] sm:$0xff] %v1763
        %v1768 = vld [vmem:[#allocation2] sm:$0xff]
        %v1769 = vld [vmem:[#allocation2 + $0x8] sm:$0xf]
        %v1770 = vld [vmem:[#allocation2 + $0xc] sm:$0xff]
        %v1771 = vld [vmem:[#allocation2 + $0x14] sm:$0xf]
        %1776 = vrot.lane.b32.xlu0 %v1768, 95
        %v1777 = vpop.permute.xlu0 %1776
        %1778 = vrot.lane.b32.xlu0 %v1769, 95
        %v1779 = vpop.permute.xlu0 %1778
        %1780 = vrot.lane.b32.xlu0 %v1770, 95
        %v1781 = vpop.permute.xlu0 %1780
        %1782 = vrot.lane.b32.xlu0 %v1771, 95
        %v1783 = vpop.permute.xlu0 %1782
        %v1784 = vrot.slane %v1777, 4
        %v1785 = vrot.slane %v1779, 4
        %v1786 = vrot.slane %v1781, 4
        %v1787 = vrot.slane %v1783, 4
        %v1788 = vsel %vm406, %v1784, %v1785
        %v1789 = vsel %vm677, %v1777, %v1788
        %v1790 = vsel %vm406, %v1786, %v1787
        %v1791 = vsel %vm677, %v1781, %v1790
        %1794 = vst [vmem:[#allocation3 + $0x70] sm:$0xff] %v1789
        %1795 = vst [vmem:[#allocation3 + $0x78] sm:$0xff] %v1791
        %v1796 = vld [vmem:[#allocation2] sm:$0xff]
        %v1797 = vld [vmem:[#allocation2 + $0x8] sm:$0xf]
        %v1798 = vld [vmem:[#allocation2 + $0xc] sm:$0xff]
        %v1799 = vld [vmem:[#allocation2 + $0x14] sm:$0xf]
        %v1800 = vsel %vm700, %v1796, 0
        %v1801 = vsel %vm707, %v1797, 0
        %v1802 = vsel %vm700, %v1798, 0
        %v1803 = vsel %vm707, %v1799, 0
        %1808 = vrot.lane.b32.xlu0 %v1800, 94
        %v1809 = vpop.permute.xlu0 %1808
        %1810 = vrot.lane.b32.xlu0 %v1801, 94
        %v1811 = vpop.permute.xlu0 %1810
        %1812 = vrot.lane.b32.xlu0 %v1802, 94
        %v1813 = vpop.permute.xlu0 %1812
        %1814 = vrot.lane.b32.xlu0 %v1803, 94
        %v1815 = vpop.permute.xlu0 %1814
        %v1816 = vrot.slane %v1809, 4
        %v1817 = vrot.slane %v1811, 4
        %v1818 = vrot.slane %v1813, 4
        %v1819 = vrot.slane %v1815, 4
        %v1820 = vsel %vm406, %v1816, %v1817
        %v1821 = vsel %vm729, %v1809, %v1820
        %v1822 = vsel %vm406, %v1818, %v1819
        %v1823 = vsel %vm729, %v1813, %v1822
        %1826 = vst [vmem:[#allocation3 + $0x80] sm:$0xff] %v1821
        %1827 = vst [vmem:[#allocation3 + $0x88] sm:$0xff] %v1823
        %v1828 = vld [vmem:[%s3] sm:$0xff]
        %v1829 = vld [vmem:[%s3 + $0x8] sm:$0xff]
        %v1830 = vld [vmem:[#allocation3] sm:$0xff]
        %v1831 = vld [vmem:[#allocation3 + $0x8] sm:$0xff]
        %v1832 = vld [vmem:[#allocation3 + $0x10] sm:$0xff]
        %v1833 = vld [vmem:[#allocation3 + $0x18] sm:$0xff]
        %v1834 = vld [vmem:[#allocation3 + $0x20] sm:$0xff]
        %v1835 = vld [vmem:[#allocation3 + $0x28] sm:$0xff]
        %v1836 = vld [vmem:[#allocation3 + $0x30] sm:$0xff]
        %v1837 = vld [vmem:[#allocation3 + $0x38] sm:$0xff]
        %v1838 = vld [vmem:[#allocation3 + $0x40] sm:$0xff]
        %v1839 = vld [vmem:[#allocation3 + $0x48] sm:$0xff]
        %v1840 = vld [vmem:[#allocation3 + $0x50] sm:$0xff]
        %v1841 = vld [vmem:[#allocation3 + $0x58] sm:$0xff]
        %v1842 = vld [vmem:[#allocation3 + $0x60] sm:$0xff]
        %v1843 = vld [vmem:[#allocation3 + $0x68] sm:$0xff]
        %v1844 = vld [vmem:[#allocation3 + $0x70] sm:$0xff]
        %v1845 = vld [vmem:[#allocation3 + $0x78] sm:$0xff]
        %v1846 = vld [vmem:[#allocation3 + $0x80] sm:$0xff]
        %v1847 = vld [vmem:[#allocation3 + $0x88] sm:$0xff]
        %v1848 = vld [vmem:[%s1491] sm:$0xff]
        %v1849 = vld [vmem:[%s1491 + $0x8] sm:$0xff]
        %v1850 = vunpack.c.l.bf16 %v1848
        %v1851 = vunpack.c.h.bf16 %v1848
        %v1852 = vunpack.c.l.bf16 %v1849
        %v1853 = vunpack.c.h.bf16 %v1849
        %v1854 = vld [vmem:[%s4] sm:$0xff]
        %v1855 = vld [vmem:[%s4 + $0x8] sm:$0xff]
        %1857 = vset.pattern.permute.xlu0 0
        %1858 = vperm.xlu0 %1857, %v1854
        %v1859 = vpop.permute.xlu0 %1858
        %1862 = vset.pattern.permute.xlu0 0
        %1863 = vperm.xlu0 %1862, %v1855
        %v1864 = vpop.permute.xlu0 %1863
        %v1868 = vunpack.c.l.b16 %v1828
        %v1869 = vunpack.c.h.b16 %v1828
        %v1870 = vunpack.c.l.b16 %v1829
        %v1871 = vunpack.c.h.b16 %v1829
        %v1872 = vpack.c.b16 %v1870, %v1868
        %v1873 = vpack.c.b16 %v1871, %v1869
        %v1893 = vunpack.c.l.b16 %v1830
        %v1894 = vunpack.c.h.b16 %v1830
        %v1895 = vunpack.c.l.b16 %v1831
        %v1896 = vunpack.c.h.b16 %v1831
        %v1897 = vunpack.c.l.b16 %v1832
        %v1898 = vunpack.c.h.b16 %v1832
        %v1899 = vunpack.c.l.b16 %v1833
        %v1900 = vunpack.c.h.b16 %v1833
        %v1901 = vunpack.c.l.b16 %v1834
        %v1902 = vunpack.c.h.b16 %v1834
        %v1903 = vunpack.c.l.b16 %v1835
        %v1904 = vunpack.c.h.b16 %v1835
        %v1905 = vunpack.c.l.b16 %v1836
        %v1906 = vunpack.c.h.b16 %v1836
        %v1907 = vunpack.c.l.b16 %v1837
        %v1908 = vunpack.c.h.b16 %v1837
        %v1909 = vunpack.c.l.b16 %v1838
        %v1910 = vunpack.c.h.b16 %v1838
        %v1911 = vunpack.c.l.b16 %v1839
        %v1912 = vunpack.c.h.b16 %v1839
        %v1913 = vunpack.c.l.b16 %v1840
        %v1914 = vunpack.c.h.b16 %v1840
        %v1915 = vunpack.c.l.b16 %v1841
        %v1916 = vunpack.c.h.b16 %v1841
        %v1917 = vunpack.c.l.b16 %v1842
        %v1918 = vunpack.c.h.b16 %v1842
        %v1919 = vunpack.c.l.b16 %v1843
        %v1920 = vunpack.c.h.b16 %v1843
        %v1921 = vunpack.c.l.b16 %v1844
        %v1922 = vunpack.c.h.b16 %v1844
        %v1923 = vunpack.c.l.b16 %v1845
        %v1924 = vunpack.c.h.b16 %v1845
        %v1925 = vunpack.c.l.b16 %v1846
        %v1926 = vunpack.c.h.b16 %v1846
        %v1927 = vunpack.c.l.b16 %v1847
        %v1928 = vunpack.c.h.b16 %v1847
        %v1929 = vpack.c.b16 %v1895, %v1893
        %v1930 = vpack.c.b16 %v1896, %v1894
        %v1931 = vpack.c.b16 %v1899, %v1897
        %v1932 = vpack.c.b16 %v1900, %v1898
        %v1933 = vpack.c.b16 %v1903, %v1901
        %v1934 = vpack.c.b16 %v1904, %v1902
        %v1935 = vpack.c.b16 %v1907, %v1905
        %v1936 = vpack.c.b16 %v1908, %v1906
        %v1937 = vpack.c.b16 %v1911, %v1909
        %v1938 = vpack.c.b16 %v1912, %v1910
        %v1939 = vpack.c.b16 %v1915, %v1913
        %v1940 = vpack.c.b16 %v1916, %v1914
        %v1941 = vpack.c.b16 %v1919, %v1917
        %v1942 = vpack.c.b16 %v1920, %v1918
        %v1943 = vpack.c.b16 %v1923, %v1921
        %v1944 = vpack.c.b16 %v1924, %v1922
        %v1945 = vpack.c.b16 %v1927, %v1925
        %v1946 = vpack.c.b16 %v1928, %v1926
        %v1966 = vsel %vm319, %v1873, 0
        %1968 = vmatpush.bf16.msra.mxu0 %v1943
        %1969 = vmatpush.bf16.msra.mxu0 %v1941
        %1970 = vmatpush.bf16.msra.mxu0 %v1939
        %1971 = vmatpush.bf16.msra.mxu0 %v1937
        %1972 = vmatpush.bf16.msra.mxu0 %v1935
        %1973 = vmatpush.bf16.msra.mxu0 %v1933
        %1974 = vmatpush.bf16.msra.mxu0 %v1931
        %1975 = vmatpush.bf16.msra.mxu0 %v1929
        %1976 = vmatmul.bf16.gmra.mxu0 %v1872
        %v1977 = vpop.f32.mrf.mxu0
        %v1978 = vadd.f32 %v1859, %v1977
        %v1979 = vpop.f32.mrf.mxu0
        %v1980 = vadd.f32 %v1864, %v1979
        %1981 = vdwg.mxu0
        %1982 = vmatpush.bf16.msra.mxu0 0
        %1983 = vmatpush.bf16.msra.mxu0 0
        %1984 = vmatpush.bf16.msra.mxu0 0
        %1985 = vmatpush.bf16.msra.mxu0 0
        %1986 = vmatpush.bf16.msra.mxu0 0
        %1987 = vmatpush.bf16.msra.mxu0 0
        %1988 = vmatpush.bf16.msra.mxu0 0
        %1989 = vmatpush.bf16.msra.mxu0 %v1945
        %1990 = vmatmul.bf16.gmra.mxu0 %v1966
        %v1991 = vpop.f32.mrf.mxu0
        %v1992 = vadd.f32 %v1978, %v1991
        %v1993 = vpop.f32.mrf.mxu0
        %v1994 = vadd.f32 %v1980, %v1993
        %1995 = vdwg.mxu0
        %1996 = vmatpush.bf16.msra.mxu0 %v1944
        %1997 = vmatpush.bf16.msra.mxu0 %v1942
        %1998 = vmatpush.bf16.msra.mxu0 %v1940
        %1999 = vmatpush.bf16.msra.mxu0 %v1938
        %2000 = vmatpush.bf16.msra.mxu0 %v1936
        %2001 = vmatpush.bf16.msra.mxu0 %v1934
        %2002 = vmatpush.bf16.msra.mxu0 %v1932
        %2003 = vmatpush.bf16.msra.mxu0 %v1930
        %2004 = vmatmul.bf16.gmra.mxu0 %v1872
        %v2005 = vpop.f32.mrf.mxu0
        %v2006 = vadd.f32 %v1859, %v2005
        %v2007 = vpop.f32.mrf.mxu0
        %v2008 = vadd.f32 %v1864, %v2007
        %2009 = vdwg.mxu0
        %2010 = vmatpush.bf16.msra.mxu0 0
        %2011 = vmatpush.bf16.msra.mxu0 0
        %2012 = vmatpush.bf16.msra.mxu0 0
        %2013 = vmatpush.bf16.msra.mxu0 0
        %2014 = vmatpush.bf16.msra.mxu0 0
        %2015 = vmatpush.bf16.msra.mxu0 0
        %2016 = vmatpush.bf16.msra.mxu0 0
        %2017 = vmatpush.bf16.msra.mxu0 %v1946
        %2018 = vmatmul.bf16.gmra.mxu0 %v1966
        %v2019 = vpop.f32.mrf.mxu0
        %v2020 = vadd.f32 %v2006, %v2019
        %v2021 = vpop.f32.mrf.mxu0
        %v2022 = vadd.f32 %v2008, %v2021
        %2023 = vdwg.mxu0
        %v2024 = vadd.f32 %v1992, %v1850
        %v2025 = vadd.f32 %v2020, %v1851
        %v2026 = vadd.f32 %v1994, %v1852
        %v2027 = vadd.f32 %v2022, %v1853
        %v2028 = vmax.f32 %v2024, 0.0
        %v2029 = vmax.f32 %v2025, 0.0
        %v2030 = vmax.f32 %v2026, 0.0
        %v2031 = vmax.f32 %v2027, 0.0
        %s2032 = scalar_lea.vmem %s245, 64 [#allocation7]
        %2033 = vst [vmem:[%s2032] sm:$0xff] %v2028
        %2034 = vst [vmem:[%s2032 + $0x8] sm:$0xff] %v2029
        %2035 = vst [vmem:[%s2032 + $0x10] sm:$0xff] %v2030
        %2036 = vst [vmem:[%s2032 + $0x18] sm:$0xff] %v2031
        %s2037 = scalar_lea.vmem %s218, 48 [#allocation4]
        %v2038 = vld [vmem:[%s2037] sm:$0xff]
        %v2039 = vld [vmem:[%s2037 + $0x8] sm:$0xff]
        %v2040 = vld [vmem:[%s1] sm:$0xf]
        %v2041 = vld [vmem:[%s1 + $0x4] sm:$0xf]
        %v2042 = vld [vmem:[%s2] sm:$0xff]
        %v2043 = vld [vmem:[%s2 + $0x8] sm:$0xff]
        %2045 = vset.pattern.permute.xlu0 0
        %2046 = vperm.xlu0 %2045, %v2042
        %v2047 = vpop.permute.xlu0 %2046
        %2050 = vset.pattern.permute.xlu0 0
        %2051 = vperm.xlu0 %2050, %v2043
        %v2052 = vpop.permute.xlu0 %2051
        %v2056 = vunpack.c.l.b16 %v2040
        %v2057 = vunpack.c.l.b16 %v2041
        %v2058 = vpack.c.b16 %v2057, %v2056
        %v2061 = vunpack.c.l.b16 %v2038
        %v2062 = vunpack.c.h.b16 %v2038
        %v2063 = vunpack.c.l.b16 %v2039
        %v2064 = vunpack.c.h.b16 %v2039
        %v2065 = vpack.c.b16 %v2063, %v2061
        %v2066 = vpack.c.b16 %v2064, %v2062
        %v2070 = vsel %vm319, %v2058, 0
        %2072 = vmatpush.bf16.msra.mxu0 0
        %2073 = vmatpush.bf16.msra.mxu0 0
        %2074 = vmatpush.bf16.msra.mxu0 0
        %2075 = vmatpush.bf16.msra.mxu0 0
        %2076 = vmatpush.bf16.msra.mxu0 0
        %2077 = vmatpush.bf16.msra.mxu0 0
        %2078 = vmatpush.bf16.msra.mxu0 0
        %2079 = vmatpush.bf16.msra.mxu0 %v2065
        %2080 = vmatmul.bf16.gmra.mxu0 %v2070
        %v2081 = vpop.f32.mrf.mxu0
        %v2082 = vadd.f32 %v2047, %v2081
        %v2083 = vpop.f32.mrf.mxu0
        %v2084 = vadd.f32 %v2052, %v2083
        %2085 = vdwg.mxu0
        %2086 = vmatpush.bf16.msra.mxu0 0
        %2087 = vmatpush.bf16.msra.mxu0 0
        %2088 = vmatpush.bf16.msra.mxu0 0
        %2089 = vmatpush.bf16.msra.mxu0 0
        %2090 = vmatpush.bf16.msra.mxu0 0
        %2091 = vmatpush.bf16.msra.mxu0 0
        %2092 = vmatpush.bf16.msra.mxu0 0
        %2093 = vmatpush.bf16.msra.mxu0 %v2066
        %2094 = vmatmul.bf16.gmra.mxu0 %v2070
        %v2095 = vpop.f32.mrf.mxu0
        %v2096 = vadd.f32 %v2047, %v2095
        %v2097 = vpop.f32.mrf.mxu0
        %v2098 = vadd.f32 %v2052, %v2097
        %2099 = vdwg.mxu0
        %v2100 = vmax.f32 %v2082, 0.0
        %v2101 = vmax.f32 %v2096, 0.0
        %v2102 = vmax.f32 %v2084, 0.0
        %v2103 = vmax.f32 %v2098, 0.0
        %v2104 = vpack.c.bf16 %v2101, %v2100
        %v2105 = vpack.c.bf16 %v2103, %v2102
        %2108 = vrot.lane.b32.xlu0 %v2104, 17
        %v2109 = vpop.permute.xlu0 %2108
        %2110 = vrot.lane.b32.xlu0 %v2105, 17
        %v2111 = vpop.permute.xlu0 %2110
        %v2112 = vrot.slane %v2109, 4
        %v2113 = vrot.slane %v2111, 4
        %v2114 = vsel %vm365, %v2112, %v2109
        %v2115 = vsel %vm365, %v2113, %v2111
        %2120 = vst.msk [vmem:[#allocation2] sm:$0xff] %vm374, %v2114
        %2121 = vst.msk [vmem:[#allocation2 + $0x8] sm:$0xf] %vm251, %v2112
        %2122 = vst.msk [vmem:[#allocation2 + $0xc] sm:$0xff] %vm374, %v2115
        %2123 = vst.msk [vmem:[#allocation2 + $0x14] sm:$0xf] %vm251, %v2113
        %v2124 = vld [vmem:[#allocation2] sm:$0xff]
        %v2125 = vld [vmem:[#allocation2 + $0xc] sm:$0xff]
        %v2126 = vsel %vm381, %v2124, 0
        %v2127 = vsel %vm381, %v2125, 0
        %2128 = vst [vmem:[#allocation3] sm:$0xff] %v2126
        %2129 = vst [vmem:[#allocation3 + $0x8] sm:$0xff] %v2127
        %v2130 = vld [vmem:[#allocation2] sm:$0xff]
        %v2131 = vld [vmem:[#allocation2 + $0x8] sm:$0xf]
        %v2132 = vld [vmem:[#allocation2 + $0xc] sm:$0xff]
        %v2133 = vld [vmem:[#allocation2 + $0x14] sm:$0xf]
        %2138 = vrot.lane.b32.xlu0 %v2130, 127
        %v2139 = vpop.permute.xlu0 %2138
        %2140 = vrot.lane.b32.xlu0 %v2131, 127
        %v2141 = vpop.permute.xlu0 %2140
        %2142 = vrot.lane.b32.xlu0 %v2132, 127
        %v2143 = vpop.permute.xlu0 %2142
        %2144 = vrot.lane.b32.xlu0 %v2133, 127
        %v2145 = vpop.permute.xlu0 %2144
        %v2146 = vrot.slane %v2139, 4
        %v2147 = vrot.slane %v2141, 4
        %v2148 = vrot.slane %v2143, 4
        %v2149 = vrot.slane %v2145, 4
        %v2150 = vsel %vm406, %v2146, %v2147
        %v2151 = vsel %vm408, %v2139, %v2150
        %v2152 = vsel %vm406, %v2148, %v2149
        %v2153 = vsel %vm408, %v2143, %v2152
        %2156 = vst [vmem:[#allocation3 + $0x10] sm:$0xff] %v2151
        %2157 = vst [vmem:[#allocation3 + $0x18] sm:$0xff] %v2153
        %v2158 = vld [vmem:[#allocation2] sm:$0xff]
        %v2159 = vld [vmem:[#allocation2 + $0x8] sm:$0xf]
        %v2160 = vld [vmem:[#allocation2 + $0xc] sm:$0xff]
        %v2161 = vld [vmem:[#allocation2 + $0x14] sm:$0xf]
        %v2162 = vsel %vm433, %v2158, 0
        %v2163 = vsel %vm440, %v2159, 0
        %v2164 = vsel %vm433, %v2160, 0
        %v2165 = vsel %vm440, %v2161, 0
        %2170 = vrot.lane.b32.xlu0 %v2162, 126
        %v2171 = vpop.permute.xlu0 %2170
        %2172 = vrot.lane.b32.xlu0 %v2163, 126
        %v2173 = vpop.permute.xlu0 %2172
        %2174 = vrot.lane.b32.xlu0 %v2164, 126
        %v2175 = vpop.permute.xlu0 %2174
        %2176 = vrot.lane.b32.xlu0 %v2165, 126
        %v2177 = vpop.permute.xlu0 %2176
        %v2178 = vrot.slane %v2171, 4
        %v2179 = vrot.slane %v2173, 4
        %v2180 = vrot.slane %v2175, 4
        %v2181 = vrot.slane %v2177, 4
        %v2182 = vsel %vm406, %v2178, %v2179
        %v2183 = vsel %vm462, %v2171, %v2182
        %v2184 = vsel %vm406, %v2180, %v2181
        %v2185 = vsel %vm462, %v2175, %v2184
        %2188 = vst [vmem:[#allocation3 + $0x20] sm:$0xff] %v2183
        %2189 = vst [vmem:[#allocation3 + $0x28] sm:$0xff] %v2185
        %v2190 = vld [vmem:[#allocation2] sm:$0xff]
        %v2191 = vld [vmem:[#allocation2 + $0x8] sm:$0xf]
        %v2192 = vld [vmem:[#allocation2 + $0xc] sm:$0xff]
        %v2193 = vld [vmem:[#allocation2 + $0x14] sm:$0xf]
        %v2194 = vsel %vm486, %v2190, 0
        %v2195 = vsel %vm493, %v2191, 0
        %v2196 = vsel %vm486, %v2192, 0
        %v2197 = vsel %vm493, %v2193, 0
        %2202 = vrot.lane.b32.xlu0 %v2194, 112
        %v2203 = vpop.permute.xlu0 %2202
        %2204 = vrot.lane.b32.xlu0 %v2195, 112
        %v2205 = vpop.permute.xlu0 %2204
        %2206 = vrot.lane.b32.xlu0 %v2196, 112
        %v2207 = vpop.permute.xlu0 %2206
        %2208 = vrot.lane.b32.xlu0 %v2197, 112
        %v2209 = vpop.permute.xlu0 %2208
        %v2210 = vrot.slane %v2203, 4
        %v2211 = vrot.slane %v2205, 4
        %v2212 = vrot.slane %v2207, 4
        %v2213 = vrot.slane %v2209, 4
        %v2214 = vsel %vm406, %v2210, %v2211
        %v2215 = vsel %vm515, %v2203, %v2214
        %v2216 = vsel %vm406, %v2212, %v2213
        %v2217 = vsel %vm515, %v2207, %v2216
        %2220 = vst [vmem:[#allocation3 + $0x30] sm:$0xff] %v2215
        %2221 = vst [vmem:[#allocation3 + $0x38] sm:$0xff] %v2217
        %v2222 = vld [vmem:[#allocation2] sm:$0xff]
        %v2223 = vld [vmem:[#allocation2 + $0x8] sm:$0xf]
        %v2224 = vld [vmem:[#allocation2 + $0xc] sm:$0xff]
        %v2225 = vld [vmem:[#allocation2 + $0x14] sm:$0xf]
        %2230 = vrot.lane.b32.xlu0 %v2222, 111
        %v2231 = vpop.permute.xlu0 %2230
        %2232 = vrot.lane.b32.xlu0 %v2223, 111
        %v2233 = vpop.permute.xlu0 %2232
        %2234 = vrot.lane.b32.xlu0 %v2224, 111
        %v2235 = vpop.permute.xlu0 %2234
        %2236 = vrot.lane.b32.xlu0 %v2225, 111
        %v2237 = vpop.permute.xlu0 %2236
        %v2238 = vrot.slane %v2231, 4
        %v2239 = vrot.slane %v2233, 4
        %v2240 = vrot.slane %v2235, 4
        %v2241 = vrot.slane %v2237, 4
        %v2242 = vsel %vm406, %v2238, %v2239
        %v2243 = vsel %vm544, %v2231, %v2242
        %v2244 = vsel %vm406, %v2240, %v2241
        %v2245 = vsel %vm544, %v2235, %v2244
        %2248 = vst [vmem:[#allocation3 + $0x40] sm:$0xff] %v2243
        %2249 = vst [vmem:[#allocation3 + $0x48] sm:$0xff] %v2245
        %v2250 = vld [vmem:[#allocation2] sm:$0xff]
        %v2251 = vld [vmem:[#allocation2 + $0x8] sm:$0xf]
        %v2252 = vld [vmem:[#allocation2 + $0xc] sm:$0xff]
        %v2253 = vld [vmem:[#allocation2 + $0x14] sm:$0xf]
        %v2254 = vsel %vm567, %v2250, 0
        %v2255 = vsel %vm574, %v2251, 0
        %v2256 = vsel %vm567, %v2252, 0
        %v2257 = vsel %vm574, %v2253, 0
        %2262 = vrot.lane.b32.xlu0 %v2254, 110
        %v2263 = vpop.permute.xlu0 %2262
        %2264 = vrot.lane.b32.xlu0 %v2255, 110
        %v2265 = vpop.permute.xlu0 %2264
        %2266 = vrot.lane.b32.xlu0 %v2256, 110
        %v2267 = vpop.permute.xlu0 %2266
        %2268 = vrot.lane.b32.xlu0 %v2257, 110
        %v2269 = vpop.permute.xlu0 %2268
        %v2270 = vrot.slane %v2263, 4
        %v2271 = vrot.slane %v2265, 4
        %v2272 = vrot.slane %v2267, 4
        %v2273 = vrot.slane %v2269, 4
        %v2274 = vsel %vm406, %v2270, %v2271
        %v2275 = vsel %vm596, %v2263, %v2274
        %v2276 = vsel %vm406, %v2272, %v2273
        %v2277 = vsel %vm596, %v2267, %v2276
        %2280 = vst [vmem:[#allocation3 + $0x50] sm:$0xff] %v2275
        %2281 = vst [vmem:[#allocation3 + $0x58] sm:$0xff] %v2277
        %v2282 = vld [vmem:[#allocation2] sm:$0xff]
        %v2283 = vld [vmem:[#allocation2 + $0x8] sm:$0xf]
        %v2284 = vld [vmem:[#allocation2 + $0xc] sm:$0xff]
        %v2285 = vld [vmem:[#allocation2 + $0x14] sm:$0xf]
        %v2286 = vsel %vm619, %v2282, 0
        %v2287 = vsel %vm626, %v2283, 0
        %v2288 = vsel %vm619, %v2284, 0
        %v2289 = vsel %vm626, %v2285, 0
        %2294 = vrot.lane.b32.xlu0 %v2286, 96
        %v2295 = vpop.permute.xlu0 %2294
        %2296 = vrot.lane.b32.xlu0 %v2287, 96
        %v2297 = vpop.permute.xlu0 %2296
        %2298 = vrot.lane.b32.xlu0 %v2288, 96
        %v2299 = vpop.permute.xlu0 %2298
        %2300 = vrot.lane.b32.xlu0 %v2289, 96
        %v2301 = vpop.permute.xlu0 %2300
        %v2302 = vrot.slane %v2295, 4
        %v2303 = vrot.slane %v2297, 4
        %v2304 = vrot.slane %v2299, 4
        %v2305 = vrot.slane %v2301, 4
        %v2306 = vsel %vm406, %v2302, %v2303
        %v2307 = vsel %vm648, %v2295, %v2306
        %v2308 = vsel %vm406, %v2304, %v2305
        %v2309 = vsel %vm648, %v2299, %v2308
        %2312 = vst [vmem:[#allocation3 + $0x60] sm:$0xff] %v2307
        %2313 = vst [vmem:[#allocation3 + $0x68] sm:$0xff] %v2309
        %v2314 = vld [vmem:[#allocation2] sm:$0xff]
        %v2315 = vld [vmem:[#allocation2 + $0x8] sm:$0xf]
        %v2316 = vld [vmem:[#allocation2 + $0xc] sm:$0xff]
        %v2317 = vld [vmem:[#allocation2 + $0x14] sm:$0xf]
        %2322 = vrot.lane.b32.xlu0 %v2314, 95
        %v2323 = vpop.permute.xlu0 %2322
        %2324 = vrot.lane.b32.xlu0 %v2315, 95
        %v2325 = vpop.permute.xlu0 %2324
        %2326 = vrot.lane.b32.xlu0 %v2316, 95
        %v2327 = vpop.permute.xlu0 %2326
        %2328 = vrot.lane.b32.xlu0 %v2317, 95
        %v2329 = vpop.permute.xlu0 %2328
        %v2330 = vrot.slane %v2323, 4
        %v2331 = vrot.slane %v2325, 4
        %v2332 = vrot.slane %v2327, 4
        %v2333 = vrot.slane %v2329, 4
        %v2334 = vsel %vm406, %v2330, %v2331
        %v2335 = vsel %vm677, %v2323, %v2334
        %v2336 = vsel %vm406, %v2332, %v2333
        %v2337 = vsel %vm677, %v2327, %v2336
        %2340 = vst [vmem:[#allocation3 + $0x70] sm:$0xff] %v2335
        %2341 = vst [vmem:[#allocation3 + $0x78] sm:$0xff] %v2337
        %v2342 = vld [vmem:[#allocation2] sm:$0xff]
        %v2343 = vld [vmem:[#allocation2 + $0x8] sm:$0xf]
        %v2344 = vld [vmem:[#allocation2 + $0xc] sm:$0xff]
        %v2345 = vld [vmem:[#allocation2 + $0x14] sm:$0xf]
        %v2346 = vsel %vm700, %v2342, 0
        %v2347 = vsel %vm707, %v2343, 0
        %v2348 = vsel %vm700, %v2344, 0
        %v2349 = vsel %vm707, %v2345, 0
        %2354 = vrot.lane.b32.xlu0 %v2346, 94
        %v2355 = vpop.permute.xlu0 %2354
        %2356 = vrot.lane.b32.xlu0 %v2347, 94
        %v2357 = vpop.permute.xlu0 %2356
        %2358 = vrot.lane.b32.xlu0 %v2348, 94
        %v2359 = vpop.permute.xlu0 %2358
        %2360 = vrot.lane.b32.xlu0 %v2349, 94
        %v2361 = vpop.permute.xlu0 %2360
        %v2362 = vrot.slane %v2355, 4
        %v2363 = vrot.slane %v2357, 4
        %v2364 = vrot.slane %v2359, 4
        %v2365 = vrot.slane %v2361, 4
        %v2366 = vsel %vm406, %v2362, %v2363
        %v2367 = vsel %vm729, %v2355, %v2366
        %v2368 = vsel %vm406, %v2364, %v2365
        %v2369 = vsel %vm729, %v2359, %v2368
        %2372 = vst [vmem:[#allocation3 + $0x80] sm:$0xff] %v2367
        %2373 = vst [vmem:[#allocation3 + $0x88] sm:$0xff] %v2369
        %v2374 = vld [vmem:[%s3] sm:$0xff]
        %v2375 = vld [vmem:[%s3 + $0x8] sm:$0xff]
        %v2376 = vld [vmem:[#allocation3] sm:$0xff]
        %v2377 = vld [vmem:[#allocation3 + $0x8] sm:$0xff]
        %v2378 = vld [vmem:[#allocation3 + $0x10] sm:$0xff]
        %v2379 = vld [vmem:[#allocation3 + $0x18] sm:$0xff]
        %v2380 = vld [vmem:[#allocation3 + $0x20] sm:$0xff]
        %v2381 = vld [vmem:[#allocation3 + $0x28] sm:$0xff]
        %v2382 = vld [vmem:[#allocation3 + $0x30] sm:$0xff]
        %v2383 = vld [vmem:[#allocation3 + $0x38] sm:$0xff]
        %v2384 = vld [vmem:[#allocation3 + $0x40] sm:$0xff]
        %v2385 = vld [vmem:[#allocation3 + $0x48] sm:$0xff]
        %v2386 = vld [vmem:[#allocation3 + $0x50] sm:$0xff]
        %v2387 = vld [vmem:[#allocation3 + $0x58] sm:$0xff]
        %v2388 = vld [vmem:[#allocation3 + $0x60] sm:$0xff]
        %v2389 = vld [vmem:[#allocation3 + $0x68] sm:$0xff]
        %v2390 = vld [vmem:[#allocation3 + $0x70] sm:$0xff]
        %v2391 = vld [vmem:[#allocation3 + $0x78] sm:$0xff]
        %v2392 = vld [vmem:[#allocation3 + $0x80] sm:$0xff]
        %v2393 = vld [vmem:[#allocation3 + $0x88] sm:$0xff]
        %v2394 = vld [vmem:[%s2037] sm:$0xff]
        %v2395 = vld [vmem:[%s2037 + $0x8] sm:$0xff]
        %v2396 = vunpack.c.l.bf16 %v2394
        %v2397 = vunpack.c.h.bf16 %v2394
        %v2398 = vunpack.c.l.bf16 %v2395
        %v2399 = vunpack.c.h.bf16 %v2395
        %v2400 = vld [vmem:[%s4] sm:$0xff]
        %v2401 = vld [vmem:[%s4 + $0x8] sm:$0xff]
        %2403 = vset.pattern.permute.xlu0 0
        %2404 = vperm.xlu0 %2403, %v2400
        %v2405 = vpop.permute.xlu0 %2404
        %2408 = vset.pattern.permute.xlu0 0
        %2409 = vperm.xlu0 %2408, %v2401
        %v2410 = vpop.permute.xlu0 %2409
        %v2414 = vunpack.c.l.b16 %v2374
        %v2415 = vunpack.c.h.b16 %v2374
        %v2416 = vunpack.c.l.b16 %v2375
        %v2417 = vunpack.c.h.b16 %v2375
        %v2418 = vpack.c.b16 %v2416, %v2414
        %v2419 = vpack.c.b16 %v2417, %v2415
        %v2439 = vunpack.c.l.b16 %v2376
        %v2440 = vunpack.c.h.b16 %v2376
        %v2441 = vunpack.c.l.b16 %v2377
        %v2442 = vunpack.c.h.b16 %v2377
        %v2443 = vunpack.c.l.b16 %v2378
        %v2444 = vunpack.c.h.b16 %v2378
        %v2445 = vunpack.c.l.b16 %v2379
        %v2446 = vunpack.c.h.b16 %v2379
        %v2447 = vunpack.c.l.b16 %v2380
        %v2448 = vunpack.c.h.b16 %v2380
        %v2449 = vunpack.c.l.b16 %v2381
        %v2450 = vunpack.c.h.b16 %v2381
        %v2451 = vunpack.c.l.b16 %v2382
        %v2452 = vunpack.c.h.b16 %v2382
        %v2453 = vunpack.c.l.b16 %v2383
        %v2454 = vunpack.c.h.b16 %v2383
        %v2455 = vunpack.c.l.b16 %v2384
        %v2456 = vunpack.c.h.b16 %v2384
        %v2457 = vunpack.c.l.b16 %v2385
        %v2458 = vunpack.c.h.b16 %v2385
        %v2459 = vunpack.c.l.b16 %v2386
        %v2460 = vunpack.c.h.b16 %v2386
        %v2461 = vunpack.c.l.b16 %v2387
        %v2462 = vunpack.c.h.b16 %v2387
        %v2463 = vunpack.c.l.b16 %v2388
        %v2464 = vunpack.c.h.b16 %v2388
        %v2465 = vunpack.c.l.b16 %v2389
        %v2466 = vunpack.c.h.b16 %v2389
        %v2467 = vunpack.c.l.b16 %v2390
        %v2468 = vunpack.c.h.b16 %v2390
        %v2469 = vunpack.c.l.b16 %v2391
        %v2470 = vunpack.c.h.b16 %v2391
        %v2471 = vunpack.c.l.b16 %v2392
        %v2472 = vunpack.c.h.b16 %v2392
        %v2473 = vunpack.c.l.b16 %v2393
        %v2474 = vunpack.c.h.b16 %v2393
        %v2475 = vpack.c.b16 %v2441, %v2439
        %v2476 = vpack.c.b16 %v2442, %v2440
        %v2477 = vpack.c.b16 %v2445, %v2443
        %v2478 = vpack.c.b16 %v2446, %v2444
        %v2479 = vpack.c.b16 %v2449, %v2447
        %v2480 = vpack.c.b16 %v2450, %v2448
        %v2481 = vpack.c.b16 %v2453, %v2451
        %v2482 = vpack.c.b16 %v2454, %v2452
        %v2483 = vpack.c.b16 %v2457, %v2455
        %v2484 = vpack.c.b16 %v2458, %v2456
        %v2485 = vpack.c.b16 %v2461, %v2459
        %v2486 = vpack.c.b16 %v2462, %v2460
        %v2487 = vpack.c.b16 %v2465, %v2463
        %v2488 = vpack.c.b16 %v2466, %v2464
        %v2489 = vpack.c.b16 %v2469, %v2467
        %v2490 = vpack.c.b16 %v2470, %v2468
        %v2491 = vpack.c.b16 %v2473, %v2471
        %v2492 = vpack.c.b16 %v2474, %v2472
        %v2512 = vsel %vm319, %v2419, 0
        %2514 = vmatpush.bf16.msra.mxu0 %v2489
        %2515 = vmatpush.bf16.msra.mxu0 %v2487
        %2516 = vmatpush.bf16.msra.mxu0 %v2485
        %2517 = vmatpush.bf16.msra.mxu0 %v2483
        %2518 = vmatpush.bf16.msra.mxu0 %v2481
        %2519 = vmatpush.bf16.msra.mxu0 %v2479
        %2520 = vmatpush.bf16.msra.mxu0 %v2477
        %2521 = vmatpush.bf16.msra.mxu0 %v2475
        %2522 = vmatmul.bf16.gmra.mxu0 %v2418
        %v2523 = vpop.f32.mrf.mxu0
        %v2524 = vadd.f32 %v2405, %v2523
        %v2525 = vpop.f32.mrf.mxu0
        %v2526 = vadd.f32 %v2410, %v2525
        %2527 = vdwg.mxu0
        %2528 = vmatpush.bf16.msra.mxu0 0
        %2529 = vmatpush.bf16.msra.mxu0 0
        %2530 = vmatpush.bf16.msra.mxu0 0
        %2531 = vmatpush.bf16.msra.mxu0 0
        %2532 = vmatpush.bf16.msra.mxu0 0
        %2533 = vmatpush.bf16.msra.mxu0 0
        %2534 = vmatpush.bf16.msra.mxu0 0
        %2535 = vmatpush.bf16.msra.mxu0 %v2491
        %2536 = vmatmul.bf16.gmra.mxu0 %v2512
        %v2537 = vpop.f32.mrf.mxu0
        %v2538 = vadd.f32 %v2524, %v2537
        %v2539 = vpop.f32.mrf.mxu0
        %v2540 = vadd.f32 %v2526, %v2539
        %2541 = vdwg.mxu0
        %2542 = vmatpush.bf16.msra.mxu0 %v2490
        %2543 = vmatpush.bf16.msra.mxu0 %v2488
        %2544 = vmatpush.bf16.msra.mxu0 %v2486
        %2545 = vmatpush.bf16.msra.mxu0 %v2484
        %2546 = vmatpush.bf16.msra.mxu0 %v2482
        %2547 = vmatpush.bf16.msra.mxu0 %v2480
        %2548 = vmatpush.bf16.msra.mxu0 %v2478
        %2549 = vmatpush.bf16.msra.mxu0 %v2476
        %2550 = vmatmul.bf16.gmra.mxu0 %v2418
        %v2551 = vpop.f32.mrf.mxu0
        %v2552 = vadd.f32 %v2405, %v2551
        %v2553 = vpop.f32.mrf.mxu0
        %v2554 = vadd.f32 %v2410, %v2553
        %2555 = vdwg.mxu0
        %2556 = vmatpush.bf16.msra.mxu0 0
        %2557 = vmatpush.bf16.msra.mxu0 0
        %2558 = vmatpush.bf16.msra.mxu0 0
        %2559 = vmatpush.bf16.msra.mxu0 0
        %2560 = vmatpush.bf16.msra.mxu0 0
        %2561 = vmatpush.bf16.msra.mxu0 0
        %2562 = vmatpush.bf16.msra.mxu0 0
        %2563 = vmatpush.bf16.msra.mxu0 %v2492
        %2564 = vmatmul.bf16.gmra.mxu0 %v2512
        %v2565 = vpop.f32.mrf.mxu0
        %v2566 = vadd.f32 %v2552, %v2565
        %v2567 = vpop.f32.mrf.mxu0
        %v2568 = vadd.f32 %v2554, %v2567
        %2569 = vdwg.mxu0
        %v2570 = vadd.f32 %v2538, %v2396
        %v2571 = vadd.f32 %v2566, %v2397
        %v2572 = vadd.f32 %v2540, %v2398
        %v2573 = vadd.f32 %v2568, %v2399
        %v2574 = vmax.f32 %v2570, 0.0
        %v2575 = vmax.f32 %v2571, 0.0
        %v2576 = vmax.f32 %v2572, 0.0
        %v2577 = vmax.f32 %v2573, 0.0
        %s2578 = scalar_lea.vmem %s245, 96 [#allocation7]
        %2579 = vst [vmem:[%s2578] sm:$0xff] %v2574
        %2580 = vst [vmem:[%s2578 + $0x8] sm:$0xff] %v2575
        %2581 = vst [vmem:[%s2578 + $0x10] sm:$0xff] %v2576
        %2582 = vst [vmem:[%s2578 + $0x18] sm:$0xff] %v2577
        %s2583 = sand.u32 %s140, 1
        %s2584 = scalar_lea.sflag [#allocation6], %s2583
        %s2585 = sand.u32 %s140, 1
        %s2586 = smul.addr %s2585, 128
        %s2587 = scalar_lea.vmem [#allocation7], %s2586
        // Predicated region
        $region45: #{tpu_custom_call.1} parent=39 // pred_check
          %p2588 = pneg %p150
        $region46: #{tpu_custom_call.1} parent=39 // pred_check_branch
          %2590 = sbr.rel (%p2588) target = $region48
        $region47: #{tpu_custom_call.1} parent=39 // pred_region
          %s2591 = smul.u32 4, %s22
          %2593 = vsyncadd %s2584, 0
          %s2594 = smul.addr %s2591, 4
          %s2595 = smul.addr %s2594, 8
          %s2596 = scalar_lea.hbm %s5, %s2595
          %s2597 = sshll.u32 %s2587, 4
          %s2598 = int_to_ptr.vmem [resolvable:$true] %s2597
          %s2599 = sshll.u32 %s2596, 4
          %s2600 = int_to_ptr.hbm [resolvable:$true] %s2599
          %2605 = dma.vmem_to_hbm [thread:$0]  %s2598, 2048, %s2600, %s2584, 256, 256, 16
        $region48: #{tpu_custom_call.1} parent=39 // pred_fallthru
          _
      $region40: #{tpu_custom_call.1} parent=5 // pred_fallthru
        _
      %p2606 = scmp.le.s32.totalorder 2, %s17
      // Predicated region
      $region49: #{tpu_custom_call.1} parent=5 // pred_check
        %p2607 = pneg %p2606
      $region50: #{tpu_custom_call.1} parent=5 // pred_check_branch
        %2609 = sbr.rel (%p2607) target = $region52
      $region51: #{tpu_custom_call.1} parent=5 // pred_region
        %s2610 = ssub.s32 %s17, 2
        // Predicated region
        $region53: #{tpu_custom_call.1} parent=51 // pred_check
          %p2611 = pneg %p156
        $region54: #{tpu_custom_call.1} parent=51 // pred_check_branch
          %2613 = sbr.rel (%p2611) target = $region56
        $region55: #{tpu_custom_call.1} parent=51 // pred_region
          %s2614 = sand.u32 %s141, 1
          %s2615 = scalar_lea.sflag [#allocation6], %s2614
          %s2616 = sand.u32 %s141, 1
          %s2617 = smul.addr %s2616, 128
          %s2618 = scalar_lea.vmem [#allocation7], %s2617
          %2620 = dma.done %s2615, 2048
        $region56: #{tpu_custom_call.1} parent=51 // pred_fallthru
          _
      $region52: #{tpu_custom_call.1} parent=5 // pred_fallthru
        _
    $region6: #{tpu_custom_call.1} parent=1 // loop_footer
      %s21 = sadd.s32 1, %s17
    $region7: #{tpu_custom_call.1} parent=1 // loop_footer_branch
      %16 = sbr.rel target = $region3
    $region8: #{tpu_custom_call.1} parent=1 // loop_exit
      _
    %2621 = vsyncpa [#allocation5], 1
    %s2622 = scalar_lea.sflag [#allocation5], 1
    %2623 = vsyncpa %s2622, 1
    %2624 = vsyncpa [#allocation6], 1
    %s2625 = scalar_lea.sflag [#allocation6], 1
    %2626 = vsyncpa %s2625, 1

</llo_original>
